<compile_context>
chip_gen: v6e
topology: v6e:2x2x1
jax: 0.10.0
libtpu: 0.0.40
codegen_flags: <defaults>
</compile_context>

<pallas_src>
import functools

import jax
import jax.numpy as jnp
from jax.experimental import pallas as pl

# ---------------------------------------------------------------------------
# Model hyper-parameters (small, consistent with the module's __init__)
# ---------------------------------------------------------------------------
D_MODEL = 32
NUM_HEADS = 4
D_HEAD = D_MODEL // NUM_HEADS
FFN_HIDDEN = 64
BATCH = 2
TGT_LEN = 8   # decoder sequence length
SRC_LEN = 8   # encoder output sequence length


# ---------------------------------------------------------------------------
# Fully fused decoder-layer kernel (single invocation, batch folded)
# ---------------------------------------------------------------------------
def decoder_layer_kernel(
    x_ref, enc_ref, posq_ref, tgt_mask_ref, src_mask_ref,
    w_attn_ref, b_attn_ref, gb_ref, w1_ref, w2_ref, b_ffn_ref,
    out_ref, self_logits_ref, cross_logits_ref,
    *, batch, num_heads):
    B = batch
    T = x_ref.shape[1]
    S = enc_ref.shape[1]
    D = x_ref.shape[2]
    H = num_heads
    Dh = D // H
    F = w1_ref.shape[1]
    scale = 1.0 / (Dh ** 0.5)

    # Batch folded into sublanes for every projection / FFN / norm.
    xf = x_ref[...].reshape(B * T, D)           # (16, 32)
    encf = enc_ref[...].reshape(B * S, D)       # (16, 32)
    tgt_mask = tgt_mask_ref[...]                # (T, T) additive (0 / -1e9)
    src_mask = src_mask_ref[...]                # (T, S) additive
    bffn = b_ffn_ref[...]                       # (1, F + D) = [b1 | b2]

    def proj(src, idx):
        # Fused [Wq|Wk|Wv|Wo] projection: one lane-dense (.,D)x(D,4D) matmul.
        w = w_attn_ref[idx]                     # (D, 4D) = (32, 128)
        b = b_attn_ref[idx]                     # (1, 4D)
        return jnp.dot(src, w, preferred_element_type=jnp.float32) + b

    def split_heads(flat, n):
        # (B*n, D) -> (H*B, n, Dh), head-major: lane slices + stack, then a
        # pure leading-dim regroup (tile-aligned, no real relayout).
        hs = jnp.stack([flat[:, h * Dh:(h + 1) * Dh] for h in range(H)], axis=0)
        return hs.reshape(H * B, n, Dh)

    def merge_heads(ctx, n):
        # (H*B, n, Dh) -> (B*n, D) = (B*n, H*Dh): leading regroup + lane concat.
        c = ctx.reshape(H, B * n, Dh)
        return jnp.concatenate([c[h] for h in range(H)], axis=-1)

    def softmax(s):
        m = jnp.max(s, axis=-1, keepdims=True)
        e = jnp.exp(s - m)
        return e / jnp.sum(e, axis=-1, keepdims=True)   # exact divide (numerics)

    def attend(qh, kh, vh, mask_add):
        # qh/kh/vh: (H*B, Tq/Tk, Dh). Single-batch-dim einsums (MXU-friendly).
        s = jnp.einsum('xqd,xkd->xqk', qh, kh,
                       preferred_element_type=jnp.float32) + mask_add[None]
        ctx = jnp.einsum('xqk,xkd->xqd', softmax(s), vh,
                         preferred_element_type=jnp.float32)
        return ctx, s                            # ctx: (H*B, Tq, Dh)

    def out_proj(ctx, n, idx):
        # Single (B*n, D) x (D, D) matmul on the merged context (no head-sum).
        wo = w_attn_ref[idx][:, 3 * D:]          # (D, D)
        bo = b_attn_ref[idx][:, 3 * D:]          # (1, D)
        return jnp.dot(merge_heads(ctx, n), wo,
                       preferred_element_type=jnp.float32) + bo

    def add_norm(a, b, idx):
        s = a + b                                # dropout = identity (eval mode)
        mu = jnp.mean(s, axis=-1, keepdims=True)
        var = jnp.mean((s - mu) * (s - mu), axis=-1, keepdims=True)
        nrm = (s - mu) * jax.lax.rsqrt(var + 1e-5)
        gb = gb_ref[idx]                         # (1, 2D) = [gamma | beta]
        return nrm * gb[:, :D] + gb[:, D:]

    def store_logits(ref, s, tk):
        # s: (H*B, T, tk) head-major -> store per batch element (B=2, static).
        s4 = s.reshape(H, B, T, tk)
        for b in range(B):
            ref[b] = s4[:, b]

    # ---- 1) masked self-attention + AddNorm1 ------------------------------
    qkv = proj(xf, 0)                                            # (B*T, 4D)
    ctx, s = attend(split_heads(qkv[:, :D] * scale, T),
                    split_heads(qkv[:, D:2 * D], T),
                    split_heads(qkv[:, 2 * D:3 * D], T), tgt_mask)
    store_logits(self_logits_ref, s, T)
    y = add_norm(xf, out_proj(ctx, T, 0), 0)                     # (B*T, D)

    # ---- 2) positional attention + AddNorm2 (logits discarded) ------------
    # Query (PE @ Wq + bq) * scale is precomputed in the wrapper (posq_ref).
    kv = proj(y, 1)
    ctx, _ = attend(posq_ref[...],
                    split_heads(kv[:, D:2 * D], T),
                    split_heads(kv[:, 2 * D:3 * D], T), tgt_mask)
    y = add_norm(y, out_proj(ctx, T, 1), 1)

    # ---- 3) cross-attention over encoder output + AddNorm3 ----------------
    qc = proj(y, 2)[:, :D] * scale
    kvc = proj(encf, 2)
    ctx, s = attend(split_heads(qc, T),
                    split_heads(kvc[:, D:2 * D], S),
                    split_heads(kvc[:, 2 * D:3 * D], S), src_mask)
    store_logits(cross_logits_ref, s, S)
    z = add_norm(y, out_proj(ctx, T, 2), 2)

    # ---- 4) position-wise FFN (ReLU) + AddNorm4 ----------------------------
    hid = jnp.dot(z, w1_ref[...], preferred_element_type=jnp.float32) + bffn[:, :F]
    hid = jnp.maximum(hid, 0.0)
    f = jnp.dot(hid, w2_ref[...], preferred_element_type=jnp.float32) + bffn[:, F:]
    out_ref[...] = add_norm(z, f, 3).reshape(B, T, D)


# ---------------------------------------------------------------------------
# Plain-JAX glue: parameter packing + hoisted positional query (tiny, one-off)
# ---------------------------------------------------------------------------
def sinusoidal_pos_embedding(seq_len, d_model):
    pos = jnp.arange(seq_len, dtype=jnp.float32)[:, None]               # (T, 1)
    i = jnp.arange(0, d_model, 2, dtype=jnp.float32)[None, :]           # (1, D/2)
    angle = pos / jnp.power(10000.0, i / d_model)                       # (T, D/2)
    pe = jnp.zeros((seq_len, d_model), dtype=jnp.float32)
    pe = pe.at[:, 0::2].set(jnp.sin(angle))
    pe = pe.at[:, 1::2].set(jnp.cos(angle))
    return pe                                                           # (T, D)


def decoder_layer(x, encoder_out, src_mask, tgt_mask, params):
    B, T, D = x.shape
    S = encoder_out.shape[1]
    H = NUM_HEADS
    Dh = D // H
    scale = 1.0 / (Dh ** 0.5)

    names = ("self_attn", "pos_attn", "cross_attn")
    # Lane-dense packed operands: [Wq|Wk|Wv|Wo] -> (3, D, 4D), biases -> (3, 1, 4D)
    w_attn = jnp.stack([jnp.concatenate(
        [params[n]["wq"], params[n]["wk"], params[n]["wv"], params[n]["wo"]],
        axis=1) for n in names])                                         # (3, 32, 128)
    b_attn = jnp.stack([jnp.concatenate(
        [params[n]["bq"], params[n]["bk"], params[n]["bv"], params[n]["bo"]],
        axis=1) for n in names])                                         # (3, 1, 128)
    gb = jnp.stack([jnp.concatenate(
        [params[f"norm{i}"]["gamma"], params[f"norm{i}"]["beta"]], axis=1)
        for i in range(1, 5)])                                           # (4, 1, 64)
    fp = params["ffn"]
    b_ffn = jnp.concatenate([fp["b1"], fp["b2"]], axis=1)                # (1, 96)

    # Hoisted, batch-invariant positional query: (PE @ Wq_pos + bq_pos) * scale,
    # pre-split head-major (H*B, T, Dh) to match the kernel's attention layout.
    pe = sinusoidal_pos_embedding(T, D)
    pq = (pe @ params["pos_attn"]["wq"] + params["pos_attn"]["bq"]) * scale
    pq = pq.reshape(T, H, Dh).transpose(1, 0, 2)                         # (H, T, Dh)
    pos_q = jnp.broadcast_to(pq[:, None], (H, B, T, Dh)).reshape(H * B, T, Dh)

    tgt_add = jnp.where(tgt_mask > 0, 0.0, -1e9).astype(jnp.float32)
    src_add = jnp.where(src_mask > 0, 0.0, -1e9).astype(jnp.float32)

    kernel = functools.partial(decoder_layer_kernel, batch=B, num_heads=H)
    # Single-invocation kernel (no grid): every operand is tiny and lives whole
    # in VMEM; no per-step pipeline overhead on single-TC chips (v5e/v6e).
    # TODO(synk): on v7x a 2-TC split (core_map) could shard batch, but the
    # per-batch work is below the split overhead at this problem size.
    return pl.pallas_call(
        kernel,
        out_shape=(
            jax.ShapeDtypeStruct((B, T, D), jnp.float32),
            jax.ShapeDtypeStruct((B, H, T, T), jnp.float32),
            jax.ShapeDtypeStruct((B, H, T, S), jnp.float32),
        ),
    )(x, encoder_out, pos_q, tgt_add, src_add,
      w_attn, b_attn, gb, fp["w1"], fp["w2"], b_ffn)


# ---------------------------------------------------------------------------
# Parameter init
# ---------------------------------------------------------------------------
def init_params(key):
    def lin(k, fan_in, fan_out):
        kw, _ = jax.random.split(k)
        w = jax.random.normal(kw, (fan_in, fan_out), jnp.float32) * 0.05
        b = jnp.zeros((1, fan_out), jnp.float32)
        return w, b

    keys = jax.random.split(key, 16)
    params = {}
    for name, kbase in zip(["self_attn", "pos_attn", "cross_attn"], keys[:3]):
        ks = jax.random.split(kbase, 4)
        wq, bq = lin(ks[0], D_MODEL, D_MODEL)
        wk, bk = lin(ks[1], D_MODEL, D_MODEL)
        wv, bv = lin(ks[2], D_MODEL, D_MODEL)
        wo, bo = lin(ks[3], D_MODEL, D_MODEL)
        params[name] = dict(wq=wq, bq=bq, wk=wk, bk=bk, wv=wv, bv=bv, wo=wo, bo=bo)
    for i in range(1, 5):
        params[f"norm{i}"] = dict(gamma=jnp.ones((1, D_MODEL), jnp.float32),
                                  beta=jnp.zeros((1, D_MODEL), jnp.float32))
    kf = jax.random.split(keys[3], 2)
    w1, b1 = lin(kf[0], D_MODEL, FFN_HIDDEN)
    w2, b2 = lin(kf[1], FFN_HIDDEN, D_MODEL)
    params["ffn"] = dict(w1=w1, b1=b1, w2=w2, b2=b2)
    return params


# ---------------------------------------------------------------------------
# Main
# ---------------------------------------------------------------------------
if __name__ == "__main__":
    key = jax.random.PRNGKey(0)
    k_x, k_enc, k_p = jax.random.split(key, 3)

    x = jax.random.normal(k_x, (BATCH, TGT_LEN, D_MODEL), jnp.float32)
    encoder_out = jax.random.normal(k_enc, (BATCH, SRC_LEN, D_MODEL), jnp.float32)

    # tgt_mask: causal (decoder self-attn); src_mask: all valid.
    tgt_mask = jnp.tril(jnp.ones((TGT_LEN, TGT_LEN), jnp.float32))
    src_mask = jnp.ones((TGT_LEN, SRC_LEN), jnp.float32)

    params = init_params(k_p)

    out, self_logits, cross_logits = jax.jit(decoder_layer)(
        x, encoder_out, src_mask, tgt_mask, params)
    jax.block_until_ready((out, self_logits, cross_logits))

    assert out.shape == (BATCH, TGT_LEN, D_MODEL)
    assert self_logits.shape == (BATCH, NUM_HEADS, TGT_LEN, TGT_LEN)
    assert cross_logits.shape == (BATCH, NUM_HEADS, TGT_LEN, SRC_LEN)
    assert bool(jnp.all(jnp.isfinite(out)))
    assert bool(jnp.all(jnp.isfinite(cross_logits)))
    print("KERNEL_OK")
</pallas_src>

<mosaic_0001>
module attributes {stable_mosaic.version = 11 : i64} {
  func.func @decoder_layer_kernel(%arg0: memref<2x8x32xf32, #tpu.memory_space<vmem>>, %arg1: memref<2x8x32xf32, #tpu.memory_space<vmem>>, %arg2: memref<8x8x8xf32, #tpu.memory_space<vmem>>, %arg3: memref<8x8xf32, #tpu.memory_space<vmem>>, %arg4: memref<8x8xf32, #tpu.memory_space<vmem>>, %arg5: memref<3x32x128xf32, #tpu.memory_space<vmem>>, %arg6: memref<3x1x128xf32, #tpu.memory_space<vmem>>, %arg7: memref<4x1x64xf32, #tpu.memory_space<vmem>>, %arg8: memref<32x64xf32, #tpu.memory_space<vmem>>, %arg9: memref<64x32xf32, #tpu.memory_space<vmem>>, %arg10: memref<1x96xf32, #tpu.memory_space<vmem>>, %arg11: memref<2x8x32xf32, #tpu.memory_space<vmem>>, %arg12: memref<2x4x8x8xf32, #tpu.memory_space<vmem>>, %arg13: memref<2x4x8x8xf32, #tpu.memory_space<vmem>>) attributes {dimension_semantics = [], scalar_prefetch = 0 : i64, scratch_operands = 0 : i64, tpu.core_type = #tpu.core_type<tc>} {
    %c0 = arith.constant 0 : index
    %c0_0 = arith.constant 0 : index
    %c0_1 = arith.constant 0 : index
    %0 = vector.load %arg0[%c0, %c0_0, %c0_1] : memref<2x8x32xf32, #tpu.memory_space<vmem>>, vector<2x8x32xf32>
    %1 = vector.shape_cast %0 : vector<2x8x32xf32> to vector<16x32xf32>
    %c0_2 = arith.constant 0 : index
    %c0_3 = arith.constant 0 : index
    %c0_4 = arith.constant 0 : index
    %2 = vector.load %arg1[%c0_2, %c0_3, %c0_4] : memref<2x8x32xf32, #tpu.memory_space<vmem>>, vector<2x8x32xf32>
    %3 = vector.shape_cast %2 : vector<2x8x32xf32> to vector<16x32xf32>
    %c0_5 = arith.constant 0 : index
    %c0_6 = arith.constant 0 : index
    %4 = vector.load %arg3[%c0_5, %c0_6] : memref<8x8xf32, #tpu.memory_space<vmem>>, vector<8x8xf32>
    %c0_7 = arith.constant 0 : index
    %c0_8 = arith.constant 0 : index
    %5 = vector.load %arg4[%c0_7, %c0_8] : memref<8x8xf32, #tpu.memory_space<vmem>>, vector<8x8xf32>
    %c0_9 = arith.constant 0 : index
    %c0_10 = arith.constant 0 : index
    %6 = vector.load %arg10[%c0_9, %c0_10] : memref<1x96xf32, #tpu.memory_space<vmem>>, vector<1x96xf32>
    %c0_11 = arith.constant 0 : index
    %c0_12 = arith.constant 0 : index
    %c0_13 = arith.constant 0 : index
    %7 = vector.load %arg5[%c0_11, %c0_12, %c0_13] : memref<3x32x128xf32, #tpu.memory_space<vmem>>, vector<1x32x128xf32>
    %8 = vector.shape_cast %7 : vector<1x32x128xf32> to vector<32x128xf32>
    %c0_14 = arith.constant 0 : index
    %c0_15 = arith.constant 0 : index
    %c0_16 = arith.constant 0 : index
    %9 = vector.load %arg6[%c0_14, %c0_15, %c0_16] : memref<3x1x128xf32, #tpu.memory_space<vmem>>, vector<1x1x128xf32>
    %10 = vector.shape_cast %9 : vector<1x1x128xf32> to vector<1x128xf32>
    %cst = arith.constant dense<0.000000e+00> : vector<16x128xf32>
    %11 = tpu.matmul %1, %8, %cst {dimension_numbers = #tpu.dot_dimension_numbers<[1], [0], [0], [1], [0, 0, 1, 1], [], []>} : vector<16x32xf32>, vector<32x128xf32>, vector<16x128xf32> -> vector<16x128xf32>
    %12 = vector.broadcast %10 : vector<1x128xf32> to vector<16x128xf32>
    %13 = arith.addf %11, %12 : vector<16x128xf32>
    %14 = vector.extract_strided_slice %13 {offsets = [0, 0], sizes = [16, 32], strides = [1, 1]} : vector<16x128xf32> to vector<16x32xf32>
    %cst_17 = arith.constant 0.353553385 : f32
    %15 = vector.broadcast %cst_17 : f32 to vector<16x32xf32>
    %16 = arith.mulf %14, %15 : vector<16x32xf32>
    %17 = vector.extract_strided_slice %16 {offsets = [0, 0], sizes = [16, 8], strides = [1, 1]} : vector<16x32xf32> to vector<16x8xf32>
    %18 = vector.extract_strided_slice %16 {offsets = [0, 8], sizes = [16, 8], strides = [1, 1]} : vector<16x32xf32> to vector<16x8xf32>
    %19 = vector.extract_strided_slice %16 {offsets = [0, 16], sizes = [16, 8], strides = [1, 1]} : vector<16x32xf32> to vector<16x8xf32>
    %20 = vector.extract_strided_slice %16 {offsets = [0, 24], sizes = [16, 8], strides = [1, 1]} : vector<16x32xf32> to vector<16x8xf32>
    %21 = vector.shape_cast %17 : vector<16x8xf32> to vector<1x16x8xf32>
    %22 = vector.shape_cast %18 : vector<16x8xf32> to vector<1x16x8xf32>
    %23 = vector.shape_cast %19 : vector<16x8xf32> to vector<1x16x8xf32>
    %24 = vector.shape_cast %20 : vector<16x8xf32> to vector<1x16x8xf32>
    %25 = tpu.concatenate %21, %22, %23, %24 in 0 : vector<1x16x8xf32>, vector<1x16x8xf32>, vector<1x16x8xf32>, vector<1x16x8xf32> -> vector<4x16x8xf32>
    %26 = vector.shape_cast %25 : vector<4x16x8xf32> to vector<8x8x8xf32>
    %27 = vector.extract_strided_slice %13 {offsets = [0, 32], sizes = [16, 32], strides = [1, 1]} : vector<16x128xf32> to vector<16x32xf32>
    %28 = vector.extract_strided_slice %27 {offsets = [0, 0], sizes = [16, 8], strides = [1, 1]} : vector<16x32xf32> to vector<16x8xf32>
    %29 = vector.extract_strided_slice %27 {offsets = [0, 8], sizes = [16, 8], strides = [1, 1]} : vector<16x32xf32> to vector<16x8xf32>
    %30 = vector.extract_strided_slice %27 {offsets = [0, 16], sizes = [16, 8], strides = [1, 1]} : vector<16x32xf32> to vector<16x8xf32>
    %31 = vector.extract_strided_slice %27 {offsets = [0, 24], sizes = [16, 8], strides = [1, 1]} : vector<16x32xf32> to vector<16x8xf32>
    %32 = vector.shape_cast %28 : vector<16x8xf32> to vector<1x16x8xf32>
    %33 = vector.shape_cast %29 : vector<16x8xf32> to vector<1x16x8xf32>
    %34 = vector.shape_cast %30 : vector<16x8xf32> to vector<1x16x8xf32>
    %35 = vector.shape_cast %31 : vector<16x8xf32> to vector<1x16x8xf32>
    %36 = tpu.concatenate %32, %33, %34, %35 in 0 : vector<1x16x8xf32>, vector<1x16x8xf32>, vector<1x16x8xf32>, vector<1x16x8xf32> -> vector<4x16x8xf32>
    %37 = vector.shape_cast %36 : vector<4x16x8xf32> to vector<8x8x8xf32>
    %38 = vector.extract_strided_slice %13 {offsets = [0, 64], sizes = [16, 32], strides = [1, 1]} : vector<16x128xf32> to vector<16x32xf32>
    %39 = vector.extract_strided_slice %38 {offsets = [0, 0], sizes = [16, 8], strides = [1, 1]} : vector<16x32xf32> to vector<16x8xf32>
    %40 = vector.extract_strided_slice %38 {offsets = [0, 8], sizes = [16, 8], strides = [1, 1]} : vector<16x32xf32> to vector<16x8xf32>
    %41 = vector.extract_strided_slice %38 {offsets = [0, 16], sizes = [16, 8], strides = [1, 1]} : vector<16x32xf32> to vector<16x8xf32>
    %42 = vector.extract_strided_slice %38 {offsets = [0, 24], sizes = [16, 8], strides = [1, 1]} : vector<16x32xf32> to vector<16x8xf32>
    %43 = vector.shape_cast %39 : vector<16x8xf32> to vector<1x16x8xf32>
    %44 = vector.shape_cast %40 : vector<16x8xf32> to vector<1x16x8xf32>
    %45 = vector.shape_cast %41 : vector<16x8xf32> to vector<1x16x8xf32>
    %46 = vector.shape_cast %42 : vector<16x8xf32> to vector<1x16x8xf32>
    %47 = tpu.concatenate %43, %44, %45, %46 in 0 : vector<1x16x8xf32>, vector<1x16x8xf32>, vector<1x16x8xf32>, vector<1x16x8xf32> -> vector<4x16x8xf32>
    %48 = vector.shape_cast %47 : vector<4x16x8xf32> to vector<8x8x8xf32>
    "tpu.trace_start"() <{level = 10 : i32, message = "xqd,xkd->xqk"}> : () -> ()
    %cst_18 = arith.constant dense<0.000000e+00> : vector<8x8x8xf32>
    %49 = tpu.matmul %26, %37, %cst_18 {dimension_numbers = #tpu.dot_dimension_numbers<[2], [2], [1], [1], [0, 0, 0, 1, 1, 1], [0], [0]>} : vector<8x8x8xf32>, vector<8x8x8xf32>, vector<8x8x8xf32> -> vector<8x8x8xf32>
    "tpu.trace_stop"() : () -> ()
    %50 = vector.shape_cast %4 : vector<8x8xf32> to vector<1x8x8xf32>
    %51 = vector.broadcast %50 : vector<1x8x8xf32> to vector<8x8x8xf32>
    %52 = arith.addf %49, %51 : vector<8x8x8xf32>
    %cst_19 = arith.constant dense<0xFF800000> : vector<8x8xf32>
    %53 = vector.multi_reduction <maximumf>, %52, %cst_19 [2] : vector<8x8x8xf32> to vector<8x8xf32>
    %54 = vector.shape_cast %53 : vector<8x8xf32> to vector<8x8x1xf32>
    %55 = vector.broadcast %54 : vector<8x8x1xf32> to vector<8x8x8xf32>
    %56 = arith.subf %52, %55 : vector<8x8x8xf32>
    %57 = math.exp %56 : vector<8x8x8xf32>
    %cst_20 = arith.constant dense<0.000000e+00> : vector<8x8xf32>
    %58 = vector.multi_reduction <add>, %57, %cst_20 [2] : vector<8x8x8xf32> to vector<8x8xf32>
    %59 = vector.shape_cast %58 : vector<8x8xf32> to vector<8x8x1xf32>
    %60 = vector.broadcast %59 : vector<8x8x1xf32> to vector<8x8x8xf32>
    %61 = arith.divf %57, %60 : vector<8x8x8xf32>
    "tpu.trace_start"() <{level = 10 : i32, message = "xqk,xkd->xqd"}> : () -> ()
    %cst_21 = arith.constant dense<0.000000e+00> : vector<8x8x8xf32>
    %62 = tpu.matmul %61, %48, %cst_21 {dimension_numbers = #tpu.dot_dimension_numbers<[2], [1], [1], [2], [0, 0, 0, 1, 1, 2], [0], [0]>} : vector<8x8x8xf32>, vector<8x8x8xf32>, vector<8x8x8xf32> -> vector<8x8x8xf32>
    "tpu.trace_stop"() : () -> ()
    %63 = vector.shape_cast %52 : vector<8x8x8xf32> to vector<4x2x8x8xf32>
    %64 = vector.extract_strided_slice %63 {offsets = [0, 0, 0, 0], sizes = [4, 1, 8, 8], strides = [1, 1, 1, 1]} : vector<4x2x8x8xf32> to vector<4x1x8x8xf32>
    %65 = vector.shape_cast %64 : vector<4x1x8x8xf32> to vector<4x8x8xf32>
    %c0_22 = arith.constant 0 : index
    %c0_23 = arith.constant 0 : index
    %c0_24 = arith.constant 0 : index
    %c0_25 = arith.constant 0 : index
    %66 = vector.load %arg12[%c0_22, %c0_23, %c0_24, %c0_25] : memref<2x4x8x8xf32, #tpu.memory_space<vmem>>, vector<1x4x8x8xf32>
    %67 = vector.shape_cast %66 : vector<1x4x8x8xf32> to vector<4x8x8xf32>
    %68 = vector.shape_cast %65 : vector<4x8x8xf32> to vector<1x4x8x8xf32>
    tpu.vector_store %arg12[%c0_22, %c0_23, %c0_24, %c0_25], %68 {strides = array<i32>} : memref<2x4x8x8xf32, #tpu.memory_space<vmem>>, vector<1x4x8x8xf32>,
    %69 = vector.extract_strided_slice %63 {offsets = [0, 1, 0, 0], sizes = [4, 1, 8, 8], strides = [1, 1, 1, 1]} : vector<4x2x8x8xf32> to vector<4x1x8x8xf32>
    %70 = vector.shape_cast %69 : vector<4x1x8x8xf32> to vector<4x8x8xf32>
    %c1 = arith.constant 1 : index
    %c0_26 = arith.constant 0 : index
    %c0_27 = arith.constant 0 : index
    %c0_28 = arith.constant 0 : index
    %71 = vector.load %arg12[%c1, %c0_26, %c0_27, %c0_28] : memref<2x4x8x8xf32, #tpu.memory_space<vmem>>, vector<1x4x8x8xf32>
    %72 = vector.shape_cast %71 : vector<1x4x8x8xf32> to vector<4x8x8xf32>
    %73 = vector.shape_cast %70 : vector<4x8x8xf32> to vector<1x4x8x8xf32>
    tpu.vector_store %arg12[%c1, %c0_26, %c0_27, %c0_28], %73 {strides = array<i32>} : memref<2x4x8x8xf32, #tpu.memory_space<vmem>>, vector<1x4x8x8xf32>,
    %c0_29 = arith.constant 0 : index
    %c0_30 = arith.constant 0 : index
    %c0_31 = arith.constant 0 : index
    %74 = vector.load %arg5[%c0_29, %c0_30, %c0_31] : memref<3x32x128xf32, #tpu.memory_space<vmem>>, vector<1x32x128xf32>
    %75 = vector.shape_cast %74 : vector<1x32x128xf32> to vector<32x128xf32>
    %76 = vector.extract_strided_slice %75 {offsets = [0, 96], sizes = [32, 32], strides = [1, 1]} : vector<32x128xf32> to vector<32x32xf32>
    %c0_32 = arith.constant 0 : index
    %c0_33 = arith.constant 0 : index
    %c0_34 = arith.constant 0 : index
    %77 = vector.load %arg6[%c0_32, %c0_33, %c0_34] : memref<3x1x128xf32, #tpu.memory_space<vmem>>, vector<1x1x128xf32>
    %78 = vector.shape_cast %77 : vector<1x1x128xf32> to vector<1x128xf32>
    %79 = vector.extract_strided_slice %78 {offsets = [0, 96], sizes = [1, 32], strides = [1, 1]} : vector<1x128xf32> to vector<1x32xf32>
    %80 = vector.shape_cast %62 : vector<8x8x8xf32> to vector<4x16x8xf32>
    %81 = vector.extract_strided_slice %80 {offsets = [0, 0, 0], sizes = [1, 16, 8], strides = [1, 1, 1]} : vector<4x16x8xf32> to vector<1x16x8xf32>
    %82 = vector.shape_cast %81 : vector<1x16x8xf32> to vector<16x8xf32>
    %83 = vector.extract_strided_slice %80 {offsets = [1, 0, 0], sizes = [1, 16, 8], strides = [1, 1, 1]} : vector<4x16x8xf32> to vector<1x16x8xf32>
    %84 = vector.shape_cast %83 : vector<1x16x8xf32> to vector<16x8xf32>
    %85 = vector.extract_strided_slice %80 {offsets = [2, 0, 0], sizes = [1, 16, 8], strides = [1, 1, 1]} : vector<4x16x8xf32> to vector<1x16x8xf32>
    %86 = vector.shape_cast %85 : vector<1x16x8xf32> to vector<16x8xf32>
    %87 = vector.extract_strided_slice %80 {offsets = [3, 0, 0], sizes = [1, 16, 8], strides = [1, 1, 1]} : vector<4x16x8xf32> to vector<1x16x8xf32>
    %88 = vector.shape_cast %87 : vector<1x16x8xf32> to vector<16x8xf32>
    %89 = tpu.concatenate %82, %84, %86, %88 in 1 : vector<16x8xf32>, vector<16x8xf32>, vector<16x8xf32>, vector<16x8xf32> -> vector<16x32xf32>
    %cst_35 = arith.constant dense<0.000000e+00> : vector<16x32xf32>
    %90 = tpu.matmul %89, %76, %cst_35 {dimension_numbers = #tpu.dot_dimension_numbers<[1], [0], [0], [1], [0, 0, 1, 1], [], []>} : vector<16x32xf32>, vector<32x32xf32>, vector<16x32xf32> -> vector<16x32xf32>
    %91 = vector.broadcast %79 : vector<1x32xf32> to vector<16x32xf32>
    %92 = arith.addf %90, %91 : vector<16x32xf32>
    %93 = arith.addf %1, %92 : vector<16x32xf32>
    %cst_36 = arith.constant dense<0.000000e+00> : vector<16xf32>
    %94 = vector.multi_reduction <add>, %93, %cst_36 [1] : vector<16x32xf32> to vector<16xf32>
    %95 = vector.shape_cast %94 : vector<16xf32> to vector<16x1xf32>
    %cst_37 = arith.constant 3.200000e+01 : f32
    %96 = vector.broadcast %cst_37 : f32 to vector<16x1xf32>
    %97 = arith.divf %95, %96 : vector<16x1xf32>
    %98 = vector.broadcast %97 : vector<16x1xf32> to vector<16x32xf32>
    %99 = arith.subf %93, %98 : vector<16x32xf32>
    %100 = vector.broadcast %97 : vector<16x1xf32> to vector<16x32xf32>
    %101 = arith.subf %93, %100 : vector<16x32xf32>
    %102 = arith.mulf %99, %101 : vector<16x32xf32>
    %cst_38 = arith.constant dense<0.000000e+00> : vector<16xf32>
    %103 = vector.multi_reduction <add>, %102, %cst_38 [1] : vector<16x32xf32> to vector<16xf32>
    %104 = vector.shape_cast %103 : vector<16xf32> to vector<16x1xf32>
    %cst_39 = arith.constant 3.200000e+01 : f32
    %105 = vector.broadcast %cst_39 : f32 to vector<16x1xf32>
    %106 = arith.divf %104, %105 : vector<16x1xf32>
    %107 = vector.broadcast %97 : vector<16x1xf32> to vector<16x32xf32>
    %108 = arith.subf %93, %107 : vector<16x32xf32>
    %cst_40 = arith.constant 9.99999974E-6 : f32
    %109 = vector.broadcast %cst_40 : f32 to vector<16x1xf32>
    %110 = arith.addf %106, %109 : vector<16x1xf32>
    %111 = math.rsqrt %110 : vector<16x1xf32>
    %112 = vector.broadcast %111 : vector<16x1xf32> to vector<16x32xf32>
    %113 = arith.mulf %108, %112 : vector<16x32xf32>
    %c0_41 = arith.constant 0 : index
    %c0_42 = arith.constant 0 : index
    %c0_43 = arith.constant 0 : index
    %114 = vector.load %arg7[%c0_41, %c0_42, %c0_43] : memref<4x1x64xf32, #tpu.memory_space<vmem>>, vector<1x1x64xf32>
    %115 = vector.shape_cast %114 : vector<1x1x64xf32> to vector<1x64xf32>
    %116 = vector.extract_strided_slice %115 {offsets = [0, 0], sizes = [1, 32], strides = [1, 1]} : vector<1x64xf32> to vector<1x32xf32>
    %117 = vector.broadcast %116 : vector<1x32xf32> to vector<16x32xf32>
    %118 = arith.mulf %113, %117 : vector<16x32xf32>
    %119 = vector.extract_strided_slice %115 {offsets = [0, 32], sizes = [1, 32], strides = [1, 1]} : vector<1x64xf32> to vector<1x32xf32>
    %120 = vector.broadcast %119 : vector<1x32xf32> to vector<16x32xf32>
    %121 = arith.addf %118, %120 : vector<16x32xf32>
    %c1_44 = arith.constant 1 : index
    %c0_45 = arith.constant 0 : index
    %c0_46 = arith.constant 0 : index
    %122 = vector.load %arg5[%c1_44, %c0_45, %c0_46] : memref<3x32x128xf32, #tpu.memory_space<vmem>>, vector<1x32x128xf32>
    %123 = vector.shape_cast %122 : vector<1x32x128xf32> to vector<32x128xf32>
    %c1_47 = arith.constant 1 : index
    %c0_48 = arith.constant 0 : index
    %c0_49 = arith.constant 0 : index
    %124 = vector.load %arg6[%c1_47, %c0_48, %c0_49] : memref<3x1x128xf32, #tpu.memory_space<vmem>>, vector<1x1x128xf32>
    %125 = vector.shape_cast %124 : vector<1x1x128xf32> to vector<1x128xf32>
    %cst_50 = arith.constant dense<0.000000e+00> : vector<16x128xf32>
    %126 = tpu.matmul %121, %123, %cst_50 {dimension_numbers = #tpu.dot_dimension_numbers<[1], [0], [0], [1], [0, 0, 1, 1], [], []>} : vector<16x32xf32>, vector<32x128xf32>, vector<16x128xf32> -> vector<16x128xf32>
    %127 = vector.broadcast %125 : vector<1x128xf32> to vector<16x128xf32>
    %128 = arith.addf %126, %127 : vector<16x128xf32>
    %c0_51 = arith.constant 0 : index
    %c0_52 = arith.constant 0 : index
    %c0_53 = arith.constant 0 : index
    %129 = vector.load %arg2[%c0_51, %c0_52, %c0_53] : memref<8x8x8xf32, #tpu.memory_space<vmem>>, vector<8x8x8xf32>
    %130 = vector.extract_strided_slice %128 {offsets = [0, 32], sizes = [16, 32], strides = [1, 1]} : vector<16x128xf32> to vector<16x32xf32>
    %131 = vector.extract_strided_slice %130 {offsets = [0, 0], sizes = [16, 8], strides = [1, 1]} : vector<16x32xf32> to vector<16x8xf32>
    %132 = vector.extract_strided_slice %130 {offsets = [0, 8], sizes = [16, 8], strides = [1, 1]} : vector<16x32xf32> to vector<16x8xf32>
    %133 = vector.extract_strided_slice %130 {offsets = [0, 16], sizes = [16, 8], strides = [1, 1]} : vector<16x32xf32> to vector<16x8xf32>
    %134 = vector.extract_strided_slice %130 {offsets = [0, 24], sizes = [16, 8], strides = [1, 1]} : vector<16x32xf32> to vector<16x8xf32>
    %135 = vector.shape_cast %131 : vector<16x8xf32> to vector<1x16x8xf32>
    %136 = vector.shape_cast %132 : vector<16x8xf32> to vector<1x16x8xf32>
    %137 = vector.shape_cast %133 : vector<16x8xf32> to vector<1x16x8xf32>
    %138 = vector.shape_cast %134 : vector<16x8xf32> to vector<1x16x8xf32>
    %139 = tpu.concatenate %135, %136, %137, %138 in 0 : vector<1x16x8xf32>, vector<1x16x8xf32>, vector<1x16x8xf32>, vector<1x16x8xf32> -> vector<4x16x8xf32>
    %140 = vector.shape_cast %139 : vector<4x16x8xf32> to vector<8x8x8xf32>
    %141 = vector.extract_strided_slice %128 {offsets = [0, 64], sizes = [16, 32], strides = [1, 1]} : vector<16x128xf32> to vector<16x32xf32>
    %142 = vector.extract_strided_slice %141 {offsets = [0, 0], sizes = [16, 8], strides = [1, 1]} : vector<16x32xf32> to vector<16x8xf32>
    %143 = vector.extract_strided_slice %141 {offsets = [0, 8], sizes = [16, 8], strides = [1, 1]} : vector<16x32xf32> to vector<16x8xf32>
    %144 = vector.extract_strided_slice %141 {offsets = [0, 16], sizes = [16, 8], strides = [1, 1]} : vector<16x32xf32> to vector<16x8xf32>
    %145 = vector.extract_strided_slice %141 {offsets = [0, 24], sizes = [16, 8], strides = [1, 1]} : vector<16x32xf32> to vector<16x8xf32>
    %146 = vector.shape_cast %142 : vector<16x8xf32> to vector<1x16x8xf32>
    %147 = vector.shape_cast %143 : vector<16x8xf32> to vector<1x16x8xf32>
    %148 = vector.shape_cast %144 : vector<16x8xf32> to vector<1x16x8xf32>
    %149 = vector.shape_cast %145 : vector<16x8xf32> to vector<1x16x8xf32>
    %150 = tpu.concatenate %146, %147, %148, %149 in 0 : vector<1x16x8xf32>, vector<1x16x8xf32>, vector<1x16x8xf32>, vector<1x16x8xf32> -> vector<4x16x8xf32>
    %151 = vector.shape_cast %150 : vector<4x16x8xf32> to vector<8x8x8xf32>
    "tpu.trace_start"() <{level = 10 : i32, message = "xqd,xkd->xqk"}> : () -> ()
    %cst_54 = arith.constant dense<0.000000e+00> : vector<8x8x8xf32>
    %152 = tpu.matmul %129, %140, %cst_54 {dimension_numbers = #tpu.dot_dimension_numbers<[2], [2], [1], [1], [0, 0, 0, 1, 1, 1], [0], [0]>} : vector<8x8x8xf32>, vector<8x8x8xf32>, vector<8x8x8xf32> -> vector<8x8x8xf32>
    "tpu.trace_stop"() : () -> ()
    %153 = vector.shape_cast %4 : vector<8x8xf32> to vector<1x8x8xf32>
    %154 = vector.broadcast %153 : vector<1x8x8xf32> to vector<8x8x8xf32>
    %155 = arith.addf %152, %154 : vector<8x8x8xf32>
    %cst_55 = arith.constant dense<0xFF800000> : vector<8x8xf32>
    %156 = vector.multi_reduction <maximumf>, %155, %cst_55 [2] : vector<8x8x8xf32> to vector<8x8xf32>
    %157 = vector.shape_cast %156 : vector<8x8xf32> to vector<8x8x1xf32>
    %158 = vector.broadcast %157 : vector<8x8x1xf32> to vector<8x8x8xf32>
    %159 = arith.subf %155, %158 : vector<8x8x8xf32>
    %160 = math.exp %159 : vector<8x8x8xf32>
    %cst_56 = arith.constant dense<0.000000e+00> : vector<8x8xf32>
    %161 = vector.multi_reduction <add>, %160, %cst_56 [2] : vector<8x8x8xf32> to vector<8x8xf32>
    %162 = vector.shape_cast %161 : vector<8x8xf32> to vector<8x8x1xf32>
    %163 = vector.broadcast %162 : vector<8x8x1xf32> to vector<8x8x8xf32>
    %164 = arith.divf %160, %163 : vector<8x8x8xf32>
    "tpu.trace_start"() <{level = 10 : i32, message = "xqk,xkd->xqd"}> : () -> ()
    %cst_57 = arith.constant dense<0.000000e+00> : vector<8x8x8xf32>
    %165 = tpu.matmul %164, %151, %cst_57 {dimension_numbers = #tpu.dot_dimension_numbers<[2], [1], [1], [2], [0, 0, 0, 1, 1, 2], [0], [0]>} : vector<8x8x8xf32>, vector<8x8x8xf32>, vector<8x8x8xf32> -> vector<8x8x8xf32>
    "tpu.trace_stop"() : () -> ()
    %c1_58 = arith.constant 1 : index
    %c0_59 = arith.constant 0 : index
    %c0_60 = arith.constant 0 : index
    %166 = vector.load %arg5[%c1_58, %c0_59, %c0_60] : memref<3x32x128xf32, #tpu.memory_space<vmem>>, vector<1x32x128xf32>
    %167 = vector.shape_cast %166 : vector<1x32x128xf32> to vector<32x128xf32>
    %168 = vector.extract_strided_slice %167 {offsets = [0, 96], sizes = [32, 32], strides = [1, 1]} : vector<32x128xf32> to vector<32x32xf32>
    %c1_61 = arith.constant 1 : index
    %c0_62 = arith.constant 0 : index
    %c0_63 = arith.constant 0 : index
    %169 = vector.load %arg6[%c1_61, %c0_62, %c0_63] : memref<3x1x128xf32, #tpu.memory_space<vmem>>, vector<1x1x128xf32>
    %170 = vector.shape_cast %169 : vector<1x1x128xf32> to vector<1x128xf32>
    %171 = vector.extract_strided_slice %170 {offsets = [0, 96], sizes = [1, 32], strides = [1, 1]} : vector<1x128xf32> to vector<1x32xf32>
    %172 = vector.shape_cast %165 : vector<8x8x8xf32> to vector<4x16x8xf32>
    %173 = vector.extract_strided_slice %172 {offsets = [0, 0, 0], sizes = [1, 16, 8], strides = [1, 1, 1]} : vector<4x16x8xf32> to vector<1x16x8xf32>
    %174 = vector.shape_cast %173 : vector<1x16x8xf32> to vector<16x8xf32>
    %175 = vector.extract_strided_slice %172 {offsets = [1, 0, 0], sizes = [1, 16, 8], strides = [1, 1, 1]} : vector<4x16x8xf32> to vector<1x16x8xf32>
    %176 = vector.shape_cast %175 : vector<1x16x8xf32> to vector<16x8xf32>
    %177 = vector.extract_strided_slice %172 {offsets = [2, 0, 0], sizes = [1, 16, 8], strides = [1, 1, 1]} : vector<4x16x8xf32> to vector<1x16x8xf32>
    %178 = vector.shape_cast %177 : vector<1x16x8xf32> to vector<16x8xf32>
    %179 = vector.extract_strided_slice %172 {offsets = [3, 0, 0], sizes = [1, 16, 8], strides = [1, 1, 1]} : vector<4x16x8xf32> to vector<1x16x8xf32>
    %180 = vector.shape_cast %179 : vector<1x16x8xf32> to vector<16x8xf32>
    %181 = tpu.concatenate %174, %176, %178, %180 in 1 : vector<16x8xf32>, vector<16x8xf32>, vector<16x8xf32>, vector<16x8xf32> -> vector<16x32xf32>
    %cst_64 = arith.constant dense<0.000000e+00> : vector<16x32xf32>
    %182 = tpu.matmul %181, %168, %cst_64 {dimension_numbers = #tpu.dot_dimension_numbers<[1], [0], [0], [1], [0, 0, 1, 1], [], []>} : vector<16x32xf32>, vector<32x32xf32>, vector<16x32xf32> -> vector<16x32xf32>
    %183 = vector.broadcast %171 : vector<1x32xf32> to vector<16x32xf32>
    %184 = arith.addf %182, %183 : vector<16x32xf32>
    %185 = arith.addf %121, %184 : vector<16x32xf32>
    %cst_65 = arith.constant dense<0.000000e+00> : vector<16xf32>
    %186 = vector.multi_reduction <add>, %185, %cst_65 [1] : vector<16x32xf32> to vector<16xf32>
    %187 = vector.shape_cast %186 : vector<16xf32> to vector<16x1xf32>
    %cst_66 = arith.constant 3.200000e+01 : f32
    %188 = vector.broadcast %cst_66 : f32 to vector<16x1xf32>
    %189 = arith.divf %187, %188 : vector<16x1xf32>
    %190 = vector.broadcast %189 : vector<16x1xf32> to vector<16x32xf32>
    %191 = arith.subf %185, %190 : vector<16x32xf32>
    %192 = vector.broadcast %189 : vector<16x1xf32> to vector<16x32xf32>
    %193 = arith.subf %185, %192 : vector<16x32xf32>
    %194 = arith.mulf %191, %193 : vector<16x32xf32>
    %cst_67 = arith.constant dense<0.000000e+00> : vector<16xf32>
    %195 = vector.multi_reduction <add>, %194, %cst_67 [1] : vector<16x32xf32> to vector<16xf32>
    %196 = vector.shape_cast %195 : vector<16xf32> to vector<16x1xf32>
    %cst_68 = arith.constant 3.200000e+01 : f32
    %197 = vector.broadcast %cst_68 : f32 to vector<16x1xf32>
    %198 = arith.divf %196, %197 : vector<16x1xf32>
    %199 = vector.broadcast %189 : vector<16x1xf32> to vector<16x32xf32>
    %200 = arith.subf %185, %199 : vector<16x32xf32>
    %cst_69 = arith.constant 9.99999974E-6 : f32
    %201 = vector.broadcast %cst_69 : f32 to vector<16x1xf32>
    %202 = arith.addf %198, %201 : vector<16x1xf32>
    %203 = math.rsqrt %202 : vector<16x1xf32>
    %204 = vector.broadcast %203 : vector<16x1xf32> to vector<16x32xf32>
    %205 = arith.mulf %200, %204 : vector<16x32xf32>
    %c1_70 = arith.constant 1 : index
    %c0_71 = arith.constant 0 : index
    %c0_72 = arith.constant 0 : index
    %206 = vector.load %arg7[%c1_70, %c0_71, %c0_72] : memref<4x1x64xf32, #tpu.memory_space<vmem>>, vector<1x1x64xf32>
    %207 = vector.shape_cast %206 : vector<1x1x64xf32> to vector<1x64xf32>
    %208 = vector.extract_strided_slice %207 {offsets = [0, 0], sizes = [1, 32], strides = [1, 1]} : vector<1x64xf32> to vector<1x32xf32>
    %209 = vector.broadcast %208 : vector<1x32xf32> to vector<16x32xf32>
    %210 = arith.mulf %205, %209 : vector<16x32xf32>
    %211 = vector.extract_strided_slice %207 {offsets = [0, 32], sizes = [1, 32], strides = [1, 1]} : vector<1x64xf32> to vector<1x32xf32>
    %212 = vector.broadcast %211 : vector<1x32xf32> to vector<16x32xf32>
    %213 = arith.addf %210, %212 : vector<16x32xf32>
    %c2 = arith.constant 2 : index
    %c0_73 = arith.constant 0 : index
    %c0_74 = arith.constant 0 : index
    %214 = vector.load %arg5[%c2, %c0_73, %c0_74] : memref<3x32x128xf32, #tpu.memory_space<vmem>>, vector<1x32x128xf32>
    %215 = vector.shape_cast %214 : vector<1x32x128xf32> to vector<32x128xf32>
    %c2_75 = arith.constant 2 : index
    %c0_76 = arith.constant 0 : index
    %c0_77 = arith.constant 0 : index
    %216 = vector.load %arg6[%c2_75, %c0_76, %c0_77] : memref<3x1x128xf32, #tpu.memory_space<vmem>>, vector<1x1x128xf32>
    %217 = vector.shape_cast %216 : vector<1x1x128xf32> to vector<1x128xf32>
    %cst_78 = arith.constant dense<0.000000e+00> : vector<16x128xf32>
    %218 = tpu.matmul %213, %215, %cst_78 {dimension_numbers = #tpu.dot_dimension_numbers<[1], [0], [0], [1], [0, 0, 1, 1], [], []>} : vector<16x32xf32>, vector<32x128xf32>, vector<16x128xf32> -> vector<16x128xf32>
    %219 = vector.broadcast %217 : vector<1x128xf32> to vector<16x128xf32>
    %220 = arith.addf %218, %219 : vector<16x128xf32>
    %221 = vector.extract_strided_slice %220 {offsets = [0, 0], sizes = [16, 32], strides = [1, 1]} : vector<16x128xf32> to vector<16x32xf32>
    %cst_79 = arith.constant 0.353553385 : f32
    %222 = vector.broadcast %cst_79 : f32 to vector<16x32xf32>
    %223 = arith.mulf %221, %222 : vector<16x32xf32>
    %c2_80 = arith.constant 2 : index
    %c0_81 = arith.constant 0 : index
    %c0_82 = arith.constant 0 : index
    %224 = vector.load %arg5[%c2_80, %c0_81, %c0_82] : memref<3x32x128xf32, #tpu.memory_space<vmem>>, vector<1x32x128xf32>
    %225 = vector.shape_cast %224 : vector<1x32x128xf32> to vector<32x128xf32>
    %c2_83 = arith.constant 2 : index
    %c0_84 = arith.constant 0 : index
    %c0_85 = arith.constant 0 : index
    %226 = vector.load %arg6[%c2_83, %c0_84, %c0_85] : memref<3x1x128xf32, #tpu.memory_space<vmem>>, vector<1x1x128xf32>
    %227 = vector.shape_cast %226 : vector<1x1x128xf32> to vector<1x128xf32>
    %cst_86 = arith.constant dense<0.000000e+00> : vector<16x128xf32>
    %228 = tpu.matmul %3, %225, %cst_86 {dimension_numbers = #tpu.dot_dimension_numbers<[1], [0], [0], [1], [0, 0, 1, 1], [], []>} : vector<16x32xf32>, vector<32x128xf32>, vector<16x128xf32> -> vector<16x128xf32>
    %229 = vector.broadcast %227 : vector<1x128xf32> to vector<16x128xf32>
    %230 = arith.addf %228, %229 : vector<16x128xf32>
    %231 = vector.extract_strided_slice %223 {offsets = [0, 0], sizes = [16, 8], strides = [1, 1]} : vector<16x32xf32> to vector<16x8xf32>
    %232 = vector.extract_strided_slice %223 {offsets = [0, 8], sizes = [16, 8], strides = [1, 1]} : vector<16x32xf32> to vector<16x8xf32>
    %233 = vector.extract_strided_slice %223 {offsets = [0, 16], sizes = [16, 8], strides = [1, 1]} : vector<16x32xf32> to vector<16x8xf32>
    %234 = vector.extract_strided_slice %223 {offsets = [0, 24], sizes = [16, 8], strides = [1, 1]} : vector<16x32xf32> to vector<16x8xf32>
    %235 = vector.shape_cast %231 : vector<16x8xf32> to vector<1x16x8xf32>
    %236 = vector.shape_cast %232 : vector<16x8xf32> to vector<1x16x8xf32>
    %237 = vector.shape_cast %233 : vector<16x8xf32> to vector<1x16x8xf32>
    %238 = vector.shape_cast %234 : vector<16x8xf32> to vector<1x16x8xf32>
    %239 = tpu.concatenate %235, %236, %237, %238 in 0 : vector<1x16x8xf32>, vector<1x16x8xf32>, vector<1x16x8xf32>, vector<1x16x8xf32> -> vector<4x16x8xf32>
    %240 = vector.shape_cast %239 : vector<4x16x8xf32> to vector<8x8x8xf32>
    %241 = vector.extract_strided_slice %230 {offsets = [0, 32], sizes = [16, 32], strides = [1, 1]} : vector<16x128xf32> to vector<16x32xf32>
    %242 = vector.extract_strided_slice %241 {offsets = [0, 0], sizes = [16, 8], strides = [1, 1]} : vector<16x32xf32> to vector<16x8xf32>
    %243 = vector.extract_strided_slice %241 {offsets = [0, 8], sizes = [16, 8], strides = [1, 1]} : vector<16x32xf32> to vector<16x8xf32>
    %244 = vector.extract_strided_slice %241 {offsets = [0, 16], sizes = [16, 8], strides = [1, 1]} : vector<16x32xf32> to vector<16x8xf32>
    %245 = vector.extract_strided_slice %241 {offsets = [0, 24], sizes = [16, 8], strides = [1, 1]} : vector<16x32xf32> to vector<16x8xf32>
    %246 = vector.shape_cast %242 : vector<16x8xf32> to vector<1x16x8xf32>
    %247 = vector.shape_cast %243 : vector<16x8xf32> to vector<1x16x8xf32>
    %248 = vector.shape_cast %244 : vector<16x8xf32> to vector<1x16x8xf32>
    %249 = vector.shape_cast %245 : vector<16x8xf32> to vector<1x16x8xf32>
    %250 = tpu.concatenate %246, %247, %248, %249 in 0 : vector<1x16x8xf32>, vector<1x16x8xf32>, vector<1x16x8xf32>, vector<1x16x8xf32> -> vector<4x16x8xf32>
    %251 = vector.shape_cast %250 : vector<4x16x8xf32> to vector<8x8x8xf32>
    %252 = vector.extract_strided_slice %230 {offsets = [0, 64], sizes = [16, 32], strides = [1, 1]} : vector<16x128xf32> to vector<16x32xf32>
    %253 = vector.extract_strided_slice %252 {offsets = [0, 0], sizes = [16, 8], strides = [1, 1]} : vector<16x32xf32> to vector<16x8xf32>
    %254 = vector.extract_strided_slice %252 {offsets = [0, 8], sizes = [16, 8], strides = [1, 1]} : vector<16x32xf32> to vector<16x8xf32>
    %255 = vector.extract_strided_slice %252 {offsets = [0, 16], sizes = [16, 8], strides = [1, 1]} : vector<16x32xf32> to vector<16x8xf32>
    %256 = vector.extract_strided_slice %252 {offsets = [0, 24], sizes = [16, 8], strides = [1, 1]} : vector<16x32xf32> to vector<16x8xf32>
    %257 = vector.shape_cast %253 : vector<16x8xf32> to vector<1x16x8xf32>
    %258 = vector.shape_cast %254 : vector<16x8xf32> to vector<1x16x8xf32>
    %259 = vector.shape_cast %255 : vector<16x8xf32> to vector<1x16x8xf32>
    %260 = vector.shape_cast %256 : vector<16x8xf32> to vector<1x16x8xf32>
    %261 = tpu.concatenate %257, %258, %259, %260 in 0 : vector<1x16x8xf32>, vector<1x16x8xf32>, vector<1x16x8xf32>, vector<1x16x8xf32> -> vector<4x16x8xf32>
    %262 = vector.shape_cast %261 : vector<4x16x8xf32> to vector<8x8x8xf32>
    "tpu.trace_start"() <{level = 10 : i32, message = "xqd,xkd->xqk"}> : () -> ()
    %cst_87 = arith.constant dense<0.000000e+00> : vector<8x8x8xf32>
    %263 = tpu.matmul %240, %251, %cst_87 {dimension_numbers = #tpu.dot_dimension_numbers<[2], [2], [1], [1], [0, 0, 0, 1, 1, 1], [0], [0]>} : vector<8x8x8xf32>, vector<8x8x8xf32>, vector<8x8x8xf32> -> vector<8x8x8xf32>
    "tpu.trace_stop"() : () -> ()
    %264 = vector.shape_cast %5 : vector<8x8xf32> to vector<1x8x8xf32>
    %265 = vector.broadcast %264 : vector<1x8x8xf32> to vector<8x8x8xf32>
    %266 = arith.addf %263, %265 : vector<8x8x8xf32>
    %cst_88 = arith.constant dense<0xFF800000> : vector<8x8xf32>
    %267 = vector.multi_reduction <maximumf>, %266, %cst_88 [2] : vector<8x8x8xf32> to vector<8x8xf32>
    %268 = vector.shape_cast %267 : vector<8x8xf32> to vector<8x8x1xf32>
    %269 = vector.broadcast %268 : vector<8x8x1xf32> to vector<8x8x8xf32>
    %270 = arith.subf %266, %269 : vector<8x8x8xf32>
    %271 = math.exp %270 : vector<8x8x8xf32>
    %cst_89 = arith.constant dense<0.000000e+00> : vector<8x8xf32>
    %272 = vector.multi_reduction <add>, %271, %cst_89 [2] : vector<8x8x8xf32> to vector<8x8xf32>
    %273 = vector.shape_cast %272 : vector<8x8xf32> to vector<8x8x1xf32>
    %274 = vector.broadcast %273 : vector<8x8x1xf32> to vector<8x8x8xf32>
    %275 = arith.divf %271, %274 : vector<8x8x8xf32>
    "tpu.trace_start"() <{level = 10 : i32, message = "xqk,xkd->xqd"}> : () -> ()
    %cst_90 = arith.constant dense<0.000000e+00> : vector<8x8x8xf32>
    %276 = tpu.matmul %275, %262, %cst_90 {dimension_numbers = #tpu.dot_dimension_numbers<[2], [1], [1], [2], [0, 0, 0, 1, 1, 2], [0], [0]>} : vector<8x8x8xf32>, vector<8x8x8xf32>, vector<8x8x8xf32> -> vector<8x8x8xf32>
    "tpu.trace_stop"() : () -> ()
    %277 = vector.shape_cast %266 : vector<8x8x8xf32> to vector<4x2x8x8xf32>
    %278 = vector.extract_strided_slice %277 {offsets = [0, 0, 0, 0], sizes = [4, 1, 8, 8], strides = [1, 1, 1, 1]} : vector<4x2x8x8xf32> to vector<4x1x8x8xf32>
    %279 = vector.shape_cast %278 : vector<4x1x8x8xf32> to vector<4x8x8xf32>
    %c0_91 = arith.constant 0 : index
    %c0_92 = arith.constant 0 : index
    %c0_93 = arith.constant 0 : index
    %c0_94 = arith.constant 0 : index
    %280 = vector.load %arg13[%c0_91, %c0_92, %c0_93, %c0_94] : memref<2x4x8x8xf32, #tpu.memory_space<vmem>>, vector<1x4x8x8xf32>
    %281 = vector.shape_cast %280 : vector<1x4x8x8xf32> to vector<4x8x8xf32>
    %282 = vector.shape_cast %279 : vector<4x8x8xf32> to vector<1x4x8x8xf32>
    tpu.vector_store %arg13[%c0_91, %c0_92, %c0_93, %c0_94], %282 {strides = array<i32>} : memref<2x4x8x8xf32, #tpu.memory_space<vmem>>, vector<1x4x8x8xf32>,
    %283 = vector.extract_strided_slice %277 {offsets = [0, 1, 0, 0], sizes = [4, 1, 8, 8], strides = [1, 1, 1, 1]} : vector<4x2x8x8xf32> to vector<4x1x8x8xf32>
    %284 = vector.shape_cast %283 : vector<4x1x8x8xf32> to vector<4x8x8xf32>
    %c1_95 = arith.constant 1 : index
    %c0_96 = arith.constant 0 : index
    %c0_97 = arith.constant 0 : index
    %c0_98 = arith.constant 0 : index
    %285 = vector.load %arg13[%c1_95, %c0_96, %c0_97, %c0_98] : memref<2x4x8x8xf32, #tpu.memory_space<vmem>>, vector<1x4x8x8xf32>
    %286 = vector.shape_cast %285 : vector<1x4x8x8xf32> to vector<4x8x8xf32>
    %287 = vector.shape_cast %284 : vector<4x8x8xf32> to vector<1x4x8x8xf32>
    tpu.vector_store %arg13[%c1_95, %c0_96, %c0_97, %c0_98], %287 {strides = array<i32>} : memref<2x4x8x8xf32, #tpu.memory_space<vmem>>, vector<1x4x8x8xf32>,
    %c2_99 = arith.constant 2 : index
    %c0_100 = arith.constant 0 : index
    %c0_101 = arith.constant 0 : index
    %288 = vector.load %arg5[%c2_99, %c0_100, %c0_101] : memref<3x32x128xf32, #tpu.memory_space<vmem>>, vector<1x32x128xf32>
    %289 = vector.shape_cast %288 : vector<1x32x128xf32> to vector<32x128xf32>
    %290 = vector.extract_strided_slice %289 {offsets = [0, 96], sizes = [32, 32], strides = [1, 1]} : vector<32x128xf32> to vector<32x32xf32>
    %c2_102 = arith.constant 2 : index
    %c0_103 = arith.constant 0 : index
    %c0_104 = arith.constant 0 : index
    %291 = vector.load %arg6[%c2_102, %c0_103, %c0_104] : memref<3x1x128xf32, #tpu.memory_space<vmem>>, vector<1x1x128xf32>
    %292 = vector.shape_cast %291 : vector<1x1x128xf32> to vector<1x128xf32>
    %293 = vector.extract_strided_slice %292 {offsets = [0, 96], sizes = [1, 32], strides = [1, 1]} : vector<1x128xf32> to vector<1x32xf32>
    %294 = vector.shape_cast %276 : vector<8x8x8xf32> to vector<4x16x8xf32>
    %295 = vector.extract_strided_slice %294 {offsets = [0, 0, 0], sizes = [1, 16, 8], strides = [1, 1, 1]} : vector<4x16x8xf32> to vector<1x16x8xf32>
    %296 = vector.shape_cast %295 : vector<1x16x8xf32> to vector<16x8xf32>
    %297 = vector.extract_strided_slice %294 {offsets = [1, 0, 0], sizes = [1, 16, 8], strides = [1, 1, 1]} : vector<4x16x8xf32> to vector<1x16x8xf32>
    %298 = vector.shape_cast %297 : vector<1x16x8xf32> to vector<16x8xf32>
    %299 = vector.extract_strided_slice %294 {offsets = [2, 0, 0], sizes = [1, 16, 8], strides = [1, 1, 1]} : vector<4x16x8xf32> to vector<1x16x8xf32>
    %300 = vector.shape_cast %299 : vector<1x16x8xf32> to vector<16x8xf32>
    %301 = vector.extract_strided_slice %294 {offsets = [3, 0, 0], sizes = [1, 16, 8], strides = [1, 1, 1]} : vector<4x16x8xf32> to vector<1x16x8xf32>
    %302 = vector.shape_cast %301 : vector<1x16x8xf32> to vector<16x8xf32>
    %303 = tpu.concatenate %296, %298, %300, %302 in 1 : vector<16x8xf32>, vector<16x8xf32>, vector<16x8xf32>, vector<16x8xf32> -> vector<16x32xf32>
    %cst_105 = arith.constant dense<0.000000e+00> : vector<16x32xf32>
    %304 = tpu.matmul %303, %290, %cst_105 {dimension_numbers = #tpu.dot_dimension_numbers<[1], [0], [0], [1], [0, 0, 1, 1], [], []>} : vector<16x32xf32>, vector<32x32xf32>, vector<16x32xf32> -> vector<16x32xf32>
    %305 = vector.broadcast %293 : vector<1x32xf32> to vector<16x32xf32>
    %306 = arith.addf %304, %305 : vector<16x32xf32>
    %307 = arith.addf %213, %306 : vector<16x32xf32>
    %cst_106 = arith.constant dense<0.000000e+00> : vector<16xf32>
    %308 = vector.multi_reduction <add>, %307, %cst_106 [1] : vector<16x32xf32> to vector<16xf32>
    %309 = vector.shape_cast %308 : vector<16xf32> to vector<16x1xf32>
    %cst_107 = arith.constant 3.200000e+01 : f32
    %310 = vector.broadcast %cst_107 : f32 to vector<16x1xf32>
    %311 = arith.divf %309, %310 : vector<16x1xf32>
    %312 = vector.broadcast %311 : vector<16x1xf32> to vector<16x32xf32>
    %313 = arith.subf %307, %312 : vector<16x32xf32>
    %314 = vector.broadcast %311 : vector<16x1xf32> to vector<16x32xf32>
    %315 = arith.subf %307, %314 : vector<16x32xf32>
    %316 = arith.mulf %313, %315 : vector<16x32xf32>
    %cst_108 = arith.constant dense<0.000000e+00> : vector<16xf32>
    %317 = vector.multi_reduction <add>, %316, %cst_108 [1] : vector<16x32xf32> to vector<16xf32>
    %318 = vector.shape_cast %317 : vector<16xf32> to vector<16x1xf32>
    %cst_109 = arith.constant 3.200000e+01 : f32
    %319 = vector.broadcast %cst_109 : f32 to vector<16x1xf32>
    %320 = arith.divf %318, %319 : vector<16x1xf32>
    %321 = vector.broadcast %311 : vector<16x1xf32> to vector<16x32xf32>
    %322 = arith.subf %307, %321 : vector<16x32xf32>
    %cst_110 = arith.constant 9.99999974E-6 : f32
    %323 = vector.broadcast %cst_110 : f32 to vector<16x1xf32>
    %324 = arith.addf %320, %323 : vector<16x1xf32>
    %325 = math.rsqrt %324 : vector<16x1xf32>
    %326 = vector.broadcast %325 : vector<16x1xf32> to vector<16x32xf32>
    %327 = arith.mulf %322, %326 : vector<16x32xf32>
    %c2_111 = arith.constant 2 : index
    %c0_112 = arith.constant 0 : index
    %c0_113 = arith.constant 0 : index
    %328 = vector.load %arg7[%c2_111, %c0_112, %c0_113] : memref<4x1x64xf32, #tpu.memory_space<vmem>>, vector<1x1x64xf32>
    %329 = vector.shape_cast %328 : vector<1x1x64xf32> to vector<1x64xf32>
    %330 = vector.extract_strided_slice %329 {offsets = [0, 0], sizes = [1, 32], strides = [1, 1]} : vector<1x64xf32> to vector<1x32xf32>
    %331 = vector.broadcast %330 : vector<1x32xf32> to vector<16x32xf32>
    %332 = arith.mulf %327, %331 : vector<16x32xf32>
    %333 = vector.extract_strided_slice %329 {offsets = [0, 32], sizes = [1, 32], strides = [1, 1]} : vector<1x64xf32> to vector<1x32xf32>
    %334 = vector.broadcast %333 : vector<1x32xf32> to vector<16x32xf32>
    %335 = arith.addf %332, %334 : vector<16x32xf32>
    %c0_114 = arith.constant 0 : index
    %c0_115 = arith.constant 0 : index
    %336 = vector.load %arg8[%c0_114, %c0_115] : memref<32x64xf32, #tpu.memory_space<vmem>>, vector<32x64xf32>
    %cst_116 = arith.constant dense<0.000000e+00> : vector<16x64xf32>
    %337 = tpu.matmul %335, %336, %cst_116 {dimension_numbers = #tpu.dot_dimension_numbers<[1], [0], [0], [1], [0, 0, 1, 1], [], []>} : vector<16x32xf32>, vector<32x64xf32>, vector<16x64xf32> -> vector<16x64xf32>
    %338 = vector.extract_strided_slice %6 {offsets = [0, 0], sizes = [1, 64], strides = [1, 1]} : vector<1x96xf32> to vector<1x64xf32>
    %339 = vector.broadcast %338 : vector<1x64xf32> to vector<16x64xf32>
    %340 = arith.addf %337, %339 : vector<16x64xf32>
    %cst_117 = arith.constant 0.000000e+00 : f32
    %341 = vector.broadcast %cst_117 : f32 to vector<16x64xf32>
    %342 = arith.maximumf %340, %341 : vector<16x64xf32>
    %c0_118 = arith.constant 0 : index
    %c0_119 = arith.constant 0 : index
    %343 = vector.load %arg9[%c0_118, %c0_119] : memref<64x32xf32, #tpu.memory_space<vmem>>, vector<64x32xf32>
    %cst_120 = arith.constant dense<0.000000e+00> : vector<16x32xf32>
    %344 = tpu.matmul %342, %343, %cst_120 {dimension_numbers = #tpu.dot_dimension_numbers<[1], [0], [0], [1], [0, 0, 1, 1], [], []>} : vector<16x64xf32>, vector<64x32xf32>, vector<16x32xf32> -> vector<16x32xf32>
    %345 = vector.extract_strided_slice %6 {offsets = [0, 64], sizes = [1, 32], strides = [1, 1]} : vector<1x96xf32> to vector<1x32xf32>
    %346 = vector.broadcast %345 : vector<1x32xf32> to vector<16x32xf32>
    %347 = arith.addf %344, %346 : vector<16x32xf32>
    %348 = arith.addf %335, %347 : vector<16x32xf32>
    %cst_121 = arith.constant dense<0.000000e+00> : vector<16xf32>
    %349 = vector.multi_reduction <add>, %348, %cst_121 [1] : vector<16x32xf32> to vector<16xf32>
    %350 = vector.shape_cast %349 : vector<16xf32> to vector<16x1xf32>
    %cst_122 = arith.constant 3.200000e+01 : f32
    %351 = vector.broadcast %cst_122 : f32 to vector<16x1xf32>
    %352 = arith.divf %350, %351 : vector<16x1xf32>
    %353 = vector.broadcast %352 : vector<16x1xf32> to vector<16x32xf32>
    %354 = arith.subf %348, %353 : vector<16x32xf32>
    %355 = vector.broadcast %352 : vector<16x1xf32> to vector<16x32xf32>
    %356 = arith.subf %348, %355 : vector<16x32xf32>
    %357 = arith.mulf %354, %356 : vector<16x32xf32>
    %cst_123 = arith.constant dense<0.000000e+00> : vector<16xf32>
    %358 = vector.multi_reduction <add>, %357, %cst_123 [1] : vector<16x32xf32> to vector<16xf32>
    %359 = vector.shape_cast %358 : vector<16xf32> to vector<16x1xf32>
    %cst_124 = arith.constant 3.200000e+01 : f32
    %360 = vector.broadcast %cst_124 : f32 to vector<16x1xf32>
    %361 = arith.divf %359, %360 : vector<16x1xf32>
    %362 = vector.broadcast %352 : vector<16x1xf32> to vector<16x32xf32>
    %363 = arith.subf %348, %362 : vector<16x32xf32>
    %cst_125 = arith.constant 9.99999974E-6 : f32
    %364 = vector.broadcast %cst_125 : f32 to vector<16x1xf32>
    %365 = arith.addf %361, %364 : vector<16x1xf32>
    %366 = math.rsqrt %365 : vector<16x1xf32>
    %367 = vector.broadcast %366 : vector<16x1xf32> to vector<16x32xf32>
    %368 = arith.mulf %363, %367 : vector<16x32xf32>
    %c3 = arith.constant 3 : index
    %c0_126 = arith.constant 0 : index
    %c0_127 = arith.constant 0 : index
    %369 = vector.load %arg7[%c3, %c0_126, %c0_127] : memref<4x1x64xf32, #tpu.memory_space<vmem>>, vector<1x1x64xf32>
    %370 = vector.shape_cast %369 : vector<1x1x64xf32> to vector<1x64xf32>
    %371 = vector.extract_strided_slice %370 {offsets = [0, 0], sizes = [1, 32], strides = [1, 1]} : vector<1x64xf32> to vector<1x32xf32>
    %372 = vector.broadcast %371 : vector<1x32xf32> to vector<16x32xf32>
    %373 = arith.mulf %368, %372 : vector<16x32xf32>
    %374 = vector.extract_strided_slice %370 {offsets = [0, 32], sizes = [1, 32], strides = [1, 1]} : vector<1x64xf32> to vector<1x32xf32>
    %375 = vector.broadcast %374 : vector<1x32xf32> to vector<16x32xf32>
    %376 = arith.addf %373, %375 : vector<16x32xf32>
    %377 = vector.shape_cast %376 : vector<16x32xf32> to vector<2x8x32xf32>
    %c0_128 = arith.constant 0 : index
    %c0_129 = arith.constant 0 : index
    %c0_130 = arith.constant 0 : index
    %378 = vector.load %arg11[%c0_128, %c0_129, %c0_130] : memref<2x8x32xf32, #tpu.memory_space<vmem>>, vector<2x8x32xf32>
    tpu.vector_store %arg11[%c0_128, %c0_129, %c0_130], %377 {strides = array<i32>} : memref<2x8x32xf32, #tpu.memory_space<vmem>>, vector<2x8x32xf32>,
    return
  }
}

</mosaic_0001>

<llo_original>
// kernel: decoder_layer.1
$region0: #{decoder_layer.1}
  #allocation0 [shape = 'u32[]', space=smem, size = 0x4, offset = 0x4, fixed_abs, tag = 'smem constant byte address 0x4 - core index']
  #allocation1 [shape = 'u32[144,128]{1,0:T(1,128)}', space=vmem, size = 0x12000, scoped, tag = 'internal scratch']
  %s0 = inlined_call_operand.vmem [shape: f32[2,8,32], index: 0, kind: input, shape index: {}]
  %s1 = inlined_call_operand.vmem [shape: f32[2,8,32], index: 1, kind: input, shape index: {}]
  %s2 = inlined_call_operand.vmem [shape: f32[8,8,8], index: 2, kind: input, shape index: {}]
  %s3 = inlined_call_operand.vmem [shape: f32[8,8], index: 3, kind: input, shape index: {}]
  %s4 = inlined_call_operand.vmem [shape: f32[8,8], index: 4, kind: input, shape index: {}]
  %s5 = inlined_call_operand.vmem [shape: f32[3,32,128], index: 5, kind: input, shape index: {}]
  %s6 = inlined_call_operand.vmem [shape: f32[3,1,128], index: 6, kind: input, shape index: {}]
  %s7 = inlined_call_operand.vmem [shape: f32[4,1,64], index: 7, kind: input, shape index: {}]
  %s8 = inlined_call_operand.vmem [shape: f32[32,64], index: 8, kind: input, shape index: {}]
  %s9 = inlined_call_operand.vmem [shape: f32[64,32], index: 9, kind: input, shape index: {}]
  %s10 = inlined_call_operand.vmem [shape: f32[1,96], index: 10, kind: input, shape index: {}]
  %s11 = inlined_call_operand.hbm [shape: f32[2,8,32], index: 11, kind: output, shape index: {0}]
  %s12 = inlined_call_operand.hbm [shape: f32[2,4,8,8], index: 12, kind: output, shape index: {1}]
  %s13 = inlined_call_operand.hbm [shape: f32[2,4,8,8], index: 13, kind: output, shape index: {2}]
  %14 = xla_tuple %s11, %s12, %s13
  %s15 = sld [smem:[#allocation0]]
  $region70: #{decoder_layer.1} parent=0
    _
  %s17 = ssub.s32 1, %s15
  %s18 = scalar_select 0, %s17, %s15
  $region1: #{decoder_layer.1} parent=0
    #allocation2 [shape = 'u8[8192]{0}', space=vmem, size = 0x2000, scoped, tag = 'output window, operand 0, single buffered']
    #allocation3 [shape = 's32[1]{0}', space=sflag, size = 0x4, scoped, tag = 'scoped memory for decoder_layer.1']
    #allocation4 [shape = 'u8[32768]{0}', space=vmem, size = 0x8000, scoped, tag = 'output window, operand 1, single buffered']
    #allocation5 [shape = 's32[1]{0}', space=sflag, size = 0x4, scoped, tag = 'scoped memory for decoder_layer.1']
    #allocation6 [shape = 'u8[32768]{0}', space=vmem, size = 0x8000, scoped, tag = 'output window, operand 2, single buffered']
    %19 = vsyncpa [#allocation3], 0
    %20 = vsyncpa [#allocation5], 0
    // Predicated region
    $region2: #{decoder_layer.1} parent=1 // pred_check
      _
    $region3: #{decoder_layer.1} parent=1 // pred_check_branch
      %22 = sbr.rel (0) target = $region5
    $region4: #{decoder_layer.1} parent=1 // pred_region
      _
    $region5: #{decoder_layer.1} parent=1 // pred_fallthru
      _
    // Predicated region
    $region6: #{decoder_layer.1} parent=1 // pred_check
      _
    $region7: #{decoder_layer.1} parent=1 // pred_check_branch
      %24 = sbr.rel (0) target = $region9
    $region8: #{decoder_layer.1} parent=1 // pred_region
      _
    $region9: #{decoder_layer.1} parent=1 // pred_fallthru
      _
    // Predicated region
    $region10: #{decoder_layer.1} parent=1 // pred_check
      _
    $region11: #{decoder_layer.1} parent=1 // pred_check_branch
      %26 = sbr.rel (0) target = $region13
    $region12: #{decoder_layer.1} parent=1 // pred_region
      _
    $region13: #{decoder_layer.1} parent=1 // pred_fallthru
      _
    // Predicated region
    $region14: #{decoder_layer.1} parent=1 // pred_check
      _
    $region15: #{decoder_layer.1} parent=1 // pred_check_branch
      %28 = sbr.rel (0) target = $region17
    $region16: #{decoder_layer.1} parent=1 // pred_region
      _
    $region17: #{decoder_layer.1} parent=1 // pred_fallthru
      _
    // Predicated region
    $region18: #{decoder_layer.1} parent=1 // pred_check
      _
    $region19: #{decoder_layer.1} parent=1 // pred_check_branch
      %30 = sbr.rel (0) target = $region21
    $region20: #{decoder_layer.1} parent=1 // pred_region
      _
    $region21: #{decoder_layer.1} parent=1 // pred_fallthru
      _
    // Predicated region
    $region22: #{decoder_layer.1} parent=1 // pred_check
      _
    $region23: #{decoder_layer.1} parent=1 // pred_check_branch
      %32 = sbr.rel (0) target = $region25
    $region24: #{decoder_layer.1} parent=1 // pred_region
      _
    $region25: #{decoder_layer.1} parent=1 // pred_fallthru
      _
    // Predicated region
    $region26: #{decoder_layer.1} parent=1 // pred_check
      _
    $region27: #{decoder_layer.1} parent=1 // pred_check_branch
      %34 = sbr.rel (0) target = $region29
    $region28: #{decoder_layer.1} parent=1 // pred_region
      _
    $region29: #{decoder_layer.1} parent=1 // pred_fallthru
      _
    // Predicated region
    $region30: #{decoder_layer.1} parent=1 // pred_check
      _
    $region31: #{decoder_layer.1} parent=1 // pred_check_branch
      %36 = sbr.rel (0) target = $region33
    $region32: #{decoder_layer.1} parent=1 // pred_region
      _
    $region33: #{decoder_layer.1} parent=1 // pred_fallthru
      _
    // Predicated region
    $region34: #{decoder_layer.1} parent=1 // pred_check
      _
    $region35: #{decoder_layer.1} parent=1 // pred_check_branch
      %38 = sbr.rel (0) target = $region37
    $region36: #{decoder_layer.1} parent=1 // pred_region
      _
    $region37: #{decoder_layer.1} parent=1 // pred_fallthru
      _
    // Predicated region
    $region38: #{decoder_layer.1} parent=1 // pred_check
      _
    $region39: #{decoder_layer.1} parent=1 // pred_check_branch
      %40 = sbr.rel (0) target = $region41
    $region40: #{decoder_layer.1} parent=1 // pred_region
      _
    $region41: #{decoder_layer.1} parent=1 // pred_fallthru
      _
    // Predicated region
    $region42: #{decoder_layer.1} parent=1 // pred_check
      _
    $region43: #{decoder_layer.1} parent=1 // pred_check_branch
      %42 = sbr.rel (0) target = $region45
    $region44: #{decoder_layer.1} parent=1 // pred_region
      _
    $region45: #{decoder_layer.1} parent=1 // pred_fallthru
      _
    %v43 = vld [vmem:[%s0] sm:$0xff]
    %v44 = vld [vmem:[%s0 + $0x8] sm:$0xff]
    %v45 = vld [vmem:[%s1] sm:$0xff]
    %v46 = vld [vmem:[%s1 + $0x8] sm:$0xff]
    %v47 = vld [vmem:[%s3] sm:$0xff]
    %v48 = vld [vmem:[%s4] sm:$0xff]
    %v49 = vld [vmem:[%s10] sm:$0x1]
    %v50 = vld [vmem:[%s5] sm:$0xff]
    %v51 = vld [vmem:[%s5 + $0x8] sm:$0xff]
    %v52 = vld [vmem:[%s5 + $0x10] sm:$0xff]
    %v53 = vld [vmem:[%s5 + $0x18] sm:$0xff]
    %v54 = vld [vmem:[%s6] sm:$0x1]
    %v56 = vlaneseq
    %v57 = vshrl.u32 %v56, 7
    %v58 = vsub.s32 0, %v57
    %v59 = vrot.slane %v54, %v58
    %vm61 = vcmask 261120
    %v63 = vsel %vm61, %v43, 0
    %v66 = vsel %vm61, %v44, 0
    %68 = vmatprep.subr.mxu0 0.0
    %69 = vmatpush1.msra.mxu0 0.0
    %70 = vmatprep.subr.mxu0 0.0
    %71 = vmatpush1.msra.mxu0 0.0
    %72 = vmatprep.subr.mxu0 0.0
    %73 = vmatpush1.msra.mxu0 0.0
    %74 = vmatprep.subr.mxu0 0.0
    %75 = vmatpush1.msra.mxu0 0.0
    %76 = vmatprep.subr.mxu0 0.0
    %77 = vmatpush1.msra.mxu0 0.0
    %78 = vmatprep.subr.mxu0 0.0
    %79 = vmatpush1.msra.mxu0 0.0
    %80 = vmatprep.subr.mxu0 0.0
    %81 = vmatpush1.msra.mxu0 0.0
    %82 = vmatprep.subr.mxu0 0.0
    %83 = vmatpush1.msra.mxu0 0.0
    %84 = vmatprep.subr.mxu0 0.0
    %85 = vmatpush1.msra.mxu0 0.0
    %86 = vmatprep.subr.mxu0 0.0
    %87 = vmatpush1.msra.mxu0 0.0
    %88 = vmatprep.subr.mxu0 0.0
    %89 = vmatpush1.msra.mxu0 0.0
    %90 = vmatprep.subr.mxu0 0.0
    %91 = vmatpush1.msra.mxu0 0.0
    %92 = vmatprep.subr.mxu0 0.0
    %93 = vmatpush1.msra.mxu0 %v53
    %94 = vmatprep.subr.mxu0 0.0
    %95 = vmatpush1.msra.mxu0 %v52
    %96 = vmatprep.subr.mxu0 0.0
    %97 = vmatpush1.msra.mxu0 %v51
    %98 = vmatprep.subr.mxu0 0.0
    %99 = vmatpush1.msra.mxu0 %v50
    %100 = vmatprep.subr.mxu0 0.0
    %101 = vmatpush2.msra.mxu0 0.0
    %102 = vmatprep.subr.mxu0 0.0
    %103 = vmatpush2.msra.mxu0 0.0
    %104 = vmatprep.subr.mxu0 0.0
    %105 = vmatpush2.msra.mxu0 0.0
    %106 = vmatprep.subr.mxu0 0.0
    %107 = vmatpush2.msra.mxu0 0.0
    %108 = vmatprep.subr.mxu0 0.0
    %109 = vmatpush2.msra.mxu0 0.0
    %110 = vmatprep.subr.mxu0 0.0
    %111 = vmatpush2.msra.mxu0 0.0
    %112 = vmatprep.subr.mxu0 0.0
    %113 = vmatpush2.msra.mxu0 0.0
    %114 = vmatprep.subr.mxu0 0.0
    %115 = vmatpush2.msra.mxu0 0.0
    %116 = vmatprep.subr.mxu0 0.0
    %117 = vmatpush2.msra.mxu0 0.0
    %118 = vmatprep.subr.mxu0 0.0
    %119 = vmatpush2.msra.mxu0 0.0
    %120 = vmatprep.subr.mxu0 0.0
    %121 = vmatpush2.msra.mxu0 0.0
    %122 = vmatprep.subr.mxu0 0.0
    %123 = vmatpush2.msra.mxu0 0.0
    %124 = vmatprep.subr.mxu0 0.0
    %125 = vmatpush2.msra.mxu0 0.0
    %126 = vmatprep.subr.mxu0 0.0
    %127 = vmatpush2.msra.mxu0 0.0
    %128 = vmatprep.subr.mxu0 0.0
    %129 = vmatpush2.msra.mxu0 0.0
    %130 = vmatprep.subr.mxu0 0.0
    %131 = vmatpush2.msra.mxu0 0.0
    %132 = vmatprep.mubr.f32.mxu0 0.0
    %133 = vmatmul.mubr.f32.gmra.mxu0 %v63
    %v134 = vpop.f32.mrf.mxu0
    %v135 = vadd.f32 %v59, %v134
    %v136 = vpop.f32.mrf.mxu0
    %137 = vmatprep.mubr.f32.mxu0 0.0
    %138 = vmatmul.mubr.f32.gmra.mxu0 %v66
    %v139 = vpop.f32.mrf.mxu0
    %v140 = vadd.f32 %v59, %v139
    %v141 = vpop.f32.mrf.mxu0
    %142 = vdwg.mxu0
    %v143 = vmul.f32 %v135, 0.35355338
    %v144 = vmul.f32 %v140, 0.35355338
    %147 = vrot.lane.b32.xlu0 %v143, 120
    %v148 = vpop.permute.xlu0 %147
    %149 = vrot.lane.b32.xlu0 %v144, 120
    %v150 = vpop.permute.xlu0 %149
    %151 = vrot.lane.b32.xlu0 %v143, 112
    %v152 = vpop.permute.xlu0 %151
    %153 = vrot.lane.b32.xlu0 %v144, 112
    %v154 = vpop.permute.xlu0 %153
    %155 = vrot.lane.b32.xlu0 %v143, 104
    %v156 = vpop.permute.xlu0 %155
    %157 = vrot.lane.b32.xlu0 %v144, 104
    %v158 = vpop.permute.xlu0 %157
    %161 = vrot.lane.b32.xlu0 %v135, 120
    %v162 = vpop.permute.xlu0 %161
    %163 = vrot.lane.b32.xlu0 %v140, 120
    %v164 = vpop.permute.xlu0 %163
    %165 = vrot.lane.b32.xlu0 %v135, 112
    %v166 = vpop.permute.xlu0 %165
    %167 = vrot.lane.b32.xlu0 %v140, 112
    %v168 = vpop.permute.xlu0 %167
    %169 = vrot.lane.b32.xlu0 %v135, 104
    %v170 = vpop.permute.xlu0 %169
    %171 = vrot.lane.b32.xlu0 %v140, 104
    %v172 = vpop.permute.xlu0 %171
    %173 = vrot.lane.b32.xlu0 %v135, 96
    %v174 = vpop.permute.xlu0 %173
    %vm175 = vcmask 64512
    %v176 = vsel %vm175, %v143, 0
    %v178 = vsel %vm175, %v174, 0
    %180 = vmatprep.subr.mxu0 0.0
    %181 = vmatpush1.xpose.msra.mxu0 0.0
    %182 = vmatprep.subr.mxu0 0.0
    %183 = vmatpush1.xpose.msra.mxu0 0.0
    %184 = vmatprep.subr.mxu0 0.0
    %185 = vmatpush1.xpose.msra.mxu0 0.0
    %186 = vmatprep.subr.mxu0 0.0
    %187 = vmatpush1.xpose.msra.mxu0 0.0
    %188 = vmatprep.subr.mxu0 0.0
    %189 = vmatpush1.xpose.msra.mxu0 0.0
    %190 = vmatprep.subr.mxu0 0.0
    %191 = vmatpush1.xpose.msra.mxu0 0.0
    %192 = vmatprep.subr.mxu0 0.0
    %193 = vmatpush1.xpose.msra.mxu0 0.0
    %194 = vmatprep.subr.mxu0 0.0
    %195 = vmatpush1.xpose.msra.mxu0 0.0
    %196 = vmatprep.subr.mxu0 0.0
    %197 = vmatpush1.xpose.msra.mxu0 0.0
    %198 = vmatprep.subr.mxu0 0.0
    %199 = vmatpush1.xpose.msra.mxu0 0.0
    %200 = vmatprep.subr.mxu0 0.0
    %201 = vmatpush1.xpose.msra.mxu0 0.0
    %202 = vmatprep.subr.mxu0 0.0
    %203 = vmatpush1.xpose.msra.mxu0 0.0
    %204 = vmatprep.subr.mxu0 0.0
    %205 = vmatpush1.xpose.msra.mxu0 0.0
    %206 = vmatprep.subr.mxu0 0.0
    %207 = vmatpush1.xpose.msra.mxu0 0.0
    %208 = vmatprep.subr.mxu0 0.0
    %209 = vmatpush1.xpose.msra.mxu0 0.0
    %210 = vmatprep.subr.mxu0 0.0
    %211 = vmatpush1.xpose.msra.mxu0 %v178
    %212 = vmatprep.subr.mxu0 0.0
    %213 = vmatpush2.xpose.msra.mxu0 0.0
    %214 = vmatprep.subr.mxu0 0.0
    %215 = vmatpush2.xpose.msra.mxu0 0.0
    %216 = vmatprep.subr.mxu0 0.0
    %217 = vmatpush2.xpose.msra.mxu0 0.0
    %218 = vmatprep.subr.mxu0 0.0
    %219 = vmatpush2.xpose.msra.mxu0 0.0
    %220 = vmatprep.subr.mxu0 0.0
    %221 = vmatpush2.xpose.msra.mxu0 0.0
    %222 = vmatprep.subr.mxu0 0.0
    %223 = vmatpush2.xpose.msra.mxu0 0.0
    %224 = vmatprep.subr.mxu0 0.0
    %225 = vmatpush2.xpose.msra.mxu0 0.0
    %226 = vmatprep.subr.mxu0 0.0
    %227 = vmatpush2.xpose.msra.mxu0 0.0
    %228 = vmatprep.subr.mxu0 0.0
    %229 = vmatpush2.xpose.msra.mxu0 0.0
    %230 = vmatprep.subr.mxu0 0.0
    %231 = vmatpush2.xpose.msra.mxu0 0.0
    %232 = vmatprep.subr.mxu0 0.0
    %233 = vmatpush2.xpose.msra.mxu0 0.0
    %234 = vmatprep.subr.mxu0 0.0
    %235 = vmatpush2.xpose.msra.mxu0 0.0
    %236 = vmatprep.subr.mxu0 0.0
    %237 = vmatpush2.xpose.msra.mxu0 0.0
    %238 = vmatprep.subr.mxu0 0.0
    %239 = vmatpush2.xpose.msra.mxu0 0.0
    %240 = vmatprep.subr.mxu0 0.0
    %241 = vmatpush2.xpose.msra.mxu0 0.0
    %242 = vmatprep.subr.mxu0 0.0
    %243 = vmatpush2.xpose.msra.mxu0 0.0
    %244 = vmatprep.mubr.f32.mxu0 0.0
    %245 = vmatmul.mubr.f32.gmra.mxu0 %v176
    %v246 = vpop.f32.mrf.mxu0
    %v247 = vadd.f32 %v47, %v246
    %v248 = vpop.f32.mrf.mxu0
    %249 = vdwg.mxu0
    %250 = vrot.lane.b32.xlu0 %v140, 96
    %v251 = vpop.permute.xlu0 %250
    %v252 = vsel %vm175, %v144, 0
    %v254 = vsel %vm175, %v251, 0
    %256 = vmatprep.subr.mxu0 0.0
    %257 = vmatpush1.xpose.msra.mxu0 0.0
    %258 = vmatprep.subr.mxu0 0.0
    %259 = vmatpush1.xpose.msra.mxu0 0.0
    %260 = vmatprep.subr.mxu0 0.0
    %261 = vmatpush1.xpose.msra.mxu0 0.0
    %262 = vmatprep.subr.mxu0 0.0
    %263 = vmatpush1.xpose.msra.mxu0 0.0
    %264 = vmatprep.subr.mxu0 0.0
    %265 = vmatpush1.xpose.msra.mxu0 0.0
    %266 = vmatprep.subr.mxu0 0.0
    %267 = vmatpush1.xpose.msra.mxu0 0.0
    %268 = vmatprep.subr.mxu0 0.0
    %269 = vmatpush1.xpose.msra.mxu0 0.0
    %270 = vmatprep.subr.mxu0 0.0
    %271 = vmatpush1.xpose.msra.mxu0 0.0
    %272 = vmatprep.subr.mxu0 0.0
    %273 = vmatpush1.xpose.msra.mxu0 0.0
    %274 = vmatprep.subr.mxu0 0.0
    %275 = vmatpush1.xpose.msra.mxu0 0.0
    %276 = vmatprep.subr.mxu0 0.0
    %277 = vmatpush1.xpose.msra.mxu0 0.0
    %278 = vmatprep.subr.mxu0 0.0
    %279 = vmatpush1.xpose.msra.mxu0 0.0
    %280 = vmatprep.subr.mxu0 0.0
    %281 = vmatpush1.xpose.msra.mxu0 0.0
    %282 = vmatprep.subr.mxu0 0.0
    %283 = vmatpush1.xpose.msra.mxu0 0.0
    %284 = vmatprep.subr.mxu0 0.0
    %285 = vmatpush1.xpose.msra.mxu0 0.0
    %286 = vmatprep.subr.mxu0 0.0
    %287 = vmatpush1.xpose.msra.mxu0 %v254
    %288 = vmatprep.subr.mxu0 0.0
    %289 = vmatpush2.xpose.msra.mxu0 0.0
    %290 = vmatprep.subr.mxu0 0.0
    %291 = vmatpush2.xpose.msra.mxu0 0.0
    %292 = vmatprep.subr.mxu0 0.0
    %293 = vmatpush2.xpose.msra.mxu0 0.0
    %294 = vmatprep.subr.mxu0 0.0
    %295 = vmatpush2.xpose.msra.mxu0 0.0
    %296 = vmatprep.subr.mxu0 0.0
    %297 = vmatpush2.xpose.msra.mxu0 0.0
    %298 = vmatprep.subr.mxu0 0.0
    %299 = vmatpush2.xpose.msra.mxu0 0.0
    %300 = vmatprep.subr.mxu0 0.0
    %301 = vmatpush2.xpose.msra.mxu0 0.0
    %302 = vmatprep.subr.mxu0 0.0
    %303 = vmatpush2.xpose.msra.mxu0 0.0
    %304 = vmatprep.subr.mxu0 0.0
    %305 = vmatpush2.xpose.msra.mxu0 0.0
    %306 = vmatprep.subr.mxu0 0.0
    %307 = vmatpush2.xpose.msra.mxu0 0.0
    %308 = vmatprep.subr.mxu0 0.0
    %309 = vmatpush2.xpose.msra.mxu0 0.0
    %310 = vmatprep.subr.mxu0 0.0
    %311 = vmatpush2.xpose.msra.mxu0 0.0
    %312 = vmatprep.subr.mxu0 0.0
    %313 = vmatpush2.xpose.msra.mxu0 0.0
    %314 = vmatprep.subr.mxu0 0.0
    %315 = vmatpush2.xpose.msra.mxu0 0.0
    %316 = vmatprep.subr.mxu0 0.0
    %317 = vmatpush2.xpose.msra.mxu0 0.0
    %318 = vmatprep.subr.mxu0 0.0
    %319 = vmatpush2.xpose.msra.mxu0 0.0
    %320 = vmatprep.mubr.f32.mxu0 0.0
    %321 = vmatmul.mubr.f32.gmra.mxu0 %v252
    %v322 = vpop.f32.mrf.mxu0
    %v323 = vadd.f32 %v47, %v322
    %v324 = vpop.f32.mrf.mxu0
    %325 = vdwg.mxu0
    %326 = vrot.lane.b32.xlu0 %v162, 96
    %v327 = vpop.permute.xlu0 %326
    %v328 = vsel %vm175, %v148, 0
    %v330 = vsel %vm175, %v327, 0
    %332 = vmatprep.subr.mxu0 0.0
    %333 = vmatpush1.xpose.msra.mxu0 0.0
    %334 = vmatprep.subr.mxu0 0.0
    %335 = vmatpush1.xpose.msra.mxu0 0.0
    %336 = vmatprep.subr.mxu0 0.0
    %337 = vmatpush1.xpose.msra.mxu0 0.0
    %338 = vmatprep.subr.mxu0 0.0
    %339 = vmatpush1.xpose.msra.mxu0 0.0
    %340 = vmatprep.subr.mxu0 0.0
    %341 = vmatpush1.xpose.msra.mxu0 0.0
    %342 = vmatprep.subr.mxu0 0.0
    %343 = vmatpush1.xpose.msra.mxu0 0.0
    %344 = vmatprep.subr.mxu0 0.0
    %345 = vmatpush1.xpose.msra.mxu0 0.0
    %346 = vmatprep.subr.mxu0 0.0
    %347 = vmatpush1.xpose.msra.mxu0 0.0
    %348 = vmatprep.subr.mxu0 0.0
    %349 = vmatpush1.xpose.msra.mxu0 0.0
    %350 = vmatprep.subr.mxu0 0.0
    %351 = vmatpush1.xpose.msra.mxu0 0.0
    %352 = vmatprep.subr.mxu0 0.0
    %353 = vmatpush1.xpose.msra.mxu0 0.0
    %354 = vmatprep.subr.mxu0 0.0
    %355 = vmatpush1.xpose.msra.mxu0 0.0
    %356 = vmatprep.subr.mxu0 0.0
    %357 = vmatpush1.xpose.msra.mxu0 0.0
    %358 = vmatprep.subr.mxu0 0.0
    %359 = vmatpush1.xpose.msra.mxu0 0.0
    %360 = vmatprep.subr.mxu0 0.0
    %361 = vmatpush1.xpose.msra.mxu0 0.0
    %362 = vmatprep.subr.mxu0 0.0
    %363 = vmatpush1.xpose.msra.mxu0 %v330
    %364 = vmatprep.subr.mxu0 0.0
    %365 = vmatpush2.xpose.msra.mxu0 0.0
    %366 = vmatprep.subr.mxu0 0.0
    %367 = vmatpush2.xpose.msra.mxu0 0.0
    %368 = vmatprep.subr.mxu0 0.0
    %369 = vmatpush2.xpose.msra.mxu0 0.0
    %370 = vmatprep.subr.mxu0 0.0
    %371 = vmatpush2.xpose.msra.mxu0 0.0
    %372 = vmatprep.subr.mxu0 0.0
    %373 = vmatpush2.xpose.msra.mxu0 0.0
    %374 = vmatprep.subr.mxu0 0.0
    %375 = vmatpush2.xpose.msra.mxu0 0.0
    %376 = vmatprep.subr.mxu0 0.0
    %377 = vmatpush2.xpose.msra.mxu0 0.0
    %378 = vmatprep.subr.mxu0 0.0
    %379 = vmatpush2.xpose.msra.mxu0 0.0
    %380 = vmatprep.subr.mxu0 0.0
    %381 = vmatpush2.xpose.msra.mxu0 0.0
    %382 = vmatprep.subr.mxu0 0.0
    %383 = vmatpush2.xpose.msra.mxu0 0.0
    %384 = vmatprep.subr.mxu0 0.0
    %385 = vmatpush2.xpose.msra.mxu0 0.0
    %386 = vmatprep.subr.mxu0 0.0
    %387 = vmatpush2.xpose.msra.mxu0 0.0
    %388 = vmatprep.subr.mxu0 0.0
    %389 = vmatpush2.xpose.msra.mxu0 0.0
    %390 = vmatprep.subr.mxu0 0.0
    %391 = vmatpush2.xpose.msra.mxu0 0.0
    %392 = vmatprep.subr.mxu0 0.0
    %393 = vmatpush2.xpose.msra.mxu0 0.0
    %394 = vmatprep.subr.mxu0 0.0
    %395 = vmatpush2.xpose.msra.mxu0 0.0
    %396 = vmatprep.mubr.f32.mxu0 0.0
    %397 = vmatmul.mubr.f32.gmra.mxu0 %v328
    %v398 = vpop.f32.mrf.mxu0
    %v399 = vadd.f32 %v47, %v398
    %v400 = vpop.f32.mrf.mxu0
    %401 = vdwg.mxu0
    %402 = vrot.lane.b32.xlu0 %v164, 96
    %v403 = vpop.permute.xlu0 %402
    %v404 = vsel %vm175, %v150, 0
    %v406 = vsel %vm175, %v403, 0
    %408 = vmatprep.subr.mxu0 0.0
    %409 = vmatpush1.xpose.msra.mxu0 0.0
    %410 = vmatprep.subr.mxu0 0.0
    %411 = vmatpush1.xpose.msra.mxu0 0.0
    %412 = vmatprep.subr.mxu0 0.0
    %413 = vmatpush1.xpose.msra.mxu0 0.0
    %414 = vmatprep.subr.mxu0 0.0
    %415 = vmatpush1.xpose.msra.mxu0 0.0
    %416 = vmatprep.subr.mxu0 0.0
    %417 = vmatpush1.xpose.msra.mxu0 0.0
    %418 = vmatprep.subr.mxu0 0.0
    %419 = vmatpush1.xpose.msra.mxu0 0.0
    %420 = vmatprep.subr.mxu0 0.0
    %421 = vmatpush1.xpose.msra.mxu0 0.0
    %422 = vmatprep.subr.mxu0 0.0
    %423 = vmatpush1.xpose.msra.mxu0 0.0
    %424 = vmatprep.subr.mxu0 0.0
    %425 = vmatpush1.xpose.msra.mxu0 0.0
    %426 = vmatprep.subr.mxu0 0.0
    %427 = vmatpush1.xpose.msra.mxu0 0.0
    %428 = vmatprep.subr.mxu0 0.0
    %429 = vmatpush1.xpose.msra.mxu0 0.0
    %430 = vmatprep.subr.mxu0 0.0
    %431 = vmatpush1.xpose.msra.mxu0 0.0
    %432 = vmatprep.subr.mxu0 0.0
    %433 = vmatpush1.xpose.msra.mxu0 0.0
    %434 = vmatprep.subr.mxu0 0.0
    %435 = vmatpush1.xpose.msra.mxu0 0.0
    %436 = vmatprep.subr.mxu0 0.0
    %437 = vmatpush1.xpose.msra.mxu0 0.0
    %438 = vmatprep.subr.mxu0 0.0
    %439 = vmatpush1.xpose.msra.mxu0 %v406
    %440 = vmatprep.subr.mxu0 0.0
    %441 = vmatpush2.xpose.msra.mxu0 0.0
    %442 = vmatprep.subr.mxu0 0.0
    %443 = vmatpush2.xpose.msra.mxu0 0.0
    %444 = vmatprep.subr.mxu0 0.0
    %445 = vmatpush2.xpose.msra.mxu0 0.0
    %446 = vmatprep.subr.mxu0 0.0
    %447 = vmatpush2.xpose.msra.mxu0 0.0
    %448 = vmatprep.subr.mxu0 0.0
    %449 = vmatpush2.xpose.msra.mxu0 0.0
    %450 = vmatprep.subr.mxu0 0.0
    %451 = vmatpush2.xpose.msra.mxu0 0.0
    %452 = vmatprep.subr.mxu0 0.0
    %453 = vmatpush2.xpose.msra.mxu0 0.0
    %454 = vmatprep.subr.mxu0 0.0
    %455 = vmatpush2.xpose.msra.mxu0 0.0
    %456 = vmatprep.subr.mxu0 0.0
    %457 = vmatpush2.xpose.msra.mxu0 0.0
    %458 = vmatprep.subr.mxu0 0.0
    %459 = vmatpush2.xpose.msra.mxu0 0.0
    %460 = vmatprep.subr.mxu0 0.0
    %461 = vmatpush2.xpose.msra.mxu0 0.0
    %462 = vmatprep.subr.mxu0 0.0
    %463 = vmatpush2.xpose.msra.mxu0 0.0
    %464 = vmatprep.subr.mxu0 0.0
    %465 = vmatpush2.xpose.msra.mxu0 0.0
    %466 = vmatprep.subr.mxu0 0.0
    %467 = vmatpush2.xpose.msra.mxu0 0.0
    %468 = vmatprep.subr.mxu0 0.0
    %469 = vmatpush2.xpose.msra.mxu0 0.0
    %470 = vmatprep.subr.mxu0 0.0
    %471 = vmatpush2.xpose.msra.mxu0 0.0
    %472 = vmatprep.mubr.f32.mxu0 0.0
    %473 = vmatmul.mubr.f32.gmra.mxu0 %v404
    %v474 = vpop.f32.mrf.mxu0
    %v475 = vadd.f32 %v47, %v474
    %v476 = vpop.f32.mrf.mxu0
    %477 = vdwg.mxu0
    %478 = vrot.lane.b32.xlu0 %v166, 96
    %v479 = vpop.permute.xlu0 %478
    %v480 = vsel %vm175, %v152, 0
    %v482 = vsel %vm175, %v479, 0
    %484 = vmatprep.subr.mxu0 0.0
    %485 = vmatpush1.xpose.msra.mxu0 0.0
    %486 = vmatprep.subr.mxu0 0.0
    %487 = vmatpush1.xpose.msra.mxu0 0.0
    %488 = vmatprep.subr.mxu0 0.0
    %489 = vmatpush1.xpose.msra.mxu0 0.0
    %490 = vmatprep.subr.mxu0 0.0
    %491 = vmatpush1.xpose.msra.mxu0 0.0
    %492 = vmatprep.subr.mxu0 0.0
    %493 = vmatpush1.xpose.msra.mxu0 0.0
    %494 = vmatprep.subr.mxu0 0.0
    %495 = vmatpush1.xpose.msra.mxu0 0.0
    %496 = vmatprep.subr.mxu0 0.0
    %497 = vmatpush1.xpose.msra.mxu0 0.0
    %498 = vmatprep.subr.mxu0 0.0
    %499 = vmatpush1.xpose.msra.mxu0 0.0
    %500 = vmatprep.subr.mxu0 0.0
    %501 = vmatpush1.xpose.msra.mxu0 0.0
    %502 = vmatprep.subr.mxu0 0.0
    %503 = vmatpush1.xpose.msra.mxu0 0.0
    %504 = vmatprep.subr.mxu0 0.0
    %505 = vmatpush1.xpose.msra.mxu0 0.0
    %506 = vmatprep.subr.mxu0 0.0
    %507 = vmatpush1.xpose.msra.mxu0 0.0
    %508 = vmatprep.subr.mxu0 0.0
    %509 = vmatpush1.xpose.msra.mxu0 0.0
    %510 = vmatprep.subr.mxu0 0.0
    %511 = vmatpush1.xpose.msra.mxu0 0.0
    %512 = vmatprep.subr.mxu0 0.0
    %513 = vmatpush1.xpose.msra.mxu0 0.0
    %514 = vmatprep.subr.mxu0 0.0
    %515 = vmatpush1.xpose.msra.mxu0 %v482
    %516 = vmatprep.subr.mxu0 0.0
    %517 = vmatpush2.xpose.msra.mxu0 0.0
    %518 = vmatprep.subr.mxu0 0.0
    %519 = vmatpush2.xpose.msra.mxu0 0.0
    %520 = vmatprep.subr.mxu0 0.0
    %521 = vmatpush2.xpose.msra.mxu0 0.0
    %522 = vmatprep.subr.mxu0 0.0
    %523 = vmatpush2.xpose.msra.mxu0 0.0
    %524 = vmatprep.subr.mxu0 0.0
    %525 = vmatpush2.xpose.msra.mxu0 0.0
    %526 = vmatprep.subr.mxu0 0.0
    %527 = vmatpush2.xpose.msra.mxu0 0.0
    %528 = vmatprep.subr.mxu0 0.0
    %529 = vmatpush2.xpose.msra.mxu0 0.0
    %530 = vmatprep.subr.mxu0 0.0
    %531 = vmatpush2.xpose.msra.mxu0 0.0
    %532 = vmatprep.subr.mxu0 0.0
    %533 = vmatpush2.xpose.msra.mxu0 0.0
    %534 = vmatprep.subr.mxu0 0.0
    %535 = vmatpush2.xpose.msra.mxu0 0.0
    %536 = vmatprep.subr.mxu0 0.0
    %537 = vmatpush2.xpose.msra.mxu0 0.0
    %538 = vmatprep.subr.mxu0 0.0
    %539 = vmatpush2.xpose.msra.mxu0 0.0
    %540 = vmatprep.subr.mxu0 0.0
    %541 = vmatpush2.xpose.msra.mxu0 0.0
    %542 = vmatprep.subr.mxu0 0.0
    %543 = vmatpush2.xpose.msra.mxu0 0.0
    %544 = vmatprep.subr.mxu0 0.0
    %545 = vmatpush2.xpose.msra.mxu0 0.0
    %546 = vmatprep.subr.mxu0 0.0
    %547 = vmatpush2.xpose.msra.mxu0 0.0
    %548 = vmatprep.mubr.f32.mxu0 0.0
    %549 = vmatmul.mubr.f32.gmra.mxu0 %v480
    %v550 = vpop.f32.mrf.mxu0
    %v551 = vadd.f32 %v47, %v550
    %v552 = vpop.f32.mrf.mxu0
    %553 = vdwg.mxu0
    %554 = vrot.lane.b32.xlu0 %v168, 96
    %v555 = vpop.permute.xlu0 %554
    %v556 = vsel %vm175, %v154, 0
    %v558 = vsel %vm175, %v555, 0
    %560 = vmatprep.subr.mxu0 0.0
    %561 = vmatpush1.xpose.msra.mxu0 0.0
    %562 = vmatprep.subr.mxu0 0.0
    %563 = vmatpush1.xpose.msra.mxu0 0.0
    %564 = vmatprep.subr.mxu0 0.0
    %565 = vmatpush1.xpose.msra.mxu0 0.0
    %566 = vmatprep.subr.mxu0 0.0
    %567 = vmatpush1.xpose.msra.mxu0 0.0
    %568 = vmatprep.subr.mxu0 0.0
    %569 = vmatpush1.xpose.msra.mxu0 0.0
    %570 = vmatprep.subr.mxu0 0.0
    %571 = vmatpush1.xpose.msra.mxu0 0.0
    %572 = vmatprep.subr.mxu0 0.0
    %573 = vmatpush1.xpose.msra.mxu0 0.0
    %574 = vmatprep.subr.mxu0 0.0
    %575 = vmatpush1.xpose.msra.mxu0 0.0
    %576 = vmatprep.subr.mxu0 0.0
    %577 = vmatpush1.xpose.msra.mxu0 0.0
    %578 = vmatprep.subr.mxu0 0.0
    %579 = vmatpush1.xpose.msra.mxu0 0.0
    %580 = vmatprep.subr.mxu0 0.0
    %581 = vmatpush1.xpose.msra.mxu0 0.0
    %582 = vmatprep.subr.mxu0 0.0
    %583 = vmatpush1.xpose.msra.mxu0 0.0
    %584 = vmatprep.subr.mxu0 0.0
    %585 = vmatpush1.xpose.msra.mxu0 0.0
    %586 = vmatprep.subr.mxu0 0.0
    %587 = vmatpush1.xpose.msra.mxu0 0.0
    %588 = vmatprep.subr.mxu0 0.0
    %589 = vmatpush1.xpose.msra.mxu0 0.0
    %590 = vmatprep.subr.mxu0 0.0
    %591 = vmatpush1.xpose.msra.mxu0 %v558
    %592 = vmatprep.subr.mxu0 0.0
    %593 = vmatpush2.xpose.msra.mxu0 0.0
    %594 = vmatprep.subr.mxu0 0.0
    %595 = vmatpush2.xpose.msra.mxu0 0.0
    %596 = vmatprep.subr.mxu0 0.0
    %597 = vmatpush2.xpose.msra.mxu0 0.0
    %598 = vmatprep.subr.mxu0 0.0
    %599 = vmatpush2.xpose.msra.mxu0 0.0
    %600 = vmatprep.subr.mxu0 0.0
    %601 = vmatpush2.xpose.msra.mxu0 0.0
    %602 = vmatprep.subr.mxu0 0.0
    %603 = vmatpush2.xpose.msra.mxu0 0.0
    %604 = vmatprep.subr.mxu0 0.0
    %605 = vmatpush2.xpose.msra.mxu0 0.0
    %606 = vmatprep.subr.mxu0 0.0
    %607 = vmatpush2.xpose.msra.mxu0 0.0
    %608 = vmatprep.subr.mxu0 0.0
    %609 = vmatpush2.xpose.msra.mxu0 0.0
    %610 = vmatprep.subr.mxu0 0.0
    %611 = vmatpush2.xpose.msra.mxu0 0.0
    %612 = vmatprep.subr.mxu0 0.0
    %613 = vmatpush2.xpose.msra.mxu0 0.0
    %614 = vmatprep.subr.mxu0 0.0
    %615 = vmatpush2.xpose.msra.mxu0 0.0
    %616 = vmatprep.subr.mxu0 0.0
    %617 = vmatpush2.xpose.msra.mxu0 0.0
    %618 = vmatprep.subr.mxu0 0.0
    %619 = vmatpush2.xpose.msra.mxu0 0.0
    %620 = vmatprep.subr.mxu0 0.0
    %621 = vmatpush2.xpose.msra.mxu0 0.0
    %622 = vmatprep.subr.mxu0 0.0
    %623 = vmatpush2.xpose.msra.mxu0 0.0
    %624 = vmatprep.mubr.f32.mxu0 0.0
    %625 = vmatmul.mubr.f32.gmra.mxu0 %v556
    %v626 = vpop.f32.mrf.mxu0
    %v627 = vadd.f32 %v47, %v626
    %v628 = vpop.f32.mrf.mxu0
    %629 = vdwg.mxu0
    %630 = vrot.lane.b32.xlu0 %v170, 96
    %v631 = vpop.permute.xlu0 %630
    %v632 = vsel %vm175, %v156, 0
    %v634 = vsel %vm175, %v631, 0
    %636 = vmatprep.subr.mxu0 0.0
    %637 = vmatpush1.xpose.msra.mxu0 0.0
    %638 = vmatprep.subr.mxu0 0.0
    %639 = vmatpush1.xpose.msra.mxu0 0.0
    %640 = vmatprep.subr.mxu0 0.0
    %641 = vmatpush1.xpose.msra.mxu0 0.0
    %642 = vmatprep.subr.mxu0 0.0
    %643 = vmatpush1.xpose.msra.mxu0 0.0
    %644 = vmatprep.subr.mxu0 0.0
    %645 = vmatpush1.xpose.msra.mxu0 0.0
    %646 = vmatprep.subr.mxu0 0.0
    %647 = vmatpush1.xpose.msra.mxu0 0.0
    %648 = vmatprep.subr.mxu0 0.0
    %649 = vmatpush1.xpose.msra.mxu0 0.0
    %650 = vmatprep.subr.mxu0 0.0
    %651 = vmatpush1.xpose.msra.mxu0 0.0
    %652 = vmatprep.subr.mxu0 0.0
    %653 = vmatpush1.xpose.msra.mxu0 0.0
    %654 = vmatprep.subr.mxu0 0.0
    %655 = vmatpush1.xpose.msra.mxu0 0.0
    %656 = vmatprep.subr.mxu0 0.0
    %657 = vmatpush1.xpose.msra.mxu0 0.0
    %658 = vmatprep.subr.mxu0 0.0
    %659 = vmatpush1.xpose.msra.mxu0 0.0
    %660 = vmatprep.subr.mxu0 0.0
    %661 = vmatpush1.xpose.msra.mxu0 0.0
    %662 = vmatprep.subr.mxu0 0.0
    %663 = vmatpush1.xpose.msra.mxu0 0.0
    %664 = vmatprep.subr.mxu0 0.0
    %665 = vmatpush1.xpose.msra.mxu0 0.0
    %666 = vmatprep.subr.mxu0 0.0
    %667 = vmatpush1.xpose.msra.mxu0 %v634
    %668 = vmatprep.subr.mxu0 0.0
    %669 = vmatpush2.xpose.msra.mxu0 0.0
    %670 = vmatprep.subr.mxu0 0.0
    %671 = vmatpush2.xpose.msra.mxu0 0.0
    %672 = vmatprep.subr.mxu0 0.0
    %673 = vmatpush2.xpose.msra.mxu0 0.0
    %674 = vmatprep.subr.mxu0 0.0
    %675 = vmatpush2.xpose.msra.mxu0 0.0
    %676 = vmatprep.subr.mxu0 0.0
    %677 = vmatpush2.xpose.msra.mxu0 0.0
    %678 = vmatprep.subr.mxu0 0.0
    %679 = vmatpush2.xpose.msra.mxu0 0.0
    %680 = vmatprep.subr.mxu0 0.0
    %681 = vmatpush2.xpose.msra.mxu0 0.0
    %682 = vmatprep.subr.mxu0 0.0
    %683 = vmatpush2.xpose.msra.mxu0 0.0
    %684 = vmatprep.subr.mxu0 0.0
    %685 = vmatpush2.xpose.msra.mxu0 0.0
    %686 = vmatprep.subr.mxu0 0.0
    %687 = vmatpush2.xpose.msra.mxu0 0.0
    %688 = vmatprep.subr.mxu0 0.0
    %689 = vmatpush2.xpose.msra.mxu0 0.0
    %690 = vmatprep.subr.mxu0 0.0
    %691 = vmatpush2.xpose.msra.mxu0 0.0
    %692 = vmatprep.subr.mxu0 0.0
    %693 = vmatpush2.xpose.msra.mxu0 0.0
    %694 = vmatprep.subr.mxu0 0.0
    %695 = vmatpush2.xpose.msra.mxu0 0.0
    %696 = vmatprep.subr.mxu0 0.0
    %697 = vmatpush2.xpose.msra.mxu0 0.0
    %698 = vmatprep.subr.mxu0 0.0
    %699 = vmatpush2.xpose.msra.mxu0 0.0
    %700 = vmatprep.mubr.f32.mxu0 0.0
    %701 = vmatmul.mubr.f32.gmra.mxu0 %v632
    %v702 = vpop.f32.mrf.mxu0
    %v703 = vadd.f32 %v47, %v702
    %v704 = vpop.f32.mrf.mxu0
    %705 = vdwg.mxu0
    %706 = vrot.lane.b32.xlu0 %v172, 96
    %v707 = vpop.permute.xlu0 %706
    %v708 = vsel %vm175, %v158, 0
    %v710 = vsel %vm175, %v707, 0
    %712 = vmatprep.subr.mxu0 0.0
    %713 = vmatpush1.xpose.msra.mxu0 0.0
    %714 = vmatprep.subr.mxu0 0.0
    %715 = vmatpush1.xpose.msra.mxu0 0.0
    %716 = vmatprep.subr.mxu0 0.0
    %717 = vmatpush1.xpose.msra.mxu0 0.0
    %718 = vmatprep.subr.mxu0 0.0
    %719 = vmatpush1.xpose.msra.mxu0 0.0
    %720 = vmatprep.subr.mxu0 0.0
    %721 = vmatpush1.xpose.msra.mxu0 0.0
    %722 = vmatprep.subr.mxu0 0.0
    %723 = vmatpush1.xpose.msra.mxu0 0.0
    %724 = vmatprep.subr.mxu0 0.0
    %725 = vmatpush1.xpose.msra.mxu0 0.0
    %726 = vmatprep.subr.mxu0 0.0
    %727 = vmatpush1.xpose.msra.mxu0 0.0
    %728 = vmatprep.subr.mxu0 0.0
    %729 = vmatpush1.xpose.msra.mxu0 0.0
    %730 = vmatprep.subr.mxu0 0.0
    %731 = vmatpush1.xpose.msra.mxu0 0.0
    %732 = vmatprep.subr.mxu0 0.0
    %733 = vmatpush1.xpose.msra.mxu0 0.0
    %734 = vmatprep.subr.mxu0 0.0
    %735 = vmatpush1.xpose.msra.mxu0 0.0
    %736 = vmatprep.subr.mxu0 0.0
    %737 = vmatpush1.xpose.msra.mxu0 0.0
    %738 = vmatprep.subr.mxu0 0.0
    %739 = vmatpush1.xpose.msra.mxu0 0.0
    %740 = vmatprep.subr.mxu0 0.0
    %741 = vmatpush1.xpose.msra.mxu0 0.0
    %742 = vmatprep.subr.mxu0 0.0
    %743 = vmatpush1.xpose.msra.mxu0 %v710
    %744 = vmatprep.subr.mxu0 0.0
    %745 = vmatpush2.xpose.msra.mxu0 0.0
    %746 = vmatprep.subr.mxu0 0.0
    %747 = vmatpush2.xpose.msra.mxu0 0.0
    %748 = vmatprep.subr.mxu0 0.0
    %749 = vmatpush2.xpose.msra.mxu0 0.0
    %750 = vmatprep.subr.mxu0 0.0
    %751 = vmatpush2.xpose.msra.mxu0 0.0
    %752 = vmatprep.subr.mxu0 0.0
    %753 = vmatpush2.xpose.msra.mxu0 0.0
    %754 = vmatprep.subr.mxu0 0.0
    %755 = vmatpush2.xpose.msra.mxu0 0.0
    %756 = vmatprep.subr.mxu0 0.0
    %757 = vmatpush2.xpose.msra.mxu0 0.0
    %758 = vmatprep.subr.mxu0 0.0
    %759 = vmatpush2.xpose.msra.mxu0 0.0
    %760 = vmatprep.subr.mxu0 0.0
    %761 = vmatpush2.xpose.msra.mxu0 0.0
    %762 = vmatprep.subr.mxu0 0.0
    %763 = vmatpush2.xpose.msra.mxu0 0.0
    %764 = vmatprep.subr.mxu0 0.0
    %765 = vmatpush2.xpose.msra.mxu0 0.0
    %766 = vmatprep.subr.mxu0 0.0
    %767 = vmatpush2.xpose.msra.mxu0 0.0
    %768 = vmatprep.subr.mxu0 0.0
    %769 = vmatpush2.xpose.msra.mxu0 0.0
    %770 = vmatprep.subr.mxu0 0.0
    %771 = vmatpush2.xpose.msra.mxu0 0.0
    %772 = vmatprep.subr.mxu0 0.0
    %773 = vmatpush2.xpose.msra.mxu0 0.0
    %774 = vmatprep.subr.mxu0 0.0
    %775 = vmatpush2.xpose.msra.mxu0 0.0
    %776 = vmatprep.mubr.f32.mxu0 0.0
    %777 = vmatmul.mubr.f32.gmra.mxu0 %v708
    %v778 = vpop.f32.mrf.mxu0
    %v779 = vadd.f32 %v47, %v778
    %v780 = vpop.f32.mrf.mxu0
    %781 = vdwg.mxu0
    %v782 = vsel %vm175, %v247, -inf
    %783 = vmax.xlane.f32.xlu0 %v782
    %v784 = vpop.xlane.xlu0 %783
    %v785 = vsel %vm175, %v323, -inf
    %786 = vmax.xlane.f32.xlu0 %v785
    %v787 = vpop.xlane.xlu0 %786
    %v788 = vsel %vm175, %v399, -inf
    %789 = vmax.xlane.f32.xlu0 %v788
    %v790 = vpop.xlane.xlu0 %789
    %v791 = vsel %vm175, %v475, -inf
    %792 = vmax.xlane.f32.xlu0 %v791
    %v793 = vpop.xlane.xlu0 %792
    %v794 = vsel %vm175, %v551, -inf
    %795 = vmax.xlane.f32.xlu0 %v794
    %v796 = vpop.xlane.xlu0 %795
    %v797 = vsel %vm175, %v627, -inf
    %798 = vmax.xlane.f32.xlu0 %v797
    %v799 = vpop.xlane.xlu0 %798
    %v800 = vsel %vm175, %v703, -inf
    %801 = vmax.xlane.f32.xlu0 %v800
    %v802 = vpop.xlane.xlu0 %801
    %v803 = vsel %vm175, %v779, -inf
    %804 = vmax.xlane.f32.xlu0 %v803
    %v805 = vpop.xlane.xlu0 %804
    %v806 = vsub.f32 %v247, %v784
    %v807 = vsub.f32 %v323, %v787
    %v808 = vsub.f32 %v399, %v790
    %v809 = vsub.f32 %v475, %v793
    %v810 = vsub.f32 %v551, %v796
    %v811 = vsub.f32 %v627, %v799
    %v812 = vsub.f32 %v703, %v802
    %v813 = vsub.f32 %v779, %v805
    %v814 = vmul.f32 %v806, 1.442695
    %v815 = vpow.pop %v814
    %v816 = vmul.f32 %v807, 1.442695
    %v817 = vpow.pop %v816
    %v818 = vmul.f32 %v808, 1.442695
    %v819 = vpow.pop %v818
    %v820 = vmul.f32 %v809, 1.442695
    %v821 = vpow.pop %v820
    %v822 = vmul.f32 %v810, 1.442695
    %v823 = vpow.pop %v822
    %v824 = vmul.f32 %v811, 1.442695
    %v825 = vpow.pop %v824
    %v826 = vmul.f32 %v812, 1.442695
    %v827 = vpow.pop %v826
    %v828 = vmul.f32 %v813, 1.442695
    %v829 = vpow.pop %v828
    %v830 = vsel %vm175, %v815, 0.0
    %831 = vadd.xlane.f32.xlu0 %v830
    %v832 = vpop.xlane.xlu0 %831
    %v833 = vsel %vm175, %v817, 0.0
    %834 = vadd.xlane.f32.xlu0 %v833
    %v835 = vpop.xlane.xlu0 %834
    %v836 = vsel %vm175, %v819, 0.0
    %837 = vadd.xlane.f32.xlu0 %v836
    %v838 = vpop.xlane.xlu0 %837
    %v839 = vsel %vm175, %v821, 0.0
    %840 = vadd.xlane.f32.xlu0 %v839
    %v841 = vpop.xlane.xlu0 %840
    %v842 = vsel %vm175, %v823, 0.0
    %843 = vadd.xlane.f32.xlu0 %v842
    %v844 = vpop.xlane.xlu0 %843
    %v845 = vsel %vm175, %v825, 0.0
    %846 = vadd.xlane.f32.xlu0 %v845
    %v847 = vpop.xlane.xlu0 %846
    %v848 = vsel %vm175, %v827, 0.0
    %849 = vadd.xlane.f32.xlu0 %v848
    %v850 = vpop.xlane.xlu0 %849
    %v851 = vsel %vm175, %v829, 0.0
    %852 = vadd.xlane.f32.xlu0 %v851
    %v853 = vpop.xlane.xlu0 %852
    %v854 = vrcp.pop %v832
    %v855 = vmul.f32 %v815, %v854
    %v856 = vrcp.pop %v835
    %v857 = vmul.f32 %v817, %v856
    %v858 = vrcp.pop %v838
    %v859 = vmul.f32 %v819, %v858
    %v860 = vrcp.pop %v841
    %v861 = vmul.f32 %v821, %v860
    %v862 = vrcp.pop %v844
    %v863 = vmul.f32 %v823, %v862
    %v864 = vrcp.pop %v847
    %v865 = vmul.f32 %v825, %v864
    %v866 = vrcp.pop %v850
    %v867 = vmul.f32 %v827, %v866
    %v868 = vrcp.pop %v853
    %v869 = vmul.f32 %v829, %v868
    %870 = vrot.lane.b32.xlu0 %v135, 64
    %v871 = vpop.permute.xlu0 %870
    %v874 = vsel %vm175, %v855, 0
    %876 = vmatprep.subr.mxu0 0.0
    %877 = vmatpush1.msra.mxu0 0.0
    %878 = vmatprep.subr.mxu0 0.0
    %879 = vmatpush1.msra.mxu0 0.0
    %880 = vmatprep.subr.mxu0 0.0
    %881 = vmatpush1.msra.mxu0 0.0
    %882 = vmatprep.subr.mxu0 0.0
    %883 = vmatpush1.msra.mxu0 0.0
    %884 = vmatprep.subr.mxu0 0.0
    %885 = vmatpush1.msra.mxu0 0.0
    %886 = vmatprep.subr.mxu0 0.0
    %887 = vmatpush1.msra.mxu0 0.0
    %888 = vmatprep.subr.mxu0 0.0
    %889 = vmatpush1.msra.mxu0 0.0
    %890 = vmatprep.subr.mxu0 0.0
    %891 = vmatpush1.msra.mxu0 0.0
    %892 = vmatprep.subr.mxu0 0.0
    %893 = vmatpush1.msra.mxu0 0.0
    %894 = vmatprep.subr.mxu0 0.0
    %895 = vmatpush1.msra.mxu0 0.0
    %896 = vmatprep.subr.mxu0 0.0
    %897 = vmatpush1.msra.mxu0 0.0
    %898 = vmatprep.subr.mxu0 0.0
    %899 = vmatpush1.msra.mxu0 0.0
    %900 = vmatprep.subr.mxu0 0.0
    %901 = vmatpush1.msra.mxu0 0.0
    %902 = vmatprep.subr.mxu0 0.0
    %903 = vmatpush1.msra.mxu0 0.0
    %904 = vmatprep.subr.mxu0 0.0
    %905 = vmatpush1.msra.mxu0 0.0
    %906 = vmatprep.subr.mxu0 0.0
    %907 = vmatpush1.msra.mxu0 %v871
    %908 = vmatprep.subr.mxu0 0.0
    %909 = vmatpush2.msra.mxu0 0.0
    %910 = vmatprep.subr.mxu0 0.0
    %911 = vmatpush2.msra.mxu0 0.0
    %912 = vmatprep.subr.mxu0 0.0
    %913 = vmatpush2.msra.mxu0 0.0
    %914 = vmatprep.subr.mxu0 0.0
    %915 = vmatpush2.msra.mxu0 0.0
    %916 = vmatprep.subr.mxu0 0.0
    %917 = vmatpush2.msra.mxu0 0.0
    %918 = vmatprep.subr.mxu0 0.0
    %919 = vmatpush2.msra.mxu0 0.0
    %920 = vmatprep.subr.mxu0 0.0
    %921 = vmatpush2.msra.mxu0 0.0
    %922 = vmatprep.subr.mxu0 0.0
    %923 = vmatpush2.msra.mxu0 0.0
    %924 = vmatprep.subr.mxu0 0.0
    %925 = vmatpush2.msra.mxu0 0.0
    %926 = vmatprep.subr.mxu0 0.0
    %927 = vmatpush2.msra.mxu0 0.0
    %928 = vmatprep.subr.mxu0 0.0
    %929 = vmatpush2.msra.mxu0 0.0
    %930 = vmatprep.subr.mxu0 0.0
    %931 = vmatpush2.msra.mxu0 0.0
    %932 = vmatprep.subr.mxu0 0.0
    %933 = vmatpush2.msra.mxu0 0.0
    %934 = vmatprep.subr.mxu0 0.0
    %935 = vmatpush2.msra.mxu0 0.0
    %936 = vmatprep.subr.mxu0 0.0
    %937 = vmatpush2.msra.mxu0 0.0
    %938 = vmatprep.subr.mxu0 0.0
    %939 = vmatpush2.msra.mxu0 0.0
    %940 = vmatprep.mubr.f32.mxu0 0.0
    %941 = vmatmul.mubr.f32.gmra.mxu0 %v874
    %v942 = vpop.f32.mrf.mxu0
    %v943 = vadd.f32 0.0, %v942
    %v944 = vpop.f32.mrf.mxu0
    %945 = vdwg.mxu0
    %946 = vrot.lane.b32.xlu0 %v140, 64
    %v947 = vpop.permute.xlu0 %946
    %v950 = vsel %vm175, %v857, 0
    %952 = vmatprep.subr.mxu0 0.0
    %953 = vmatpush1.msra.mxu0 0.0
    %954 = vmatprep.subr.mxu0 0.0
    %955 = vmatpush1.msra.mxu0 0.0
    %956 = vmatprep.subr.mxu0 0.0
    %957 = vmatpush1.msra.mxu0 0.0
    %958 = vmatprep.subr.mxu0 0.0
    %959 = vmatpush1.msra.mxu0 0.0
    %960 = vmatprep.subr.mxu0 0.0
    %961 = vmatpush1.msra.mxu0 0.0
    %962 = vmatprep.subr.mxu0 0.0
    %963 = vmatpush1.msra.mxu0 0.0
    %964 = vmatprep.subr.mxu0 0.0
    %965 = vmatpush1.msra.mxu0 0.0
    %966 = vmatprep.subr.mxu0 0.0
    %967 = vmatpush1.msra.mxu0 0.0
    %968 = vmatprep.subr.mxu0 0.0
    %969 = vmatpush1.msra.mxu0 0.0
    %970 = vmatprep.subr.mxu0 0.0
    %971 = vmatpush1.msra.mxu0 0.0
    %972 = vmatprep.subr.mxu0 0.0
    %973 = vmatpush1.msra.mxu0 0.0
    %974 = vmatprep.subr.mxu0 0.0
    %975 = vmatpush1.msra.mxu0 0.0
    %976 = vmatprep.subr.mxu0 0.0
    %977 = vmatpush1.msra.mxu0 0.0
    %978 = vmatprep.subr.mxu0 0.0
    %979 = vmatpush1.msra.mxu0 0.0
    %980 = vmatprep.subr.mxu0 0.0
    %981 = vmatpush1.msra.mxu0 0.0
    %982 = vmatprep.subr.mxu0 0.0
    %983 = vmatpush1.msra.mxu0 %v947
    %984 = vmatprep.subr.mxu0 0.0
    %985 = vmatpush2.msra.mxu0 0.0
    %986 = vmatprep.subr.mxu0 0.0
    %987 = vmatpush2.msra.mxu0 0.0
    %988 = vmatprep.subr.mxu0 0.0
    %989 = vmatpush2.msra.mxu0 0.0
    %990 = vmatprep.subr.mxu0 0.0
    %991 = vmatpush2.msra.mxu0 0.0
    %992 = vmatprep.subr.mxu0 0.0
    %993 = vmatpush2.msra.mxu0 0.0
    %994 = vmatprep.subr.mxu0 0.0
    %995 = vmatpush2.msra.mxu0 0.0
    %996 = vmatprep.subr.mxu0 0.0
    %997 = vmatpush2.msra.mxu0 0.0
    %998 = vmatprep.subr.mxu0 0.0
    %999 = vmatpush2.msra.mxu0 0.0
    %1000 = vmatprep.subr.mxu0 0.0
    %1001 = vmatpush2.msra.mxu0 0.0
    %1002 = vmatprep.subr.mxu0 0.0
    %1003 = vmatpush2.msra.mxu0 0.0
    %1004 = vmatprep.subr.mxu0 0.0
    %1005 = vmatpush2.msra.mxu0 0.0
    %1006 = vmatprep.subr.mxu0 0.0
    %1007 = vmatpush2.msra.mxu0 0.0
    %1008 = vmatprep.subr.mxu0 0.0
    %1009 = vmatpush2.msra.mxu0 0.0
    %1010 = vmatprep.subr.mxu0 0.0
    %1011 = vmatpush2.msra.mxu0 0.0
    %1012 = vmatprep.subr.mxu0 0.0
    %1013 = vmatpush2.msra.mxu0 0.0
    %1014 = vmatprep.subr.mxu0 0.0
    %1015 = vmatpush2.msra.mxu0 0.0
    %1016 = vmatprep.mubr.f32.mxu0 0.0
    %1017 = vmatmul.mubr.f32.gmra.mxu0 %v950
    %v1018 = vpop.f32.mrf.mxu0
    %v1019 = vadd.f32 0.0, %v1018
    %v1020 = vpop.f32.mrf.mxu0
    %1021 = vdwg.mxu0
    %1022 = vrot.lane.b32.xlu0 %v162, 64
    %v1023 = vpop.permute.xlu0 %1022
    %v1026 = vsel %vm175, %v859, 0
    %1028 = vmatprep.subr.mxu0 0.0
    %1029 = vmatpush1.msra.mxu0 0.0
    %1030 = vmatprep.subr.mxu0 0.0
    %1031 = vmatpush1.msra.mxu0 0.0
    %1032 = vmatprep.subr.mxu0 0.0
    %1033 = vmatpush1.msra.mxu0 0.0
    %1034 = vmatprep.subr.mxu0 0.0
    %1035 = vmatpush1.msra.mxu0 0.0
    %1036 = vmatprep.subr.mxu0 0.0
    %1037 = vmatpush1.msra.mxu0 0.0
    %1038 = vmatprep.subr.mxu0 0.0
    %1039 = vmatpush1.msra.mxu0 0.0
    %1040 = vmatprep.subr.mxu0 0.0
    %1041 = vmatpush1.msra.mxu0 0.0
    %1042 = vmatprep.subr.mxu0 0.0
    %1043 = vmatpush1.msra.mxu0 0.0
    %1044 = vmatprep.subr.mxu0 0.0
    %1045 = vmatpush1.msra.mxu0 0.0
    %1046 = vmatprep.subr.mxu0 0.0
    %1047 = vmatpush1.msra.mxu0 0.0
    %1048 = vmatprep.subr.mxu0 0.0
    %1049 = vmatpush1.msra.mxu0 0.0
    %1050 = vmatprep.subr.mxu0 0.0
    %1051 = vmatpush1.msra.mxu0 0.0
    %1052 = vmatprep.subr.mxu0 0.0
    %1053 = vmatpush1.msra.mxu0 0.0
    %1054 = vmatprep.subr.mxu0 0.0
    %1055 = vmatpush1.msra.mxu0 0.0
    %1056 = vmatprep.subr.mxu0 0.0
    %1057 = vmatpush1.msra.mxu0 0.0
    %1058 = vmatprep.subr.mxu0 0.0
    %1059 = vmatpush1.msra.mxu0 %v1023
    %1060 = vmatprep.subr.mxu0 0.0
    %1061 = vmatpush2.msra.mxu0 0.0
    %1062 = vmatprep.subr.mxu0 0.0
    %1063 = vmatpush2.msra.mxu0 0.0
    %1064 = vmatprep.subr.mxu0 0.0
    %1065 = vmatpush2.msra.mxu0 0.0
    %1066 = vmatprep.subr.mxu0 0.0
    %1067 = vmatpush2.msra.mxu0 0.0
    %1068 = vmatprep.subr.mxu0 0.0
    %1069 = vmatpush2.msra.mxu0 0.0
    %1070 = vmatprep.subr.mxu0 0.0
    %1071 = vmatpush2.msra.mxu0 0.0
    %1072 = vmatprep.subr.mxu0 0.0
    %1073 = vmatpush2.msra.mxu0 0.0
    %1074 = vmatprep.subr.mxu0 0.0
    %1075 = vmatpush2.msra.mxu0 0.0
    %1076 = vmatprep.subr.mxu0 0.0
    %1077 = vmatpush2.msra.mxu0 0.0
    %1078 = vmatprep.subr.mxu0 0.0
    %1079 = vmatpush2.msra.mxu0 0.0
    %1080 = vmatprep.subr.mxu0 0.0
    %1081 = vmatpush2.msra.mxu0 0.0
    %1082 = vmatprep.subr.mxu0 0.0
    %1083 = vmatpush2.msra.mxu0 0.0
    %1084 = vmatprep.subr.mxu0 0.0
    %1085 = vmatpush2.msra.mxu0 0.0
    %1086 = vmatprep.subr.mxu0 0.0
    %1087 = vmatpush2.msra.mxu0 0.0
    %1088 = vmatprep.subr.mxu0 0.0
    %1089 = vmatpush2.msra.mxu0 0.0
    %1090 = vmatprep.subr.mxu0 0.0
    %1091 = vmatpush2.msra.mxu0 0.0
    %1092 = vmatprep.mubr.f32.mxu0 0.0
    %1093 = vmatmul.mubr.f32.gmra.mxu0 %v1026
    %v1094 = vpop.f32.mrf.mxu0
    %v1095 = vadd.f32 0.0, %v1094
    %v1096 = vpop.f32.mrf.mxu0
    %1097 = vdwg.mxu0
    %1098 = vrot.lane.b32.xlu0 %v164, 64
    %v1099 = vpop.permute.xlu0 %1098
    %v1102 = vsel %vm175, %v861, 0
    %1104 = vmatprep.subr.mxu0 0.0
    %1105 = vmatpush1.msra.mxu0 0.0
    %1106 = vmatprep.subr.mxu0 0.0
    %1107 = vmatpush1.msra.mxu0 0.0
    %1108 = vmatprep.subr.mxu0 0.0
    %1109 = vmatpush1.msra.mxu0 0.0
    %1110 = vmatprep.subr.mxu0 0.0
    %1111 = vmatpush1.msra.mxu0 0.0
    %1112 = vmatprep.subr.mxu0 0.0
    %1113 = vmatpush1.msra.mxu0 0.0
    %1114 = vmatprep.subr.mxu0 0.0
    %1115 = vmatpush1.msra.mxu0 0.0
    %1116 = vmatprep.subr.mxu0 0.0
    %1117 = vmatpush1.msra.mxu0 0.0
    %1118 = vmatprep.subr.mxu0 0.0
    %1119 = vmatpush1.msra.mxu0 0.0
    %1120 = vmatprep.subr.mxu0 0.0
    %1121 = vmatpush1.msra.mxu0 0.0
    %1122 = vmatprep.subr.mxu0 0.0
    %1123 = vmatpush1.msra.mxu0 0.0
    %1124 = vmatprep.subr.mxu0 0.0
    %1125 = vmatpush1.msra.mxu0 0.0
    %1126 = vmatprep.subr.mxu0 0.0
    %1127 = vmatpush1.msra.mxu0 0.0
    %1128 = vmatprep.subr.mxu0 0.0
    %1129 = vmatpush1.msra.mxu0 0.0
    %1130 = vmatprep.subr.mxu0 0.0
    %1131 = vmatpush1.msra.mxu0 0.0
    %1132 = vmatprep.subr.mxu0 0.0
    %1133 = vmatpush1.msra.mxu0 0.0
    %1134 = vmatprep.subr.mxu0 0.0
    %1135 = vmatpush1.msra.mxu0 %v1099
    %1136 = vmatprep.subr.mxu0 0.0
    %1137 = vmatpush2.msra.mxu0 0.0
    %1138 = vmatprep.subr.mxu0 0.0
    %1139 = vmatpush2.msra.mxu0 0.0
    %1140 = vmatprep.subr.mxu0 0.0
    %1141 = vmatpush2.msra.mxu0 0.0
    %1142 = vmatprep.subr.mxu0 0.0
    %1143 = vmatpush2.msra.mxu0 0.0
    %1144 = vmatprep.subr.mxu0 0.0
    %1145 = vmatpush2.msra.mxu0 0.0
    %1146 = vmatprep.subr.mxu0 0.0
    %1147 = vmatpush2.msra.mxu0 0.0
    %1148 = vmatprep.subr.mxu0 0.0
    %1149 = vmatpush2.msra.mxu0 0.0
    %1150 = vmatprep.subr.mxu0 0.0
    %1151 = vmatpush2.msra.mxu0 0.0
    %1152 = vmatprep.subr.mxu0 0.0
    %1153 = vmatpush2.msra.mxu0 0.0
    %1154 = vmatprep.subr.mxu0 0.0
    %1155 = vmatpush2.msra.mxu0 0.0
    %1156 = vmatprep.subr.mxu0 0.0
    %1157 = vmatpush2.msra.mxu0 0.0
    %1158 = vmatprep.subr.mxu0 0.0
    %1159 = vmatpush2.msra.mxu0 0.0
    %1160 = vmatprep.subr.mxu0 0.0
    %1161 = vmatpush2.msra.mxu0 0.0
    %1162 = vmatprep.subr.mxu0 0.0
    %1163 = vmatpush2.msra.mxu0 0.0
    %1164 = vmatprep.subr.mxu0 0.0
    %1165 = vmatpush2.msra.mxu0 0.0
    %1166 = vmatprep.subr.mxu0 0.0
    %1167 = vmatpush2.msra.mxu0 0.0
    %1168 = vmatprep.mubr.f32.mxu0 0.0
    %1169 = vmatmul.mubr.f32.gmra.mxu0 %v1102
    %v1170 = vpop.f32.mrf.mxu0
    %v1171 = vadd.f32 0.0, %v1170
    %v1172 = vpop.f32.mrf.mxu0
    %1173 = vdwg.mxu0
    %1174 = vrot.lane.b32.xlu0 %v166, 64
    %v1175 = vpop.permute.xlu0 %1174
    %v1178 = vsel %vm175, %v863, 0
    %1180 = vmatprep.subr.mxu0 0.0
    %1181 = vmatpush1.msra.mxu0 0.0
    %1182 = vmatprep.subr.mxu0 0.0
    %1183 = vmatpush1.msra.mxu0 0.0
    %1184 = vmatprep.subr.mxu0 0.0
    %1185 = vmatpush1.msra.mxu0 0.0
    %1186 = vmatprep.subr.mxu0 0.0
    %1187 = vmatpush1.msra.mxu0 0.0
    %1188 = vmatprep.subr.mxu0 0.0
    %1189 = vmatpush1.msra.mxu0 0.0
    %1190 = vmatprep.subr.mxu0 0.0
    %1191 = vmatpush1.msra.mxu0 0.0
    %1192 = vmatprep.subr.mxu0 0.0
    %1193 = vmatpush1.msra.mxu0 0.0
    %1194 = vmatprep.subr.mxu0 0.0
    %1195 = vmatpush1.msra.mxu0 0.0
    %1196 = vmatprep.subr.mxu0 0.0
    %1197 = vmatpush1.msra.mxu0 0.0
    %1198 = vmatprep.subr.mxu0 0.0
    %1199 = vmatpush1.msra.mxu0 0.0
    %1200 = vmatprep.subr.mxu0 0.0
    %1201 = vmatpush1.msra.mxu0 0.0
    %1202 = vmatprep.subr.mxu0 0.0
    %1203 = vmatpush1.msra.mxu0 0.0
    %1204 = vmatprep.subr.mxu0 0.0
    %1205 = vmatpush1.msra.mxu0 0.0
    %1206 = vmatprep.subr.mxu0 0.0
    %1207 = vmatpush1.msra.mxu0 0.0
    %1208 = vmatprep.subr.mxu0 0.0
    %1209 = vmatpush1.msra.mxu0 0.0
    %1210 = vmatprep.subr.mxu0 0.0
    %1211 = vmatpush1.msra.mxu0 %v1175
    %1212 = vmatprep.subr.mxu0 0.0
    %1213 = vmatpush2.msra.mxu0 0.0
    %1214 = vmatprep.subr.mxu0 0.0
    %1215 = vmatpush2.msra.mxu0 0.0
    %1216 = vmatprep.subr.mxu0 0.0
    %1217 = vmatpush2.msra.mxu0 0.0
    %1218 = vmatprep.subr.mxu0 0.0
    %1219 = vmatpush2.msra.mxu0 0.0
    %1220 = vmatprep.subr.mxu0 0.0
    %1221 = vmatpush2.msra.mxu0 0.0
    %1222 = vmatprep.subr.mxu0 0.0
    %1223 = vmatpush2.msra.mxu0 0.0
    %1224 = vmatprep.subr.mxu0 0.0
    %1225 = vmatpush2.msra.mxu0 0.0
    %1226 = vmatprep.subr.mxu0 0.0
    %1227 = vmatpush2.msra.mxu0 0.0
    %1228 = vmatprep.subr.mxu0 0.0
    %1229 = vmatpush2.msra.mxu0 0.0
    %1230 = vmatprep.subr.mxu0 0.0
    %1231 = vmatpush2.msra.mxu0 0.0
    %1232 = vmatprep.subr.mxu0 0.0
    %1233 = vmatpush2.msra.mxu0 0.0
    %1234 = vmatprep.subr.mxu0 0.0
    %1235 = vmatpush2.msra.mxu0 0.0
    %1236 = vmatprep.subr.mxu0 0.0
    %1237 = vmatpush2.msra.mxu0 0.0
    %1238 = vmatprep.subr.mxu0 0.0
    %1239 = vmatpush2.msra.mxu0 0.0
    %1240 = vmatprep.subr.mxu0 0.0
    %1241 = vmatpush2.msra.mxu0 0.0
    %1242 = vmatprep.subr.mxu0 0.0
    %1243 = vmatpush2.msra.mxu0 0.0
    %1244 = vmatprep.mubr.f32.mxu0 0.0
    %1245 = vmatmul.mubr.f32.gmra.mxu0 %v1178
    %v1246 = vpop.f32.mrf.mxu0
    %v1247 = vadd.f32 0.0, %v1246
    %v1248 = vpop.f32.mrf.mxu0
    %1249 = vdwg.mxu0
    %1250 = vrot.lane.b32.xlu0 %v168, 64
    %v1251 = vpop.permute.xlu0 %1250
    %v1254 = vsel %vm175, %v865, 0
    %1256 = vmatprep.subr.mxu0 0.0
    %1257 = vmatpush1.msra.mxu0 0.0
    %1258 = vmatprep.subr.mxu0 0.0
    %1259 = vmatpush1.msra.mxu0 0.0
    %1260 = vmatprep.subr.mxu0 0.0
    %1261 = vmatpush1.msra.mxu0 0.0
    %1262 = vmatprep.subr.mxu0 0.0
    %1263 = vmatpush1.msra.mxu0 0.0
    %1264 = vmatprep.subr.mxu0 0.0
    %1265 = vmatpush1.msra.mxu0 0.0
    %1266 = vmatprep.subr.mxu0 0.0
    %1267 = vmatpush1.msra.mxu0 0.0
    %1268 = vmatprep.subr.mxu0 0.0
    %1269 = vmatpush1.msra.mxu0 0.0
    %1270 = vmatprep.subr.mxu0 0.0
    %1271 = vmatpush1.msra.mxu0 0.0
    %1272 = vmatprep.subr.mxu0 0.0
    %1273 = vmatpush1.msra.mxu0 0.0
    %1274 = vmatprep.subr.mxu0 0.0
    %1275 = vmatpush1.msra.mxu0 0.0
    %1276 = vmatprep.subr.mxu0 0.0
    %1277 = vmatpush1.msra.mxu0 0.0
    %1278 = vmatprep.subr.mxu0 0.0
    %1279 = vmatpush1.msra.mxu0 0.0
    %1280 = vmatprep.subr.mxu0 0.0
    %1281 = vmatpush1.msra.mxu0 0.0
    %1282 = vmatprep.subr.mxu0 0.0
    %1283 = vmatpush1.msra.mxu0 0.0
    %1284 = vmatprep.subr.mxu0 0.0
    %1285 = vmatpush1.msra.mxu0 0.0
    %1286 = vmatprep.subr.mxu0 0.0
    %1287 = vmatpush1.msra.mxu0 %v1251
    %1288 = vmatprep.subr.mxu0 0.0
    %1289 = vmatpush2.msra.mxu0 0.0
    %1290 = vmatprep.subr.mxu0 0.0
    %1291 = vmatpush2.msra.mxu0 0.0
    %1292 = vmatprep.subr.mxu0 0.0
    %1293 = vmatpush2.msra.mxu0 0.0
    %1294 = vmatprep.subr.mxu0 0.0
    %1295 = vmatpush2.msra.mxu0 0.0
    %1296 = vmatprep.subr.mxu0 0.0
    %1297 = vmatpush2.msra.mxu0 0.0
    %1298 = vmatprep.subr.mxu0 0.0
    %1299 = vmatpush2.msra.mxu0 0.0
    %1300 = vmatprep.subr.mxu0 0.0
    %1301 = vmatpush2.msra.mxu0 0.0
    %1302 = vmatprep.subr.mxu0 0.0
    %1303 = vmatpush2.msra.mxu0 0.0
    %1304 = vmatprep.subr.mxu0 0.0
    %1305 = vmatpush2.msra.mxu0 0.0
    %1306 = vmatprep.subr.mxu0 0.0
    %1307 = vmatpush2.msra.mxu0 0.0
    %1308 = vmatprep.subr.mxu0 0.0
    %1309 = vmatpush2.msra.mxu0 0.0
    %1310 = vmatprep.subr.mxu0 0.0
    %1311 = vmatpush2.msra.mxu0 0.0
    %1312 = vmatprep.subr.mxu0 0.0
    %1313 = vmatpush2.msra.mxu0 0.0
    %1314 = vmatprep.subr.mxu0 0.0
    %1315 = vmatpush2.msra.mxu0 0.0
    %1316 = vmatprep.subr.mxu0 0.0
    %1317 = vmatpush2.msra.mxu0 0.0
    %1318 = vmatprep.subr.mxu0 0.0
    %1319 = vmatpush2.msra.mxu0 0.0
    %1320 = vmatprep.mubr.f32.mxu0 0.0
    %1321 = vmatmul.mubr.f32.gmra.mxu0 %v1254
    %v1322 = vpop.f32.mrf.mxu0
    %v1323 = vadd.f32 0.0, %v1322
    %v1324 = vpop.f32.mrf.mxu0
    %1325 = vdwg.mxu0
    %1326 = vrot.lane.b32.xlu0 %v170, 64
    %v1327 = vpop.permute.xlu0 %1326
    %v1330 = vsel %vm175, %v867, 0
    %1332 = vmatprep.subr.mxu0 0.0
    %1333 = vmatpush1.msra.mxu0 0.0
    %1334 = vmatprep.subr.mxu0 0.0
    %1335 = vmatpush1.msra.mxu0 0.0
    %1336 = vmatprep.subr.mxu0 0.0
    %1337 = vmatpush1.msra.mxu0 0.0
    %1338 = vmatprep.subr.mxu0 0.0
    %1339 = vmatpush1.msra.mxu0 0.0
    %1340 = vmatprep.subr.mxu0 0.0
    %1341 = vmatpush1.msra.mxu0 0.0
    %1342 = vmatprep.subr.mxu0 0.0
    %1343 = vmatpush1.msra.mxu0 0.0
    %1344 = vmatprep.subr.mxu0 0.0
    %1345 = vmatpush1.msra.mxu0 0.0
    %1346 = vmatprep.subr.mxu0 0.0
    %1347 = vmatpush1.msra.mxu0 0.0
    %1348 = vmatprep.subr.mxu0 0.0
    %1349 = vmatpush1.msra.mxu0 0.0
    %1350 = vmatprep.subr.mxu0 0.0
    %1351 = vmatpush1.msra.mxu0 0.0
    %1352 = vmatprep.subr.mxu0 0.0
    %1353 = vmatpush1.msra.mxu0 0.0
    %1354 = vmatprep.subr.mxu0 0.0
    %1355 = vmatpush1.msra.mxu0 0.0
    %1356 = vmatprep.subr.mxu0 0.0
    %1357 = vmatpush1.msra.mxu0 0.0
    %1358 = vmatprep.subr.mxu0 0.0
    %1359 = vmatpush1.msra.mxu0 0.0
    %1360 = vmatprep.subr.mxu0 0.0
    %1361 = vmatpush1.msra.mxu0 0.0
    %1362 = vmatprep.subr.mxu0 0.0
    %1363 = vmatpush1.msra.mxu0 %v1327
    %1364 = vmatprep.subr.mxu0 0.0
    %1365 = vmatpush2.msra.mxu0 0.0
    %1366 = vmatprep.subr.mxu0 0.0
    %1367 = vmatpush2.msra.mxu0 0.0
    %1368 = vmatprep.subr.mxu0 0.0
    %1369 = vmatpush2.msra.mxu0 0.0
    %1370 = vmatprep.subr.mxu0 0.0
    %1371 = vmatpush2.msra.mxu0 0.0
    %1372 = vmatprep.subr.mxu0 0.0
    %1373 = vmatpush2.msra.mxu0 0.0
    %1374 = vmatprep.subr.mxu0 0.0
    %1375 = vmatpush2.msra.mxu0 0.0
    %1376 = vmatprep.subr.mxu0 0.0
    %1377 = vmatpush2.msra.mxu0 0.0
    %1378 = vmatprep.subr.mxu0 0.0
    %1379 = vmatpush2.msra.mxu0 0.0
    %1380 = vmatprep.subr.mxu0 0.0
    %1381 = vmatpush2.msra.mxu0 0.0
    %1382 = vmatprep.subr.mxu0 0.0
    %1383 = vmatpush2.msra.mxu0 0.0
    %1384 = vmatprep.subr.mxu0 0.0
    %1385 = vmatpush2.msra.mxu0 0.0
    %1386 = vmatprep.subr.mxu0 0.0
    %1387 = vmatpush2.msra.mxu0 0.0
    %1388 = vmatprep.subr.mxu0 0.0
    %1389 = vmatpush2.msra.mxu0 0.0
    %1390 = vmatprep.subr.mxu0 0.0
    %1391 = vmatpush2.msra.mxu0 0.0
    %1392 = vmatprep.subr.mxu0 0.0
    %1393 = vmatpush2.msra.mxu0 0.0
    %1394 = vmatprep.subr.mxu0 0.0
    %1395 = vmatpush2.msra.mxu0 0.0
    %1396 = vmatprep.mubr.f32.mxu0 0.0
    %1397 = vmatmul.mubr.f32.gmra.mxu0 %v1330
    %v1398 = vpop.f32.mrf.mxu0
    %v1399 = vadd.f32 0.0, %v1398
    %v1400 = vpop.f32.mrf.mxu0
    %1401 = vdwg.mxu0
    %1402 = vrot.lane.b32.xlu0 %v172, 64
    %v1403 = vpop.permute.xlu0 %1402
    %v1406 = vsel %vm175, %v869, 0
    %1408 = vmatprep.subr.mxu0 0.0
    %1409 = vmatpush1.msra.mxu0 0.0
    %1410 = vmatprep.subr.mxu0 0.0
    %1411 = vmatpush1.msra.mxu0 0.0
    %1412 = vmatprep.subr.mxu0 0.0
    %1413 = vmatpush1.msra.mxu0 0.0
    %1414 = vmatprep.subr.mxu0 0.0
    %1415 = vmatpush1.msra.mxu0 0.0
    %1416 = vmatprep.subr.mxu0 0.0
    %1417 = vmatpush1.msra.mxu0 0.0
    %1418 = vmatprep.subr.mxu0 0.0
    %1419 = vmatpush1.msra.mxu0 0.0
    %1420 = vmatprep.subr.mxu0 0.0
    %1421 = vmatpush1.msra.mxu0 0.0
    %1422 = vmatprep.subr.mxu0 0.0
    %1423 = vmatpush1.msra.mxu0 0.0
    %1424 = vmatprep.subr.mxu0 0.0
    %1425 = vmatpush1.msra.mxu0 0.0
    %1426 = vmatprep.subr.mxu0 0.0
    %1427 = vmatpush1.msra.mxu0 0.0
    %1428 = vmatprep.subr.mxu0 0.0
    %1429 = vmatpush1.msra.mxu0 0.0
    %1430 = vmatprep.subr.mxu0 0.0
    %1431 = vmatpush1.msra.mxu0 0.0
    %1432 = vmatprep.subr.mxu0 0.0
    %1433 = vmatpush1.msra.mxu0 0.0
    %1434 = vmatprep.subr.mxu0 0.0
    %1435 = vmatpush1.msra.mxu0 0.0
    %1436 = vmatprep.subr.mxu0 0.0
    %1437 = vmatpush1.msra.mxu0 0.0
    %1438 = vmatprep.subr.mxu0 0.0
    %1439 = vmatpush1.msra.mxu0 %v1403
    %1440 = vmatprep.subr.mxu0 0.0
    %1441 = vmatpush2.msra.mxu0 0.0
    %1442 = vmatprep.subr.mxu0 0.0
    %1443 = vmatpush2.msra.mxu0 0.0
    %1444 = vmatprep.subr.mxu0 0.0
    %1445 = vmatpush2.msra.mxu0 0.0
    %1446 = vmatprep.subr.mxu0 0.0
    %1447 = vmatpush2.msra.mxu0 0.0
    %1448 = vmatprep.subr.mxu0 0.0
    %1449 = vmatpush2.msra.mxu0 0.0
    %1450 = vmatprep.subr.mxu0 0.0
    %1451 = vmatpush2.msra.mxu0 0.0
    %1452 = vmatprep.subr.mxu0 0.0
    %1453 = vmatpush2.msra.mxu0 0.0
    %1454 = vmatprep.subr.mxu0 0.0
    %1455 = vmatpush2.msra.mxu0 0.0
    %1456 = vmatprep.subr.mxu0 0.0
    %1457 = vmatpush2.msra.mxu0 0.0
    %1458 = vmatprep.subr.mxu0 0.0
    %1459 = vmatpush2.msra.mxu0 0.0
    %1460 = vmatprep.subr.mxu0 0.0
    %1461 = vmatpush2.msra.mxu0 0.0
    %1462 = vmatprep.subr.mxu0 0.0
    %1463 = vmatpush2.msra.mxu0 0.0
    %1464 = vmatprep.subr.mxu0 0.0
    %1465 = vmatpush2.msra.mxu0 0.0
    %1466 = vmatprep.subr.mxu0 0.0
    %1467 = vmatpush2.msra.mxu0 0.0
    %1468 = vmatprep.subr.mxu0 0.0
    %1469 = vmatpush2.msra.mxu0 0.0
    %1470 = vmatprep.subr.mxu0 0.0
    %1471 = vmatpush2.msra.mxu0 0.0
    %1472 = vmatprep.mubr.f32.mxu0 0.0
    %1473 = vmatmul.mubr.f32.gmra.mxu0 %v1406
    %v1474 = vpop.f32.mrf.mxu0
    %v1475 = vadd.f32 0.0, %v1474
    %v1476 = vpop.f32.mrf.mxu0
    %1477 = vdwg.mxu0
    %1478 = vst.msk [vmem:[#allocation4] sm:$0xff] %vm175, %v247
    %1479 = vst.msk [vmem:[#allocation4 + $0x8] sm:$0xff] %vm175, %v399
    %1480 = vst.msk [vmem:[#allocation4 + $0x10] sm:$0xff] %vm175, %v551
    %1481 = vst.msk [vmem:[#allocation4 + $0x18] sm:$0xff] %vm175, %v703
    %s1482 = scalar_lea.vmem [#allocation4], 32
    %1483 = vst.msk [vmem:[%s1482] sm:$0xff] %vm175, %v323
    %1484 = vst.msk [vmem:[%s1482 + $0x8] sm:$0xff] %vm175, %v475
    %1485 = vst.msk [vmem:[%s1482 + $0x10] sm:$0xff] %vm175, %v627
    %1486 = vst.msk [vmem:[%s1482 + $0x18] sm:$0xff] %vm175, %v779
    %v1487 = vld [vmem:[%s5] sm:$0xff]
    %v1488 = vld [vmem:[%s5 + $0x8] sm:$0xff]
    %v1489 = vld [vmem:[%s5 + $0x10] sm:$0xff]
    %v1490 = vld [vmem:[%s5 + $0x18] sm:$0xff]
    %v1491 = vld [vmem:[%s6] sm:$0x1]
    %1494 = vrot.lane.b32.xlu0 %v1095, 8
    %v1495 = vpop.permute.xlu0 %1494
    %1496 = vrot.lane.b32.xlu0 %v1171, 8
    %v1497 = vpop.permute.xlu0 %1496
    %1502 = vrot.lane.b32.xlu0 %v1247, 16
    %v1503 = vpop.permute.xlu0 %1502
    %1504 = vrot.lane.b32.xlu0 %v1323, 16
    %v1505 = vpop.permute.xlu0 %1504
    %1510 = vrot.lane.b32.xlu0 %v1399, 24
    %v1511 = vpop.permute.xlu0 %1510
    %1512 = vrot.lane.b32.xlu0 %v1475, 24
    %v1513 = vpop.permute.xlu0 %1512
    %v1516 = vsel %vm175, %v943, %v1495
    %v1517 = vsel %vm175, %v1019, %v1497
    %vm1518 = vcmask 130048
    %v1519 = vsel %vm1518, %v1516, %v1503
    %v1520 = vsel %vm1518, %v1517, %v1505
    %vm1521 = vcmask 195584
    %v1522 = vsel %vm1521, %v1519, %v1511
    %v1523 = vsel %vm1521, %v1520, %v1513
    %v1525 = vlaneseq
    %v1526 = vshrl.u32 %v1525, 7
    %v1527 = vsub.s32 0, %v1526
    %v1528 = vrot.slane %v1491, %v1527
    %1533 = vrot.lane.b32.xlu0 %v1487, 32
    %v1534 = vpop.permute.xlu0 %1533
    %1535 = vrot.lane.b32.xlu0 %v1488, 32
    %v1536 = vpop.permute.xlu0 %1535
    %1537 = vrot.lane.b32.xlu0 %v1489, 32
    %v1538 = vpop.permute.xlu0 %1537
    %1539 = vrot.lane.b32.xlu0 %v1490, 32
    %v1540 = vpop.permute.xlu0 %1539
    %1545 = vrot.lane.b32.xlu0 %v1528, 32
    %v1546 = vpop.permute.xlu0 %1545
    %v1549 = vsel %vm61, %v1522, 0
    %v1552 = vsel %vm61, %v1523, 0
    %1554 = vmatprep.subr.mxu0 0.0
    %1555 = vmatpush1.msra.mxu0 0.0
    %1556 = vmatprep.subr.mxu0 0.0
    %1557 = vmatpush1.msra.mxu0 0.0
    %1558 = vmatprep.subr.mxu0 0.0
    %1559 = vmatpush1.msra.mxu0 0.0
    %1560 = vmatprep.subr.mxu0 0.0
    %1561 = vmatpush1.msra.mxu0 0.0
    %1562 = vmatprep.subr.mxu0 0.0
    %1563 = vmatpush1.msra.mxu0 0.0
    %1564 = vmatprep.subr.mxu0 0.0
    %1565 = vmatpush1.msra.mxu0 0.0
    %1566 = vmatprep.subr.mxu0 0.0
    %1567 = vmatpush1.msra.mxu0 0.0
    %1568 = vmatprep.subr.mxu0 0.0
    %1569 = vmatpush1.msra.mxu0 0.0
    %1570 = vmatprep.subr.mxu0 0.0
    %1571 = vmatpush1.msra.mxu0 0.0
    %1572 = vmatprep.subr.mxu0 0.0
    %1573 = vmatpush1.msra.mxu0 0.0
    %1574 = vmatprep.subr.mxu0 0.0
    %1575 = vmatpush1.msra.mxu0 0.0
    %1576 = vmatprep.subr.mxu0 0.0
    %1577 = vmatpush1.msra.mxu0 0.0
    %1578 = vmatprep.subr.mxu0 0.0
    %1579 = vmatpush1.msra.mxu0 %v1540
    %1580 = vmatprep.subr.mxu0 0.0
    %1581 = vmatpush1.msra.mxu0 %v1538
    %1582 = vmatprep.subr.mxu0 0.0
    %1583 = vmatpush1.msra.mxu0 %v1536
    %1584 = vmatprep.subr.mxu0 0.0
    %1585 = vmatpush1.msra.mxu0 %v1534
    %1586 = vmatprep.subr.mxu0 0.0
    %1587 = vmatpush2.msra.mxu0 0.0
    %1588 = vmatprep.subr.mxu0 0.0
    %1589 = vmatpush2.msra.mxu0 0.0
    %1590 = vmatprep.subr.mxu0 0.0
    %1591 = vmatpush2.msra.mxu0 0.0
    %1592 = vmatprep.subr.mxu0 0.0
    %1593 = vmatpush2.msra.mxu0 0.0
    %1594 = vmatprep.subr.mxu0 0.0
    %1595 = vmatpush2.msra.mxu0 0.0
    %1596 = vmatprep.subr.mxu0 0.0
    %1597 = vmatpush2.msra.mxu0 0.0
    %1598 = vmatprep.subr.mxu0 0.0
    %1599 = vmatpush2.msra.mxu0 0.0
    %1600 = vmatprep.subr.mxu0 0.0
    %1601 = vmatpush2.msra.mxu0 0.0
    %1602 = vmatprep.subr.mxu0 0.0
    %1603 = vmatpush2.msra.mxu0 0.0
    %1604 = vmatprep.subr.mxu0 0.0
    %1605 = vmatpush2.msra.mxu0 0.0
    %1606 = vmatprep.subr.mxu0 0.0
    %1607 = vmatpush2.msra.mxu0 0.0
    %1608 = vmatprep.subr.mxu0 0.0
    %1609 = vmatpush2.msra.mxu0 0.0
    %1610 = vmatprep.subr.mxu0 0.0
    %1611 = vmatpush2.msra.mxu0 0.0
    %1612 = vmatprep.subr.mxu0 0.0
    %1613 = vmatpush2.msra.mxu0 0.0
    %1614 = vmatprep.subr.mxu0 0.0
    %1615 = vmatpush2.msra.mxu0 0.0
    %1616 = vmatprep.subr.mxu0 0.0
    %1617 = vmatpush2.msra.mxu0 0.0
    %1618 = vmatprep.mubr.f32.mxu0 0.0
    %1619 = vmatmul.mubr.f32.gmra.mxu0 %v1549
    %v1620 = vpop.f32.mrf.mxu0
    %v1621 = vadd.f32 %v1546, %v1620
    %v1622 = vpop.f32.mrf.mxu0
    %1623 = vmatprep.mubr.f32.mxu0 0.0
    %1624 = vmatmul.mubr.f32.gmra.mxu0 %v1552
    %v1625 = vpop.f32.mrf.mxu0
    %v1626 = vadd.f32 %v1546, %v1625
    %v1627 = vpop.f32.mrf.mxu0
    %1628 = vdwg.mxu0
    %v1629 = vadd.f32 %v43, %v1621
    %v1630 = vadd.f32 %v44, %v1626
    %v1631 = vsel %vm61, %v1629, 0.0
    %1632 = vadd.xlane.f32.xlu0 %v1631
    %v1633 = vpop.xlane.xlu0 %1632
    %v1634 = vsel %vm61, %v1630, 0.0
    %1635 = vadd.xlane.f32.xlu0 %v1634
    %v1636 = vpop.xlane.xlu0 %1635
    %v1637 = vrcp.pop 32.0
    %v1638 = vmul.f32 %v1633, %v1637
    %v1639 = vmul.f32 %v1636, %v1637
    %v1640 = vsub.f32 %v1629, %v1638
    %v1641 = vsub.f32 %v1630, %v1639
    %v1642 = vmul.f32 %v1640, %v1640
    %v1643 = vmul.f32 %v1641, %v1641
    %v1644 = vsel %vm61, %v1642, 0.0
    %1645 = vadd.xlane.f32.xlu0 %v1644
    %v1646 = vpop.xlane.xlu0 %1645
    %v1647 = vsel %vm61, %v1643, 0.0
    %1648 = vadd.xlane.f32.xlu0 %v1647
    %v1649 = vpop.xlane.xlu0 %1648
    %v1650 = vmul.f32 %v1646, %v1637
    %v1651 = vmul.f32 %v1649, %v1637
    %v1652 = vadd.f32 %v1650, 1e-05
    %v1653 = vadd.f32 %v1651, 1e-05
    %v1654 = vrsqrt.pop %v1652
    %v1655 = vrsqrt.pop %v1653
    %v1656 = vmul.f32 %v1640, %v1654
    %v1657 = vmul.f32 %v1641, %v1655
    %v1658 = vld [vmem:[%s7] sm:$0x1]
    %v1660 = vlaneseq
    %v1661 = vshrl.u32 %v1660, 7
    %v1662 = vsub.s32 0, %v1661
    %v1663 = vrot.slane %v1658, %v1662
    %v1665 = vmul.f32 %v1656, %v1663
    %v1666 = vmul.f32 %v1657, %v1663
    %1667 = vrot.lane.b32.xlu0 %v1663, 96
    %v1668 = vpop.permute.xlu0 %1667
    %v1670 = vadd.f32 %v1665, %v1668
    %v1671 = vadd.f32 %v1666, %v1668
    %s1672 = scalar_lea.vmem %s5, 32
    %v1673 = vld [vmem:[%s1672] sm:$0xff]
    %v1674 = vld [vmem:[%s1672 + $0x8] sm:$0xff]
    %v1675 = vld [vmem:[%s1672 + $0x10] sm:$0xff]
    %v1676 = vld [vmem:[%s1672 + $0x18] sm:$0xff]
    %s1677 = scalar_lea.vmem %s6, 1
    %v1678 = vld [vmem:[%s1677] sm:$0x1]
    %v1680 = vlaneseq
    %v1681 = vshrl.u32 %v1680, 7
    %v1682 = vsub.s32 0, %v1681
    %v1683 = vrot.slane %v1678, %v1682
    %v1686 = vsel %vm61, %v1670, 0
    %v1689 = vsel %vm61, %v1671, 0
    %1691 = vmatprep.subr.mxu0 0.0
    %1692 = vmatpush1.msra.mxu0 0.0
    %1693 = vmatprep.subr.mxu0 0.0
    %1694 = vmatpush1.msra.mxu0 0.0
    %1695 = vmatprep.subr.mxu0 0.0
    %1696 = vmatpush1.msra.mxu0 0.0
    %1697 = vmatprep.subr.mxu0 0.0
    %1698 = vmatpush1.msra.mxu0 0.0
    %1699 = vmatprep.subr.mxu0 0.0
    %1700 = vmatpush1.msra.mxu0 0.0
    %1701 = vmatprep.subr.mxu0 0.0
    %1702 = vmatpush1.msra.mxu0 0.0
    %1703 = vmatprep.subr.mxu0 0.0
    %1704 = vmatpush1.msra.mxu0 0.0
    %1705 = vmatprep.subr.mxu0 0.0
    %1706 = vmatpush1.msra.mxu0 0.0
    %1707 = vmatprep.subr.mxu0 0.0
    %1708 = vmatpush1.msra.mxu0 0.0
    %1709 = vmatprep.subr.mxu0 0.0
    %1710 = vmatpush1.msra.mxu0 0.0
    %1711 = vmatprep.subr.mxu0 0.0
    %1712 = vmatpush1.msra.mxu0 0.0
    %1713 = vmatprep.subr.mxu0 0.0
    %1714 = vmatpush1.msra.mxu0 0.0
    %1715 = vmatprep.subr.mxu0 0.0
    %1716 = vmatpush1.msra.mxu0 %v1676
    %1717 = vmatprep.subr.mxu0 0.0
    %1718 = vmatpush1.msra.mxu0 %v1675
    %1719 = vmatprep.subr.mxu0 0.0
    %1720 = vmatpush1.msra.mxu0 %v1674
    %1721 = vmatprep.subr.mxu0 0.0
    %1722 = vmatpush1.msra.mxu0 %v1673
    %1723 = vmatprep.subr.mxu0 0.0
    %1724 = vmatpush2.msra.mxu0 0.0
    %1725 = vmatprep.subr.mxu0 0.0
    %1726 = vmatpush2.msra.mxu0 0.0
    %1727 = vmatprep.subr.mxu0 0.0
    %1728 = vmatpush2.msra.mxu0 0.0
    %1729 = vmatprep.subr.mxu0 0.0
    %1730 = vmatpush2.msra.mxu0 0.0
    %1731 = vmatprep.subr.mxu0 0.0
    %1732 = vmatpush2.msra.mxu0 0.0
    %1733 = vmatprep.subr.mxu0 0.0
    %1734 = vmatpush2.msra.mxu0 0.0
    %1735 = vmatprep.subr.mxu0 0.0
    %1736 = vmatpush2.msra.mxu0 0.0
    %1737 = vmatprep.subr.mxu0 0.0
    %1738 = vmatpush2.msra.mxu0 0.0
    %1739 = vmatprep.subr.mxu0 0.0
    %1740 = vmatpush2.msra.mxu0 0.0
    %1741 = vmatprep.subr.mxu0 0.0
    %1742 = vmatpush2.msra.mxu0 0.0
    %1743 = vmatprep.subr.mxu0 0.0
    %1744 = vmatpush2.msra.mxu0 0.0
    %1745 = vmatprep.subr.mxu0 0.0
    %1746 = vmatpush2.msra.mxu0 0.0
    %1747 = vmatprep.subr.mxu0 0.0
    %1748 = vmatpush2.msra.mxu0 0.0
    %1749 = vmatprep.subr.mxu0 0.0
    %1750 = vmatpush2.msra.mxu0 0.0
    %1751 = vmatprep.subr.mxu0 0.0
    %1752 = vmatpush2.msra.mxu0 0.0
    %1753 = vmatprep.subr.mxu0 0.0
    %1754 = vmatpush2.msra.mxu0 0.0
    %1755 = vmatprep.mubr.f32.mxu0 0.0
    %1756 = vmatmul.mubr.f32.gmra.mxu0 %v1686
    %v1757 = vpop.f32.mrf.mxu0
    %v1758 = vadd.f32 %v1683, %v1757
    %v1759 = vpop.f32.mrf.mxu0
    %1760 = vmatprep.mubr.f32.mxu0 0.0
    %1761 = vmatmul.mubr.f32.gmra.mxu0 %v1689
    %v1762 = vpop.f32.mrf.mxu0
    %v1763 = vadd.f32 %v1683, %v1762
    %v1764 = vpop.f32.mrf.mxu0
    %1765 = vdwg.mxu0
    %v1766 = vld [vmem:[%s2] sm:$0xff]
    %v1767 = vld [vmem:[%s2 + $0x8] sm:$0xff]
    %v1768 = vld [vmem:[%s2 + $0x10] sm:$0xff]
    %v1769 = vld [vmem:[%s2 + $0x18] sm:$0xff]
    %v1770 = vld [vmem:[%s2 + $0x20] sm:$0xff]
    %v1771 = vld [vmem:[%s2 + $0x28] sm:$0xff]
    %v1772 = vld [vmem:[%s2 + $0x30] sm:$0xff]
    %v1773 = vld [vmem:[%s2 + $0x38] sm:$0xff]
    %1776 = vrot.lane.b32.xlu0 %v1758, 120
    %v1777 = vpop.permute.xlu0 %1776
    %1778 = vrot.lane.b32.xlu0 %v1763, 120
    %v1779 = vpop.permute.xlu0 %1778
    %1780 = vrot.lane.b32.xlu0 %v1758, 112
    %v1781 = vpop.permute.xlu0 %1780
    %1782 = vrot.lane.b32.xlu0 %v1763, 112
    %v1783 = vpop.permute.xlu0 %1782
    %1784 = vrot.lane.b32.xlu0 %v1758, 104
    %v1785 = vpop.permute.xlu0 %1784
    %1786 = vrot.lane.b32.xlu0 %v1763, 104
    %v1787 = vpop.permute.xlu0 %1786
    %1788 = vrot.lane.b32.xlu0 %v1758, 96
    %v1789 = vpop.permute.xlu0 %1788
    %v1791 = vsel %vm175, %v1766, 0
    %v1793 = vsel %vm175, %v1789, 0
    %1795 = vmatprep.subr.mxu0 0.0
    %1796 = vmatpush1.xpose.msra.mxu0 0.0
    %1797 = vmatprep.subr.mxu0 0.0
    %1798 = vmatpush1.xpose.msra.mxu0 0.0
    %1799 = vmatprep.subr.mxu0 0.0
    %1800 = vmatpush1.xpose.msra.mxu0 0.0
    %1801 = vmatprep.subr.mxu0 0.0
    %1802 = vmatpush1.xpose.msra.mxu0 0.0
    %1803 = vmatprep.subr.mxu0 0.0
    %1804 = vmatpush1.xpose.msra.mxu0 0.0
    %1805 = vmatprep.subr.mxu0 0.0
    %1806 = vmatpush1.xpose.msra.mxu0 0.0
    %1807 = vmatprep.subr.mxu0 0.0
    %1808 = vmatpush1.xpose.msra.mxu0 0.0
    %1809 = vmatprep.subr.mxu0 0.0
    %1810 = vmatpush1.xpose.msra.mxu0 0.0
    %1811 = vmatprep.subr.mxu0 0.0
    %1812 = vmatpush1.xpose.msra.mxu0 0.0
    %1813 = vmatprep.subr.mxu0 0.0
    %1814 = vmatpush1.xpose.msra.mxu0 0.0
    %1815 = vmatprep.subr.mxu0 0.0
    %1816 = vmatpush1.xpose.msra.mxu0 0.0
    %1817 = vmatprep.subr.mxu0 0.0
    %1818 = vmatpush1.xpose.msra.mxu0 0.0
    %1819 = vmatprep.subr.mxu0 0.0
    %1820 = vmatpush1.xpose.msra.mxu0 0.0
    %1821 = vmatprep.subr.mxu0 0.0
    %1822 = vmatpush1.xpose.msra.mxu0 0.0
    %1823 = vmatprep.subr.mxu0 0.0
    %1824 = vmatpush1.xpose.msra.mxu0 0.0
    %1825 = vmatprep.subr.mxu0 0.0
    %1826 = vmatpush1.xpose.msra.mxu0 %v1793
    %1827 = vmatprep.subr.mxu0 0.0
    %1828 = vmatpush2.xpose.msra.mxu0 0.0
    %1829 = vmatprep.subr.mxu0 0.0
    %1830 = vmatpush2.xpose.msra.mxu0 0.0
    %1831 = vmatprep.subr.mxu0 0.0
    %1832 = vmatpush2.xpose.msra.mxu0 0.0
    %1833 = vmatprep.subr.mxu0 0.0
    %1834 = vmatpush2.xpose.msra.mxu0 0.0
    %1835 = vmatprep.subr.mxu0 0.0
    %1836 = vmatpush2.xpose.msra.mxu0 0.0
    %1837 = vmatprep.subr.mxu0 0.0
    %1838 = vmatpush2.xpose.msra.mxu0 0.0
    %1839 = vmatprep.subr.mxu0 0.0
    %1840 = vmatpush2.xpose.msra.mxu0 0.0
    %1841 = vmatprep.subr.mxu0 0.0
    %1842 = vmatpush2.xpose.msra.mxu0 0.0
    %1843 = vmatprep.subr.mxu0 0.0
    %1844 = vmatpush2.xpose.msra.mxu0 0.0
    %1845 = vmatprep.subr.mxu0 0.0
    %1846 = vmatpush2.xpose.msra.mxu0 0.0
    %1847 = vmatprep.subr.mxu0 0.0
    %1848 = vmatpush2.xpose.msra.mxu0 0.0
    %1849 = vmatprep.subr.mxu0 0.0
    %1850 = vmatpush2.xpose.msra.mxu0 0.0
    %1851 = vmatprep.subr.mxu0 0.0
    %1852 = vmatpush2.xpose.msra.mxu0 0.0
    %1853 = vmatprep.subr.mxu0 0.0
    %1854 = vmatpush2.xpose.msra.mxu0 0.0
    %1855 = vmatprep.subr.mxu0 0.0
    %1856 = vmatpush2.xpose.msra.mxu0 0.0
    %1857 = vmatprep.subr.mxu0 0.0
    %1858 = vmatpush2.xpose.msra.mxu0 0.0
    %1859 = vmatprep.mubr.f32.mxu0 0.0
    %1860 = vmatmul.mubr.f32.gmra.mxu0 %v1791
    %v1861 = vpop.f32.mrf.mxu0
    %v1862 = vadd.f32 %v47, %v1861
    %v1863 = vpop.f32.mrf.mxu0
    %1864 = vdwg.mxu0
    %1865 = vrot.lane.b32.xlu0 %v1763, 96
    %v1866 = vpop.permute.xlu0 %1865
    %v1868 = vsel %vm175, %v1767, 0
    %v1870 = vsel %vm175, %v1866, 0
    %1872 = vmatprep.subr.mxu0 0.0
    %1873 = vmatpush1.xpose.msra.mxu0 0.0
    %1874 = vmatprep.subr.mxu0 0.0
    %1875 = vmatpush1.xpose.msra.mxu0 0.0
    %1876 = vmatprep.subr.mxu0 0.0
    %1877 = vmatpush1.xpose.msra.mxu0 0.0
    %1878 = vmatprep.subr.mxu0 0.0
    %1879 = vmatpush1.xpose.msra.mxu0 0.0
    %1880 = vmatprep.subr.mxu0 0.0
    %1881 = vmatpush1.xpose.msra.mxu0 0.0
    %1882 = vmatprep.subr.mxu0 0.0
    %1883 = vmatpush1.xpose.msra.mxu0 0.0
    %1884 = vmatprep.subr.mxu0 0.0
    %1885 = vmatpush1.xpose.msra.mxu0 0.0
    %1886 = vmatprep.subr.mxu0 0.0
    %1887 = vmatpush1.xpose.msra.mxu0 0.0
    %1888 = vmatprep.subr.mxu0 0.0
    %1889 = vmatpush1.xpose.msra.mxu0 0.0
    %1890 = vmatprep.subr.mxu0 0.0
    %1891 = vmatpush1.xpose.msra.mxu0 0.0
    %1892 = vmatprep.subr.mxu0 0.0
    %1893 = vmatpush1.xpose.msra.mxu0 0.0
    %1894 = vmatprep.subr.mxu0 0.0
    %1895 = vmatpush1.xpose.msra.mxu0 0.0
    %1896 = vmatprep.subr.mxu0 0.0
    %1897 = vmatpush1.xpose.msra.mxu0 0.0
    %1898 = vmatprep.subr.mxu0 0.0
    %1899 = vmatpush1.xpose.msra.mxu0 0.0
    %1900 = vmatprep.subr.mxu0 0.0
    %1901 = vmatpush1.xpose.msra.mxu0 0.0
    %1902 = vmatprep.subr.mxu0 0.0
    %1903 = vmatpush1.xpose.msra.mxu0 %v1870
    %1904 = vmatprep.subr.mxu0 0.0
    %1905 = vmatpush2.xpose.msra.mxu0 0.0
    %1906 = vmatprep.subr.mxu0 0.0
    %1907 = vmatpush2.xpose.msra.mxu0 0.0
    %1908 = vmatprep.subr.mxu0 0.0
    %1909 = vmatpush2.xpose.msra.mxu0 0.0
    %1910 = vmatprep.subr.mxu0 0.0
    %1911 = vmatpush2.xpose.msra.mxu0 0.0
    %1912 = vmatprep.subr.mxu0 0.0
    %1913 = vmatpush2.xpose.msra.mxu0 0.0
    %1914 = vmatprep.subr.mxu0 0.0
    %1915 = vmatpush2.xpose.msra.mxu0 0.0
    %1916 = vmatprep.subr.mxu0 0.0
    %1917 = vmatpush2.xpose.msra.mxu0 0.0
    %1918 = vmatprep.subr.mxu0 0.0
    %1919 = vmatpush2.xpose.msra.mxu0 0.0
    %1920 = vmatprep.subr.mxu0 0.0
    %1921 = vmatpush2.xpose.msra.mxu0 0.0
    %1922 = vmatprep.subr.mxu0 0.0
    %1923 = vmatpush2.xpose.msra.mxu0 0.0
    %1924 = vmatprep.subr.mxu0 0.0
    %1925 = vmatpush2.xpose.msra.mxu0 0.0
    %1926 = vmatprep.subr.mxu0 0.0
    %1927 = vmatpush2.xpose.msra.mxu0 0.0
    %1928 = vmatprep.subr.mxu0 0.0
    %1929 = vmatpush2.xpose.msra.mxu0 0.0
    %1930 = vmatprep.subr.mxu0 0.0
    %1931 = vmatpush2.xpose.msra.mxu0 0.0
    %1932 = vmatprep.subr.mxu0 0.0
    %1933 = vmatpush2.xpose.msra.mxu0 0.0
    %1934 = vmatprep.subr.mxu0 0.0
    %1935 = vmatpush2.xpose.msra.mxu0 0.0
    %1936 = vmatprep.mubr.f32.mxu0 0.0
    %1937 = vmatmul.mubr.f32.gmra.mxu0 %v1868
    %v1938 = vpop.f32.mrf.mxu0
    %v1939 = vadd.f32 %v47, %v1938
    %v1940 = vpop.f32.mrf.mxu0
    %1941 = vdwg.mxu0
    %1942 = vrot.lane.b32.xlu0 %v1777, 96
    %v1943 = vpop.permute.xlu0 %1942
    %v1945 = vsel %vm175, %v1768, 0
    %v1947 = vsel %vm175, %v1943, 0
    %1949 = vmatprep.subr.mxu0 0.0
    %1950 = vmatpush1.xpose.msra.mxu0 0.0
    %1951 = vmatprep.subr.mxu0 0.0
    %1952 = vmatpush1.xpose.msra.mxu0 0.0
    %1953 = vmatprep.subr.mxu0 0.0
    %1954 = vmatpush1.xpose.msra.mxu0 0.0
    %1955 = vmatprep.subr.mxu0 0.0
    %1956 = vmatpush1.xpose.msra.mxu0 0.0
    %1957 = vmatprep.subr.mxu0 0.0
    %1958 = vmatpush1.xpose.msra.mxu0 0.0
    %1959 = vmatprep.subr.mxu0 0.0
    %1960 = vmatpush1.xpose.msra.mxu0 0.0
    %1961 = vmatprep.subr.mxu0 0.0
    %1962 = vmatpush1.xpose.msra.mxu0 0.0
    %1963 = vmatprep.subr.mxu0 0.0
    %1964 = vmatpush1.xpose.msra.mxu0 0.0
    %1965 = vmatprep.subr.mxu0 0.0
    %1966 = vmatpush1.xpose.msra.mxu0 0.0
    %1967 = vmatprep.subr.mxu0 0.0
    %1968 = vmatpush1.xpose.msra.mxu0 0.0
    %1969 = vmatprep.subr.mxu0 0.0
    %1970 = vmatpush1.xpose.msra.mxu0 0.0
    %1971 = vmatprep.subr.mxu0 0.0
    %1972 = vmatpush1.xpose.msra.mxu0 0.0
    %1973 = vmatprep.subr.mxu0 0.0
    %1974 = vmatpush1.xpose.msra.mxu0 0.0
    %1975 = vmatprep.subr.mxu0 0.0
    %1976 = vmatpush1.xpose.msra.mxu0 0.0
    %1977 = vmatprep.subr.mxu0 0.0
    %1978 = vmatpush1.xpose.msra.mxu0 0.0
    %1979 = vmatprep.subr.mxu0 0.0
    %1980 = vmatpush1.xpose.msra.mxu0 %v1947
    %1981 = vmatprep.subr.mxu0 0.0
    %1982 = vmatpush2.xpose.msra.mxu0 0.0
    %1983 = vmatprep.subr.mxu0 0.0
    %1984 = vmatpush2.xpose.msra.mxu0 0.0
    %1985 = vmatprep.subr.mxu0 0.0
    %1986 = vmatpush2.xpose.msra.mxu0 0.0
    %1987 = vmatprep.subr.mxu0 0.0
    %1988 = vmatpush2.xpose.msra.mxu0 0.0
    %1989 = vmatprep.subr.mxu0 0.0
    %1990 = vmatpush2.xpose.msra.mxu0 0.0
    %1991 = vmatprep.subr.mxu0 0.0
    %1992 = vmatpush2.xpose.msra.mxu0 0.0
    %1993 = vmatprep.subr.mxu0 0.0
    %1994 = vmatpush2.xpose.msra.mxu0 0.0
    %1995 = vmatprep.subr.mxu0 0.0
    %1996 = vmatpush2.xpose.msra.mxu0 0.0
    %1997 = vmatprep.subr.mxu0 0.0
    %1998 = vmatpush2.xpose.msra.mxu0 0.0
    %1999 = vmatprep.subr.mxu0 0.0
    %2000 = vmatpush2.xpose.msra.mxu0 0.0
    %2001 = vmatprep.subr.mxu0 0.0
    %2002 = vmatpush2.xpose.msra.mxu0 0.0
    %2003 = vmatprep.subr.mxu0 0.0
    %2004 = vmatpush2.xpose.msra.mxu0 0.0
    %2005 = vmatprep.subr.mxu0 0.0
    %2006 = vmatpush2.xpose.msra.mxu0 0.0
    %2007 = vmatprep.subr.mxu0 0.0
    %2008 = vmatpush2.xpose.msra.mxu0 0.0
    %2009 = vmatprep.subr.mxu0 0.0
    %2010 = vmatpush2.xpose.msra.mxu0 0.0
    %2011 = vmatprep.subr.mxu0 0.0
    %2012 = vmatpush2.xpose.msra.mxu0 0.0
    %2013 = vmatprep.mubr.f32.mxu0 0.0
    %2014 = vmatmul.mubr.f32.gmra.mxu0 %v1945
    %v2015 = vpop.f32.mrf.mxu0
    %v2016 = vadd.f32 %v47, %v2015
    %v2017 = vpop.f32.mrf.mxu0
    %2018 = vdwg.mxu0
    %2019 = vrot.lane.b32.xlu0 %v1779, 96
    %v2020 = vpop.permute.xlu0 %2019
    %v2022 = vsel %vm175, %v1769, 0
    %v2024 = vsel %vm175, %v2020, 0
    %2026 = vmatprep.subr.mxu0 0.0
    %2027 = vmatpush1.xpose.msra.mxu0 0.0
    %2028 = vmatprep.subr.mxu0 0.0
    %2029 = vmatpush1.xpose.msra.mxu0 0.0
    %2030 = vmatprep.subr.mxu0 0.0
    %2031 = vmatpush1.xpose.msra.mxu0 0.0
    %2032 = vmatprep.subr.mxu0 0.0
    %2033 = vmatpush1.xpose.msra.mxu0 0.0
    %2034 = vmatprep.subr.mxu0 0.0
    %2035 = vmatpush1.xpose.msra.mxu0 0.0
    %2036 = vmatprep.subr.mxu0 0.0
    %2037 = vmatpush1.xpose.msra.mxu0 0.0
    %2038 = vmatprep.subr.mxu0 0.0
    %2039 = vmatpush1.xpose.msra.mxu0 0.0
    %2040 = vmatprep.subr.mxu0 0.0
    %2041 = vmatpush1.xpose.msra.mxu0 0.0
    %2042 = vmatprep.subr.mxu0 0.0
    %2043 = vmatpush1.xpose.msra.mxu0 0.0
    %2044 = vmatprep.subr.mxu0 0.0
    %2045 = vmatpush1.xpose.msra.mxu0 0.0
    %2046 = vmatprep.subr.mxu0 0.0
    %2047 = vmatpush1.xpose.msra.mxu0 0.0
    %2048 = vmatprep.subr.mxu0 0.0
    %2049 = vmatpush1.xpose.msra.mxu0 0.0
    %2050 = vmatprep.subr.mxu0 0.0
    %2051 = vmatpush1.xpose.msra.mxu0 0.0
    %2052 = vmatprep.subr.mxu0 0.0
    %2053 = vmatpush1.xpose.msra.mxu0 0.0
    %2054 = vmatprep.subr.mxu0 0.0
    %2055 = vmatpush1.xpose.msra.mxu0 0.0
    %2056 = vmatprep.subr.mxu0 0.0
    %2057 = vmatpush1.xpose.msra.mxu0 %v2024
    %2058 = vmatprep.subr.mxu0 0.0
    %2059 = vmatpush2.xpose.msra.mxu0 0.0
    %2060 = vmatprep.subr.mxu0 0.0
    %2061 = vmatpush2.xpose.msra.mxu0 0.0
    %2062 = vmatprep.subr.mxu0 0.0
    %2063 = vmatpush2.xpose.msra.mxu0 0.0
    %2064 = vmatprep.subr.mxu0 0.0
    %2065 = vmatpush2.xpose.msra.mxu0 0.0
    %2066 = vmatprep.subr.mxu0 0.0
    %2067 = vmatpush2.xpose.msra.mxu0 0.0
    %2068 = vmatprep.subr.mxu0 0.0
    %2069 = vmatpush2.xpose.msra.mxu0 0.0
    %2070 = vmatprep.subr.mxu0 0.0
    %2071 = vmatpush2.xpose.msra.mxu0 0.0
    %2072 = vmatprep.subr.mxu0 0.0
    %2073 = vmatpush2.xpose.msra.mxu0 0.0
    %2074 = vmatprep.subr.mxu0 0.0
    %2075 = vmatpush2.xpose.msra.mxu0 0.0
    %2076 = vmatprep.subr.mxu0 0.0
    %2077 = vmatpush2.xpose.msra.mxu0 0.0
    %2078 = vmatprep.subr.mxu0 0.0
    %2079 = vmatpush2.xpose.msra.mxu0 0.0
    %2080 = vmatprep.subr.mxu0 0.0
    %2081 = vmatpush2.xpose.msra.mxu0 0.0
    %2082 = vmatprep.subr.mxu0 0.0
    %2083 = vmatpush2.xpose.msra.mxu0 0.0
    %2084 = vmatprep.subr.mxu0 0.0
    %2085 = vmatpush2.xpose.msra.mxu0 0.0
    %2086 = vmatprep.subr.mxu0 0.0
    %2087 = vmatpush2.xpose.msra.mxu0 0.0
    %2088 = vmatprep.subr.mxu0 0.0
    %2089 = vmatpush2.xpose.msra.mxu0 0.0
    %2090 = vmatprep.mubr.f32.mxu0 0.0
    %2091 = vmatmul.mubr.f32.gmra.mxu0 %v2022
    %v2092 = vpop.f32.mrf.mxu0
    %v2093 = vadd.f32 %v47, %v2092
    %v2094 = vpop.f32.mrf.mxu0
    %2095 = vdwg.mxu0
    %2096 = vrot.lane.b32.xlu0 %v1781, 96
    %v2097 = vpop.permute.xlu0 %2096
    %v2099 = vsel %vm175, %v1770, 0
    %v2101 = vsel %vm175, %v2097, 0
    %2103 = vmatprep.subr.mxu0 0.0
    %2104 = vmatpush1.xpose.msra.mxu0 0.0
    %2105 = vmatprep.subr.mxu0 0.0
    %2106 = vmatpush1.xpose.msra.mxu0 0.0
    %2107 = vmatprep.subr.mxu0 0.0
    %2108 = vmatpush1.xpose.msra.mxu0 0.0
    %2109 = vmatprep.subr.mxu0 0.0
    %2110 = vmatpush1.xpose.msra.mxu0 0.0
    %2111 = vmatprep.subr.mxu0 0.0
    %2112 = vmatpush1.xpose.msra.mxu0 0.0
    %2113 = vmatprep.subr.mxu0 0.0
    %2114 = vmatpush1.xpose.msra.mxu0 0.0
    %2115 = vmatprep.subr.mxu0 0.0
    %2116 = vmatpush1.xpose.msra.mxu0 0.0
    %2117 = vmatprep.subr.mxu0 0.0
    %2118 = vmatpush1.xpose.msra.mxu0 0.0
    %2119 = vmatprep.subr.mxu0 0.0
    %2120 = vmatpush1.xpose.msra.mxu0 0.0
    %2121 = vmatprep.subr.mxu0 0.0
    %2122 = vmatpush1.xpose.msra.mxu0 0.0
    %2123 = vmatprep.subr.mxu0 0.0
    %2124 = vmatpush1.xpose.msra.mxu0 0.0
    %2125 = vmatprep.subr.mxu0 0.0
    %2126 = vmatpush1.xpose.msra.mxu0 0.0
    %2127 = vmatprep.subr.mxu0 0.0
    %2128 = vmatpush1.xpose.msra.mxu0 0.0
    %2129 = vmatprep.subr.mxu0 0.0
    %2130 = vmatpush1.xpose.msra.mxu0 0.0
    %2131 = vmatprep.subr.mxu0 0.0
    %2132 = vmatpush1.xpose.msra.mxu0 0.0
    %2133 = vmatprep.subr.mxu0 0.0
    %2134 = vmatpush1.xpose.msra.mxu0 %v2101
    %2135 = vmatprep.subr.mxu0 0.0
    %2136 = vmatpush2.xpose.msra.mxu0 0.0
    %2137 = vmatprep.subr.mxu0 0.0
    %2138 = vmatpush2.xpose.msra.mxu0 0.0
    %2139 = vmatprep.subr.mxu0 0.0
    %2140 = vmatpush2.xpose.msra.mxu0 0.0
    %2141 = vmatprep.subr.mxu0 0.0
    %2142 = vmatpush2.xpose.msra.mxu0 0.0
    %2143 = vmatprep.subr.mxu0 0.0
    %2144 = vmatpush2.xpose.msra.mxu0 0.0
    %2145 = vmatprep.subr.mxu0 0.0
    %2146 = vmatpush2.xpose.msra.mxu0 0.0
    %2147 = vmatprep.subr.mxu0 0.0
    %2148 = vmatpush2.xpose.msra.mxu0 0.0
    %2149 = vmatprep.subr.mxu0 0.0
    %2150 = vmatpush2.xpose.msra.mxu0 0.0
    %2151 = vmatprep.subr.mxu0 0.0
    %2152 = vmatpush2.xpose.msra.mxu0 0.0
    %2153 = vmatprep.subr.mxu0 0.0
    %2154 = vmatpush2.xpose.msra.mxu0 0.0
    %2155 = vmatprep.subr.mxu0 0.0
    %2156 = vmatpush2.xpose.msra.mxu0 0.0
    %2157 = vmatprep.subr.mxu0 0.0
    %2158 = vmatpush2.xpose.msra.mxu0 0.0
    %2159 = vmatprep.subr.mxu0 0.0
    %2160 = vmatpush2.xpose.msra.mxu0 0.0
    %2161 = vmatprep.subr.mxu0 0.0
    %2162 = vmatpush2.xpose.msra.mxu0 0.0
    %2163 = vmatprep.subr.mxu0 0.0
    %2164 = vmatpush2.xpose.msra.mxu0 0.0
    %2165 = vmatprep.subr.mxu0 0.0
    %2166 = vmatpush2.xpose.msra.mxu0 0.0
    %2167 = vmatprep.mubr.f32.mxu0 0.0
    %2168 = vmatmul.mubr.f32.gmra.mxu0 %v2099
    %v2169 = vpop.f32.mrf.mxu0
    %v2170 = vadd.f32 %v47, %v2169
    %v2171 = vpop.f32.mrf.mxu0
    %2172 = vdwg.mxu0
    %2173 = vrot.lane.b32.xlu0 %v1783, 96
    %v2174 = vpop.permute.xlu0 %2173
    %v2176 = vsel %vm175, %v1771, 0
    %v2178 = vsel %vm175, %v2174, 0
    %2180 = vmatprep.subr.mxu0 0.0
    %2181 = vmatpush1.xpose.msra.mxu0 0.0
    %2182 = vmatprep.subr.mxu0 0.0
    %2183 = vmatpush1.xpose.msra.mxu0 0.0
    %2184 = vmatprep.subr.mxu0 0.0
    %2185 = vmatpush1.xpose.msra.mxu0 0.0
    %2186 = vmatprep.subr.mxu0 0.0
    %2187 = vmatpush1.xpose.msra.mxu0 0.0
    %2188 = vmatprep.subr.mxu0 0.0
    %2189 = vmatpush1.xpose.msra.mxu0 0.0
    %2190 = vmatprep.subr.mxu0 0.0
    %2191 = vmatpush1.xpose.msra.mxu0 0.0
    %2192 = vmatprep.subr.mxu0 0.0
    %2193 = vmatpush1.xpose.msra.mxu0 0.0
    %2194 = vmatprep.subr.mxu0 0.0
    %2195 = vmatpush1.xpose.msra.mxu0 0.0
    %2196 = vmatprep.subr.mxu0 0.0
    %2197 = vmatpush1.xpose.msra.mxu0 0.0
    %2198 = vmatprep.subr.mxu0 0.0
    %2199 = vmatpush1.xpose.msra.mxu0 0.0
    %2200 = vmatprep.subr.mxu0 0.0
    %2201 = vmatpush1.xpose.msra.mxu0 0.0
    %2202 = vmatprep.subr.mxu0 0.0
    %2203 = vmatpush1.xpose.msra.mxu0 0.0
    %2204 = vmatprep.subr.mxu0 0.0
    %2205 = vmatpush1.xpose.msra.mxu0 0.0
    %2206 = vmatprep.subr.mxu0 0.0
    %2207 = vmatpush1.xpose.msra.mxu0 0.0
    %2208 = vmatprep.subr.mxu0 0.0
    %2209 = vmatpush1.xpose.msra.mxu0 0.0
    %2210 = vmatprep.subr.mxu0 0.0
    %2211 = vmatpush1.xpose.msra.mxu0 %v2178
    %2212 = vmatprep.subr.mxu0 0.0
    %2213 = vmatpush2.xpose.msra.mxu0 0.0
    %2214 = vmatprep.subr.mxu0 0.0
    %2215 = vmatpush2.xpose.msra.mxu0 0.0
    %2216 = vmatprep.subr.mxu0 0.0
    %2217 = vmatpush2.xpose.msra.mxu0 0.0
    %2218 = vmatprep.subr.mxu0 0.0
    %2219 = vmatpush2.xpose.msra.mxu0 0.0
    %2220 = vmatprep.subr.mxu0 0.0
    %2221 = vmatpush2.xpose.msra.mxu0 0.0
    %2222 = vmatprep.subr.mxu0 0.0
    %2223 = vmatpush2.xpose.msra.mxu0 0.0
    %2224 = vmatprep.subr.mxu0 0.0
    %2225 = vmatpush2.xpose.msra.mxu0 0.0
    %2226 = vmatprep.subr.mxu0 0.0
    %2227 = vmatpush2.xpose.msra.mxu0 0.0
    %2228 = vmatprep.subr.mxu0 0.0
    %2229 = vmatpush2.xpose.msra.mxu0 0.0
    %2230 = vmatprep.subr.mxu0 0.0
    %2231 = vmatpush2.xpose.msra.mxu0 0.0
    %2232 = vmatprep.subr.mxu0 0.0
    %2233 = vmatpush2.xpose.msra.mxu0 0.0
    %2234 = vmatprep.subr.mxu0 0.0
    %2235 = vmatpush2.xpose.msra.mxu0 0.0
    %2236 = vmatprep.subr.mxu0 0.0
    %2237 = vmatpush2.xpose.msra.mxu0 0.0
    %2238 = vmatprep.subr.mxu0 0.0
    %2239 = vmatpush2.xpose.msra.mxu0 0.0
    %2240 = vmatprep.subr.mxu0 0.0
    %2241 = vmatpush2.xpose.msra.mxu0 0.0
    %2242 = vmatprep.subr.mxu0 0.0
    %2243 = vmatpush2.xpose.msra.mxu0 0.0
    %2244 = vmatprep.mubr.f32.mxu0 0.0
    %2245 = vmatmul.mubr.f32.gmra.mxu0 %v2176
    %v2246 = vpop.f32.mrf.mxu0
    %v2247 = vadd.f32 %v47, %v2246
    %v2248 = vpop.f32.mrf.mxu0
    %2249 = vdwg.mxu0
    %2250 = vrot.lane.b32.xlu0 %v1785, 96
    %v2251 = vpop.permute.xlu0 %2250
    %v2253 = vsel %vm175, %v1772, 0
    %v2255 = vsel %vm175, %v2251, 0
    %2257 = vmatprep.subr.mxu0 0.0
    %2258 = vmatpush1.xpose.msra.mxu0 0.0
    %2259 = vmatprep.subr.mxu0 0.0
    %2260 = vmatpush1.xpose.msra.mxu0 0.0
    %2261 = vmatprep.subr.mxu0 0.0
    %2262 = vmatpush1.xpose.msra.mxu0 0.0
    %2263 = vmatprep.subr.mxu0 0.0
    %2264 = vmatpush1.xpose.msra.mxu0 0.0
    %2265 = vmatprep.subr.mxu0 0.0
    %2266 = vmatpush1.xpose.msra.mxu0 0.0
    %2267 = vmatprep.subr.mxu0 0.0
    %2268 = vmatpush1.xpose.msra.mxu0 0.0
    %2269 = vmatprep.subr.mxu0 0.0
    %2270 = vmatpush1.xpose.msra.mxu0 0.0
    %2271 = vmatprep.subr.mxu0 0.0
    %2272 = vmatpush1.xpose.msra.mxu0 0.0
    %2273 = vmatprep.subr.mxu0 0.0
    %2274 = vmatpush1.xpose.msra.mxu0 0.0
    %2275 = vmatprep.subr.mxu0 0.0
    %2276 = vmatpush1.xpose.msra.mxu0 0.0
    %2277 = vmatprep.subr.mxu0 0.0
    %2278 = vmatpush1.xpose.msra.mxu0 0.0
    %2279 = vmatprep.subr.mxu0 0.0
    %2280 = vmatpush1.xpose.msra.mxu0 0.0
    %2281 = vmatprep.subr.mxu0 0.0
    %2282 = vmatpush1.xpose.msra.mxu0 0.0
    %2283 = vmatprep.subr.mxu0 0.0
    %2284 = vmatpush1.xpose.msra.mxu0 0.0
    %2285 = vmatprep.subr.mxu0 0.0
    %2286 = vmatpush1.xpose.msra.mxu0 0.0
    %2287 = vmatprep.subr.mxu0 0.0
    %2288 = vmatpush1.xpose.msra.mxu0 %v2255
    %2289 = vmatprep.subr.mxu0 0.0
    %2290 = vmatpush2.xpose.msra.mxu0 0.0
    %2291 = vmatprep.subr.mxu0 0.0
    %2292 = vmatpush2.xpose.msra.mxu0 0.0
    %2293 = vmatprep.subr.mxu0 0.0
    %2294 = vmatpush2.xpose.msra.mxu0 0.0
    %2295 = vmatprep.subr.mxu0 0.0
    %2296 = vmatpush2.xpose.msra.mxu0 0.0
    %2297 = vmatprep.subr.mxu0 0.0
    %2298 = vmatpush2.xpose.msra.mxu0 0.0
    %2299 = vmatprep.subr.mxu0 0.0
    %2300 = vmatpush2.xpose.msra.mxu0 0.0
    %2301 = vmatprep.subr.mxu0 0.0
    %2302 = vmatpush2.xpose.msra.mxu0 0.0
    %2303 = vmatprep.subr.mxu0 0.0
    %2304 = vmatpush2.xpose.msra.mxu0 0.0
    %2305 = vmatprep.subr.mxu0 0.0
    %2306 = vmatpush2.xpose.msra.mxu0 0.0
    %2307 = vmatprep.subr.mxu0 0.0
    %2308 = vmatpush2.xpose.msra.mxu0 0.0
    %2309 = vmatprep.subr.mxu0 0.0
    %2310 = vmatpush2.xpose.msra.mxu0 0.0
    %2311 = vmatprep.subr.mxu0 0.0
    %2312 = vmatpush2.xpose.msra.mxu0 0.0
    %2313 = vmatprep.subr.mxu0 0.0
    %2314 = vmatpush2.xpose.msra.mxu0 0.0
    %2315 = vmatprep.subr.mxu0 0.0
    %2316 = vmatpush2.xpose.msra.mxu0 0.0
    %2317 = vmatprep.subr.mxu0 0.0
    %2318 = vmatpush2.xpose.msra.mxu0 0.0
    %2319 = vmatprep.subr.mxu0 0.0
    %2320 = vmatpush2.xpose.msra.mxu0 0.0
    %2321 = vmatprep.mubr.f32.mxu0 0.0
    %2322 = vmatmul.mubr.f32.gmra.mxu0 %v2253
    %v2323 = vpop.f32.mrf.mxu0
    %v2324 = vadd.f32 %v47, %v2323
    %v2325 = vpop.f32.mrf.mxu0
    %2326 = vdwg.mxu0
    %2327 = vrot.lane.b32.xlu0 %v1787, 96
    %v2328 = vpop.permute.xlu0 %2327
    %v2330 = vsel %vm175, %v1773, 0
    %v2332 = vsel %vm175, %v2328, 0
    %2334 = vmatprep.subr.mxu0 0.0
    %2335 = vmatpush1.xpose.msra.mxu0 0.0
    %2336 = vmatprep.subr.mxu0 0.0
    %2337 = vmatpush1.xpose.msra.mxu0 0.0
    %2338 = vmatprep.subr.mxu0 0.0
    %2339 = vmatpush1.xpose.msra.mxu0 0.0
    %2340 = vmatprep.subr.mxu0 0.0
    %2341 = vmatpush1.xpose.msra.mxu0 0.0
    %2342 = vmatprep.subr.mxu0 0.0
    %2343 = vmatpush1.xpose.msra.mxu0 0.0
    %2344 = vmatprep.subr.mxu0 0.0
    %2345 = vmatpush1.xpose.msra.mxu0 0.0
    %2346 = vmatprep.subr.mxu0 0.0
    %2347 = vmatpush1.xpose.msra.mxu0 0.0
    %2348 = vmatprep.subr.mxu0 0.0
    %2349 = vmatpush1.xpose.msra.mxu0 0.0
    %2350 = vmatprep.subr.mxu0 0.0
    %2351 = vmatpush1.xpose.msra.mxu0 0.0
    %2352 = vmatprep.subr.mxu0 0.0
    %2353 = vmatpush1.xpose.msra.mxu0 0.0
    %2354 = vmatprep.subr.mxu0 0.0
    %2355 = vmatpush1.xpose.msra.mxu0 0.0
    %2356 = vmatprep.subr.mxu0 0.0
    %2357 = vmatpush1.xpose.msra.mxu0 0.0
    %2358 = vmatprep.subr.mxu0 0.0
    %2359 = vmatpush1.xpose.msra.mxu0 0.0
    %2360 = vmatprep.subr.mxu0 0.0
    %2361 = vmatpush1.xpose.msra.mxu0 0.0
    %2362 = vmatprep.subr.mxu0 0.0
    %2363 = vmatpush1.xpose.msra.mxu0 0.0
    %2364 = vmatprep.subr.mxu0 0.0
    %2365 = vmatpush1.xpose.msra.mxu0 %v2332
    %2366 = vmatprep.subr.mxu0 0.0
    %2367 = vmatpush2.xpose.msra.mxu0 0.0
    %2368 = vmatprep.subr.mxu0 0.0
    %2369 = vmatpush2.xpose.msra.mxu0 0.0
    %2370 = vmatprep.subr.mxu0 0.0
    %2371 = vmatpush2.xpose.msra.mxu0 0.0
    %2372 = vmatprep.subr.mxu0 0.0
    %2373 = vmatpush2.xpose.msra.mxu0 0.0
    %2374 = vmatprep.subr.mxu0 0.0
    %2375 = vmatpush2.xpose.msra.mxu0 0.0
    %2376 = vmatprep.subr.mxu0 0.0
    %2377 = vmatpush2.xpose.msra.mxu0 0.0
    %2378 = vmatprep.subr.mxu0 0.0
    %2379 = vmatpush2.xpose.msra.mxu0 0.0
    %2380 = vmatprep.subr.mxu0 0.0
    %2381 = vmatpush2.xpose.msra.mxu0 0.0
    %2382 = vmatprep.subr.mxu0 0.0
    %2383 = vmatpush2.xpose.msra.mxu0 0.0
    %2384 = vmatprep.subr.mxu0 0.0
    %2385 = vmatpush2.xpose.msra.mxu0 0.0
    %2386 = vmatprep.subr.mxu0 0.0
    %2387 = vmatpush2.xpose.msra.mxu0 0.0
    %2388 = vmatprep.subr.mxu0 0.0
    %2389 = vmatpush2.xpose.msra.mxu0 0.0
    %2390 = vmatprep.subr.mxu0 0.0
    %2391 = vmatpush2.xpose.msra.mxu0 0.0
    %2392 = vmatprep.subr.mxu0 0.0
    %2393 = vmatpush2.xpose.msra.mxu0 0.0
    %2394 = vmatprep.subr.mxu0 0.0
    %2395 = vmatpush2.xpose.msra.mxu0 0.0
    %2396 = vmatprep.subr.mxu0 0.0
    %2397 = vmatpush2.xpose.msra.mxu0 0.0
    %2398 = vmatprep.mubr.f32.mxu0 0.0
    %2399 = vmatmul.mubr.f32.gmra.mxu0 %v2330
    %v2400 = vpop.f32.mrf.mxu0
    %v2401 = vadd.f32 %v47, %v2400
    %v2402 = vpop.f32.mrf.mxu0
    %2403 = vdwg.mxu0
    %v2404 = vsel %vm175, %v1862, -inf
    %2405 = vmax.xlane.f32.xlu0 %v2404
    %v2406 = vpop.xlane.xlu0 %2405
    %v2407 = vsel %vm175, %v1939, -inf
    %2408 = vmax.xlane.f32.xlu0 %v2407
    %v2409 = vpop.xlane.xlu0 %2408
    %v2410 = vsel %vm175, %v2016, -inf
    %2411 = vmax.xlane.f32.xlu0 %v2410
    %v2412 = vpop.xlane.xlu0 %2411
    %v2413 = vsel %vm175, %v2093, -inf
    %2414 = vmax.xlane.f32.xlu0 %v2413
    %v2415 = vpop.xlane.xlu0 %2414
    %v2416 = vsel %vm175, %v2170, -inf
    %2417 = vmax.xlane.f32.xlu0 %v2416
    %v2418 = vpop.xlane.xlu0 %2417
    %v2419 = vsel %vm175, %v2247, -inf
    %2420 = vmax.xlane.f32.xlu0 %v2419
    %v2421 = vpop.xlane.xlu0 %2420
    %v2422 = vsel %vm175, %v2324, -inf
    %2423 = vmax.xlane.f32.xlu0 %v2422
    %v2424 = vpop.xlane.xlu0 %2423
    %v2425 = vsel %vm175, %v2401, -inf
    %2426 = vmax.xlane.f32.xlu0 %v2425
    %v2427 = vpop.xlane.xlu0 %2426
    %v2428 = vsub.f32 %v1862, %v2406
    %v2429 = vsub.f32 %v1939, %v2409
    %v2430 = vsub.f32 %v2016, %v2412
    %v2431 = vsub.f32 %v2093, %v2415
    %v2432 = vsub.f32 %v2170, %v2418
    %v2433 = vsub.f32 %v2247, %v2421
    %v2434 = vsub.f32 %v2324, %v2424
    %v2435 = vsub.f32 %v2401, %v2427
    %v2436 = vmul.f32 %v2428, 1.442695
    %v2437 = vpow.pop %v2436
    %v2438 = vmul.f32 %v2429, 1.442695
    %v2439 = vpow.pop %v2438
    %v2440 = vmul.f32 %v2430, 1.442695
    %v2441 = vpow.pop %v2440
    %v2442 = vmul.f32 %v2431, 1.442695
    %v2443 = vpow.pop %v2442
    %v2444 = vmul.f32 %v2432, 1.442695
    %v2445 = vpow.pop %v2444
    %v2446 = vmul.f32 %v2433, 1.442695
    %v2447 = vpow.pop %v2446
    %v2448 = vmul.f32 %v2434, 1.442695
    %v2449 = vpow.pop %v2448
    %v2450 = vmul.f32 %v2435, 1.442695
    %v2451 = vpow.pop %v2450
    %v2452 = vsel %vm175, %v2437, 0.0
    %2453 = vadd.xlane.f32.xlu0 %v2452
    %v2454 = vpop.xlane.xlu0 %2453
    %v2455 = vsel %vm175, %v2439, 0.0
    %2456 = vadd.xlane.f32.xlu0 %v2455
    %v2457 = vpop.xlane.xlu0 %2456
    %v2458 = vsel %vm175, %v2441, 0.0
    %2459 = vadd.xlane.f32.xlu0 %v2458
    %v2460 = vpop.xlane.xlu0 %2459
    %v2461 = vsel %vm175, %v2443, 0.0
    %2462 = vadd.xlane.f32.xlu0 %v2461
    %v2463 = vpop.xlane.xlu0 %2462
    %v2464 = vsel %vm175, %v2445, 0.0
    %2465 = vadd.xlane.f32.xlu0 %v2464
    %v2466 = vpop.xlane.xlu0 %2465
    %v2467 = vsel %vm175, %v2447, 0.0
    %2468 = vadd.xlane.f32.xlu0 %v2467
    %v2469 = vpop.xlane.xlu0 %2468
    %v2470 = vsel %vm175, %v2449, 0.0
    %2471 = vadd.xlane.f32.xlu0 %v2470
    %v2472 = vpop.xlane.xlu0 %2471
    %v2473 = vsel %vm175, %v2451, 0.0
    %2474 = vadd.xlane.f32.xlu0 %v2473
    %v2475 = vpop.xlane.xlu0 %2474
    %v2476 = vrcp.pop %v2454
    %v2477 = vmul.f32 %v2437, %v2476
    %v2478 = vrcp.pop %v2457
    %v2479 = vmul.f32 %v2439, %v2478
    %v2480 = vrcp.pop %v2460
    %v2481 = vmul.f32 %v2441, %v2480
    %v2482 = vrcp.pop %v2463
    %v2483 = vmul.f32 %v2443, %v2482
    %v2484 = vrcp.pop %v2466
    %v2485 = vmul.f32 %v2445, %v2484
    %v2486 = vrcp.pop %v2469
    %v2487 = vmul.f32 %v2447, %v2486
    %v2488 = vrcp.pop %v2472
    %v2489 = vmul.f32 %v2449, %v2488
    %v2490 = vrcp.pop %v2475
    %v2491 = vmul.f32 %v2451, %v2490
    %2492 = vrot.lane.b32.xlu0 %v1758, 64
    %v2493 = vpop.permute.xlu0 %2492
    %v2496 = vsel %vm175, %v2477, 0
    %2498 = vmatprep.subr.mxu0 0.0
    %2499 = vmatpush1.msra.mxu0 0.0
    %2500 = vmatprep.subr.mxu0 0.0
    %2501 = vmatpush1.msra.mxu0 0.0
    %2502 = vmatprep.subr.mxu0 0.0
    %2503 = vmatpush1.msra.mxu0 0.0
    %2504 = vmatprep.subr.mxu0 0.0
    %2505 = vmatpush1.msra.mxu0 0.0
    %2506 = vmatprep.subr.mxu0 0.0
    %2507 = vmatpush1.msra.mxu0 0.0
    %2508 = vmatprep.subr.mxu0 0.0
    %2509 = vmatpush1.msra.mxu0 0.0
    %2510 = vmatprep.subr.mxu0 0.0
    %2511 = vmatpush1.msra.mxu0 0.0
    %2512 = vmatprep.subr.mxu0 0.0
    %2513 = vmatpush1.msra.mxu0 0.0
    %2514 = vmatprep.subr.mxu0 0.0
    %2515 = vmatpush1.msra.mxu0 0.0
    %2516 = vmatprep.subr.mxu0 0.0
    %2517 = vmatpush1.msra.mxu0 0.0
    %2518 = vmatprep.subr.mxu0 0.0
    %2519 = vmatpush1.msra.mxu0 0.0
    %2520 = vmatprep.subr.mxu0 0.0
    %2521 = vmatpush1.msra.mxu0 0.0
    %2522 = vmatprep.subr.mxu0 0.0
    %2523 = vmatpush1.msra.mxu0 0.0
    %2524 = vmatprep.subr.mxu0 0.0
    %2525 = vmatpush1.msra.mxu0 0.0
    %2526 = vmatprep.subr.mxu0 0.0
    %2527 = vmatpush1.msra.mxu0 0.0
    %2528 = vmatprep.subr.mxu0 0.0
    %2529 = vmatpush1.msra.mxu0 %v2493
    %2530 = vmatprep.subr.mxu0 0.0
    %2531 = vmatpush2.msra.mxu0 0.0
    %2532 = vmatprep.subr.mxu0 0.0
    %2533 = vmatpush2.msra.mxu0 0.0
    %2534 = vmatprep.subr.mxu0 0.0
    %2535 = vmatpush2.msra.mxu0 0.0
    %2536 = vmatprep.subr.mxu0 0.0
    %2537 = vmatpush2.msra.mxu0 0.0
    %2538 = vmatprep.subr.mxu0 0.0
    %2539 = vmatpush2.msra.mxu0 0.0
    %2540 = vmatprep.subr.mxu0 0.0
    %2541 = vmatpush2.msra.mxu0 0.0
    %2542 = vmatprep.subr.mxu0 0.0
    %2543 = vmatpush2.msra.mxu0 0.0
    %2544 = vmatprep.subr.mxu0 0.0
    %2545 = vmatpush2.msra.mxu0 0.0
    %2546 = vmatprep.subr.mxu0 0.0
    %2547 = vmatpush2.msra.mxu0 0.0
    %2548 = vmatprep.subr.mxu0 0.0
    %2549 = vmatpush2.msra.mxu0 0.0
    %2550 = vmatprep.subr.mxu0 0.0
    %2551 = vmatpush2.msra.mxu0 0.0
    %2552 = vmatprep.subr.mxu0 0.0
    %2553 = vmatpush2.msra.mxu0 0.0
    %2554 = vmatprep.subr.mxu0 0.0
    %2555 = vmatpush2.msra.mxu0 0.0
    %2556 = vmatprep.subr.mxu0 0.0
    %2557 = vmatpush2.msra.mxu0 0.0
    %2558 = vmatprep.subr.mxu0 0.0
    %2559 = vmatpush2.msra.mxu0 0.0
    %2560 = vmatprep.subr.mxu0 0.0
    %2561 = vmatpush2.msra.mxu0 0.0
    %2562 = vmatprep.mubr.f32.mxu0 0.0
    %2563 = vmatmul.mubr.f32.gmra.mxu0 %v2496
    %v2564 = vpop.f32.mrf.mxu0
    %v2565 = vadd.f32 0.0, %v2564
    %v2566 = vpop.f32.mrf.mxu0
    %2567 = vdwg.mxu0
    %2568 = vrot.lane.b32.xlu0 %v1763, 64
    %v2569 = vpop.permute.xlu0 %2568
    %v2572 = vsel %vm175, %v2479, 0
    %2574 = vmatprep.subr.mxu0 0.0
    %2575 = vmatpush1.msra.mxu0 0.0
    %2576 = vmatprep.subr.mxu0 0.0
    %2577 = vmatpush1.msra.mxu0 0.0
    %2578 = vmatprep.subr.mxu0 0.0
    %2579 = vmatpush1.msra.mxu0 0.0
    %2580 = vmatprep.subr.mxu0 0.0
    %2581 = vmatpush1.msra.mxu0 0.0
    %2582 = vmatprep.subr.mxu0 0.0
    %2583 = vmatpush1.msra.mxu0 0.0
    %2584 = vmatprep.subr.mxu0 0.0
    %2585 = vmatpush1.msra.mxu0 0.0
    %2586 = vmatprep.subr.mxu0 0.0
    %2587 = vmatpush1.msra.mxu0 0.0
    %2588 = vmatprep.subr.mxu0 0.0
    %2589 = vmatpush1.msra.mxu0 0.0
    %2590 = vmatprep.subr.mxu0 0.0
    %2591 = vmatpush1.msra.mxu0 0.0
    %2592 = vmatprep.subr.mxu0 0.0
    %2593 = vmatpush1.msra.mxu0 0.0
    %2594 = vmatprep.subr.mxu0 0.0
    %2595 = vmatpush1.msra.mxu0 0.0
    %2596 = vmatprep.subr.mxu0 0.0
    %2597 = vmatpush1.msra.mxu0 0.0
    %2598 = vmatprep.subr.mxu0 0.0
    %2599 = vmatpush1.msra.mxu0 0.0
    %2600 = vmatprep.subr.mxu0 0.0
    %2601 = vmatpush1.msra.mxu0 0.0
    %2602 = vmatprep.subr.mxu0 0.0
    %2603 = vmatpush1.msra.mxu0 0.0
    %2604 = vmatprep.subr.mxu0 0.0
    %2605 = vmatpush1.msra.mxu0 %v2569
    %2606 = vmatprep.subr.mxu0 0.0
    %2607 = vmatpush2.msra.mxu0 0.0
    %2608 = vmatprep.subr.mxu0 0.0
    %2609 = vmatpush2.msra.mxu0 0.0
    %2610 = vmatprep.subr.mxu0 0.0
    %2611 = vmatpush2.msra.mxu0 0.0
    %2612 = vmatprep.subr.mxu0 0.0
    %2613 = vmatpush2.msra.mxu0 0.0
    %2614 = vmatprep.subr.mxu0 0.0
    %2615 = vmatpush2.msra.mxu0 0.0
    %2616 = vmatprep.subr.mxu0 0.0
    %2617 = vmatpush2.msra.mxu0 0.0
    %2618 = vmatprep.subr.mxu0 0.0
    %2619 = vmatpush2.msra.mxu0 0.0
    %2620 = vmatprep.subr.mxu0 0.0
    %2621 = vmatpush2.msra.mxu0 0.0
    %2622 = vmatprep.subr.mxu0 0.0
    %2623 = vmatpush2.msra.mxu0 0.0
    %2624 = vmatprep.subr.mxu0 0.0
    %2625 = vmatpush2.msra.mxu0 0.0
    %2626 = vmatprep.subr.mxu0 0.0
    %2627 = vmatpush2.msra.mxu0 0.0
    %2628 = vmatprep.subr.mxu0 0.0
    %2629 = vmatpush2.msra.mxu0 0.0
    %2630 = vmatprep.subr.mxu0 0.0
    %2631 = vmatpush2.msra.mxu0 0.0
    %2632 = vmatprep.subr.mxu0 0.0
    %2633 = vmatpush2.msra.mxu0 0.0
    %2634 = vmatprep.subr.mxu0 0.0
    %2635 = vmatpush2.msra.mxu0 0.0
    %2636 = vmatprep.subr.mxu0 0.0
    %2637 = vmatpush2.msra.mxu0 0.0
    %2638 = vmatprep.mubr.f32.mxu0 0.0
    %2639 = vmatmul.mubr.f32.gmra.mxu0 %v2572
    %v2640 = vpop.f32.mrf.mxu0
    %v2641 = vadd.f32 0.0, %v2640
    %v2642 = vpop.f32.mrf.mxu0
    %2643 = vdwg.mxu0
    %2644 = vrot.lane.b32.xlu0 %v1777, 64
    %v2645 = vpop.permute.xlu0 %2644
    %v2648 = vsel %vm175, %v2481, 0
    %2650 = vmatprep.subr.mxu0 0.0
    %2651 = vmatpush1.msra.mxu0 0.0
    %2652 = vmatprep.subr.mxu0 0.0
    %2653 = vmatpush1.msra.mxu0 0.0
    %2654 = vmatprep.subr.mxu0 0.0
    %2655 = vmatpush1.msra.mxu0 0.0
    %2656 = vmatprep.subr.mxu0 0.0
    %2657 = vmatpush1.msra.mxu0 0.0
    %2658 = vmatprep.subr.mxu0 0.0
    %2659 = vmatpush1.msra.mxu0 0.0
    %2660 = vmatprep.subr.mxu0 0.0
    %2661 = vmatpush1.msra.mxu0 0.0
    %2662 = vmatprep.subr.mxu0 0.0
    %2663 = vmatpush1.msra.mxu0 0.0
    %2664 = vmatprep.subr.mxu0 0.0
    %2665 = vmatpush1.msra.mxu0 0.0
    %2666 = vmatprep.subr.mxu0 0.0
    %2667 = vmatpush1.msra.mxu0 0.0
    %2668 = vmatprep.subr.mxu0 0.0
    %2669 = vmatpush1.msra.mxu0 0.0
    %2670 = vmatprep.subr.mxu0 0.0
    %2671 = vmatpush1.msra.mxu0 0.0
    %2672 = vmatprep.subr.mxu0 0.0
    %2673 = vmatpush1.msra.mxu0 0.0
    %2674 = vmatprep.subr.mxu0 0.0
    %2675 = vmatpush1.msra.mxu0 0.0
    %2676 = vmatprep.subr.mxu0 0.0
    %2677 = vmatpush1.msra.mxu0 0.0
    %2678 = vmatprep.subr.mxu0 0.0
    %2679 = vmatpush1.msra.mxu0 0.0
    %2680 = vmatprep.subr.mxu0 0.0
    %2681 = vmatpush1.msra.mxu0 %v2645
    %2682 = vmatprep.subr.mxu0 0.0
    %2683 = vmatpush2.msra.mxu0 0.0
    %2684 = vmatprep.subr.mxu0 0.0
    %2685 = vmatpush2.msra.mxu0 0.0
    %2686 = vmatprep.subr.mxu0 0.0
    %2687 = vmatpush2.msra.mxu0 0.0
    %2688 = vmatprep.subr.mxu0 0.0
    %2689 = vmatpush2.msra.mxu0 0.0
    %2690 = vmatprep.subr.mxu0 0.0
    %2691 = vmatpush2.msra.mxu0 0.0
    %2692 = vmatprep.subr.mxu0 0.0
    %2693 = vmatpush2.msra.mxu0 0.0
    %2694 = vmatprep.subr.mxu0 0.0
    %2695 = vmatpush2.msra.mxu0 0.0
    %2696 = vmatprep.subr.mxu0 0.0
    %2697 = vmatpush2.msra.mxu0 0.0
    %2698 = vmatprep.subr.mxu0 0.0
    %2699 = vmatpush2.msra.mxu0 0.0
    %2700 = vmatprep.subr.mxu0 0.0
    %2701 = vmatpush2.msra.mxu0 0.0
    %2702 = vmatprep.subr.mxu0 0.0
    %2703 = vmatpush2.msra.mxu0 0.0
    %2704 = vmatprep.subr.mxu0 0.0
    %2705 = vmatpush2.msra.mxu0 0.0
    %2706 = vmatprep.subr.mxu0 0.0
    %2707 = vmatpush2.msra.mxu0 0.0
    %2708 = vmatprep.subr.mxu0 0.0
    %2709 = vmatpush2.msra.mxu0 0.0
    %2710 = vmatprep.subr.mxu0 0.0
    %2711 = vmatpush2.msra.mxu0 0.0
    %2712 = vmatprep.subr.mxu0 0.0
    %2713 = vmatpush2.msra.mxu0 0.0
    %2714 = vmatprep.mubr.f32.mxu0 0.0
    %2715 = vmatmul.mubr.f32.gmra.mxu0 %v2648
    %v2716 = vpop.f32.mrf.mxu0
    %v2717 = vadd.f32 0.0, %v2716
    %v2718 = vpop.f32.mrf.mxu0
    %2719 = vdwg.mxu0
    %2720 = vrot.lane.b32.xlu0 %v1779, 64
    %v2721 = vpop.permute.xlu0 %2720
    %v2724 = vsel %vm175, %v2483, 0
    %2726 = vmatprep.subr.mxu0 0.0
    %2727 = vmatpush1.msra.mxu0 0.0
    %2728 = vmatprep.subr.mxu0 0.0
    %2729 = vmatpush1.msra.mxu0 0.0
    %2730 = vmatprep.subr.mxu0 0.0
    %2731 = vmatpush1.msra.mxu0 0.0
    %2732 = vmatprep.subr.mxu0 0.0
    %2733 = vmatpush1.msra.mxu0 0.0
    %2734 = vmatprep.subr.mxu0 0.0
    %2735 = vmatpush1.msra.mxu0 0.0
    %2736 = vmatprep.subr.mxu0 0.0
    %2737 = vmatpush1.msra.mxu0 0.0
    %2738 = vmatprep.subr.mxu0 0.0
    %2739 = vmatpush1.msra.mxu0 0.0
    %2740 = vmatprep.subr.mxu0 0.0
    %2741 = vmatpush1.msra.mxu0 0.0
    %2742 = vmatprep.subr.mxu0 0.0
    %2743 = vmatpush1.msra.mxu0 0.0
    %2744 = vmatprep.subr.mxu0 0.0
    %2745 = vmatpush1.msra.mxu0 0.0
    %2746 = vmatprep.subr.mxu0 0.0
    %2747 = vmatpush1.msra.mxu0 0.0
    %2748 = vmatprep.subr.mxu0 0.0
    %2749 = vmatpush1.msra.mxu0 0.0
    %2750 = vmatprep.subr.mxu0 0.0
    %2751 = vmatpush1.msra.mxu0 0.0
    %2752 = vmatprep.subr.mxu0 0.0
    %2753 = vmatpush1.msra.mxu0 0.0
    %2754 = vmatprep.subr.mxu0 0.0
    %2755 = vmatpush1.msra.mxu0 0.0
    %2756 = vmatprep.subr.mxu0 0.0
    %2757 = vmatpush1.msra.mxu0 %v2721
    %2758 = vmatprep.subr.mxu0 0.0
    %2759 = vmatpush2.msra.mxu0 0.0
    %2760 = vmatprep.subr.mxu0 0.0
    %2761 = vmatpush2.msra.mxu0 0.0
    %2762 = vmatprep.subr.mxu0 0.0
    %2763 = vmatpush2.msra.mxu0 0.0
    %2764 = vmatprep.subr.mxu0 0.0
    %2765 = vmatpush2.msra.mxu0 0.0
    %2766 = vmatprep.subr.mxu0 0.0
    %2767 = vmatpush2.msra.mxu0 0.0
    %2768 = vmatprep.subr.mxu0 0.0
    %2769 = vmatpush2.msra.mxu0 0.0
    %2770 = vmatprep.subr.mxu0 0.0
    %2771 = vmatpush2.msra.mxu0 0.0
    %2772 = vmatprep.subr.mxu0 0.0
    %2773 = vmatpush2.msra.mxu0 0.0
    %2774 = vmatprep.subr.mxu0 0.0
    %2775 = vmatpush2.msra.mxu0 0.0
    %2776 = vmatprep.subr.mxu0 0.0
    %2777 = vmatpush2.msra.mxu0 0.0
    %2778 = vmatprep.subr.mxu0 0.0
    %2779 = vmatpush2.msra.mxu0 0.0
    %2780 = vmatprep.subr.mxu0 0.0
    %2781 = vmatpush2.msra.mxu0 0.0
    %2782 = vmatprep.subr.mxu0 0.0
    %2783 = vmatpush2.msra.mxu0 0.0
    %2784 = vmatprep.subr.mxu0 0.0
    %2785 = vmatpush2.msra.mxu0 0.0
    %2786 = vmatprep.subr.mxu0 0.0
    %2787 = vmatpush2.msra.mxu0 0.0
    %2788 = vmatprep.subr.mxu0 0.0
    %2789 = vmatpush2.msra.mxu0 0.0
    %2790 = vmatprep.mubr.f32.mxu0 0.0
    %2791 = vmatmul.mubr.f32.gmra.mxu0 %v2724
    %v2792 = vpop.f32.mrf.mxu0
    %v2793 = vadd.f32 0.0, %v2792
    %v2794 = vpop.f32.mrf.mxu0
    %2795 = vdwg.mxu0
    %2796 = vrot.lane.b32.xlu0 %v1781, 64
    %v2797 = vpop.permute.xlu0 %2796
    %v2800 = vsel %vm175, %v2485, 0
    %2802 = vmatprep.subr.mxu0 0.0
    %2803 = vmatpush1.msra.mxu0 0.0
    %2804 = vmatprep.subr.mxu0 0.0
    %2805 = vmatpush1.msra.mxu0 0.0
    %2806 = vmatprep.subr.mxu0 0.0
    %2807 = vmatpush1.msra.mxu0 0.0
    %2808 = vmatprep.subr.mxu0 0.0
    %2809 = vmatpush1.msra.mxu0 0.0
    %2810 = vmatprep.subr.mxu0 0.0
    %2811 = vmatpush1.msra.mxu0 0.0
    %2812 = vmatprep.subr.mxu0 0.0
    %2813 = vmatpush1.msra.mxu0 0.0
    %2814 = vmatprep.subr.mxu0 0.0
    %2815 = vmatpush1.msra.mxu0 0.0
    %2816 = vmatprep.subr.mxu0 0.0
    %2817 = vmatpush1.msra.mxu0 0.0
    %2818 = vmatprep.subr.mxu0 0.0
    %2819 = vmatpush1.msra.mxu0 0.0
    %2820 = vmatprep.subr.mxu0 0.0
    %2821 = vmatpush1.msra.mxu0 0.0
    %2822 = vmatprep.subr.mxu0 0.0
    %2823 = vmatpush1.msra.mxu0 0.0
    %2824 = vmatprep.subr.mxu0 0.0
    %2825 = vmatpush1.msra.mxu0 0.0
    %2826 = vmatprep.subr.mxu0 0.0
    %2827 = vmatpush1.msra.mxu0 0.0
    %2828 = vmatprep.subr.mxu0 0.0
    %2829 = vmatpush1.msra.mxu0 0.0
    %2830 = vmatprep.subr.mxu0 0.0
    %2831 = vmatpush1.msra.mxu0 0.0
    %2832 = vmatprep.subr.mxu0 0.0
    %2833 = vmatpush1.msra.mxu0 %v2797
    %2834 = vmatprep.subr.mxu0 0.0
    %2835 = vmatpush2.msra.mxu0 0.0
    %2836 = vmatprep.subr.mxu0 0.0
    %2837 = vmatpush2.msra.mxu0 0.0
    %2838 = vmatprep.subr.mxu0 0.0
    %2839 = vmatpush2.msra.mxu0 0.0
    %2840 = vmatprep.subr.mxu0 0.0
    %2841 = vmatpush2.msra.mxu0 0.0
    %2842 = vmatprep.subr.mxu0 0.0
    %2843 = vmatpush2.msra.mxu0 0.0
    %2844 = vmatprep.subr.mxu0 0.0
    %2845 = vmatpush2.msra.mxu0 0.0
    %2846 = vmatprep.subr.mxu0 0.0
    %2847 = vmatpush2.msra.mxu0 0.0
    %2848 = vmatprep.subr.mxu0 0.0
    %2849 = vmatpush2.msra.mxu0 0.0
    %2850 = vmatprep.subr.mxu0 0.0
    %2851 = vmatpush2.msra.mxu0 0.0
    %2852 = vmatprep.subr.mxu0 0.0
    %2853 = vmatpush2.msra.mxu0 0.0
    %2854 = vmatprep.subr.mxu0 0.0
    %2855 = vmatpush2.msra.mxu0 0.0
    %2856 = vmatprep.subr.mxu0 0.0
    %2857 = vmatpush2.msra.mxu0 0.0
    %2858 = vmatprep.subr.mxu0 0.0
    %2859 = vmatpush2.msra.mxu0 0.0
    %2860 = vmatprep.subr.mxu0 0.0
    %2861 = vmatpush2.msra.mxu0 0.0
    %2862 = vmatprep.subr.mxu0 0.0
    %2863 = vmatpush2.msra.mxu0 0.0
    %2864 = vmatprep.subr.mxu0 0.0
    %2865 = vmatpush2.msra.mxu0 0.0
    %2866 = vmatprep.mubr.f32.mxu0 0.0
    %2867 = vmatmul.mubr.f32.gmra.mxu0 %v2800
    %v2868 = vpop.f32.mrf.mxu0
    %v2869 = vadd.f32 0.0, %v2868
    %v2870 = vpop.f32.mrf.mxu0
    %2871 = vdwg.mxu0
    %2872 = vrot.lane.b32.xlu0 %v1783, 64
    %v2873 = vpop.permute.xlu0 %2872
    %v2876 = vsel %vm175, %v2487, 0
    %2878 = vmatprep.subr.mxu0 0.0
    %2879 = vmatpush1.msra.mxu0 0.0
    %2880 = vmatprep.subr.mxu0 0.0
    %2881 = vmatpush1.msra.mxu0 0.0
    %2882 = vmatprep.subr.mxu0 0.0
    %2883 = vmatpush1.msra.mxu0 0.0
    %2884 = vmatprep.subr.mxu0 0.0
    %2885 = vmatpush1.msra.mxu0 0.0
    %2886 = vmatprep.subr.mxu0 0.0
    %2887 = vmatpush1.msra.mxu0 0.0
    %2888 = vmatprep.subr.mxu0 0.0
    %2889 = vmatpush1.msra.mxu0 0.0
    %2890 = vmatprep.subr.mxu0 0.0
    %2891 = vmatpush1.msra.mxu0 0.0
    %2892 = vmatprep.subr.mxu0 0.0
    %2893 = vmatpush1.msra.mxu0 0.0
    %2894 = vmatprep.subr.mxu0 0.0
    %2895 = vmatpush1.msra.mxu0 0.0
    %2896 = vmatprep.subr.mxu0 0.0
    %2897 = vmatpush1.msra.mxu0 0.0
    %2898 = vmatprep.subr.mxu0 0.0
    %2899 = vmatpush1.msra.mxu0 0.0
    %2900 = vmatprep.subr.mxu0 0.0
    %2901 = vmatpush1.msra.mxu0 0.0
    %2902 = vmatprep.subr.mxu0 0.0
    %2903 = vmatpush1.msra.mxu0 0.0
    %2904 = vmatprep.subr.mxu0 0.0
    %2905 = vmatpush1.msra.mxu0 0.0
    %2906 = vmatprep.subr.mxu0 0.0
    %2907 = vmatpush1.msra.mxu0 0.0
    %2908 = vmatprep.subr.mxu0 0.0
    %2909 = vmatpush1.msra.mxu0 %v2873
    %2910 = vmatprep.subr.mxu0 0.0
    %2911 = vmatpush2.msra.mxu0 0.0
    %2912 = vmatprep.subr.mxu0 0.0
    %2913 = vmatpush2.msra.mxu0 0.0
    %2914 = vmatprep.subr.mxu0 0.0
    %2915 = vmatpush2.msra.mxu0 0.0
    %2916 = vmatprep.subr.mxu0 0.0
    %2917 = vmatpush2.msra.mxu0 0.0
    %2918 = vmatprep.subr.mxu0 0.0
    %2919 = vmatpush2.msra.mxu0 0.0
    %2920 = vmatprep.subr.mxu0 0.0
    %2921 = vmatpush2.msra.mxu0 0.0
    %2922 = vmatprep.subr.mxu0 0.0
    %2923 = vmatpush2.msra.mxu0 0.0
    %2924 = vmatprep.subr.mxu0 0.0
    %2925 = vmatpush2.msra.mxu0 0.0
    %2926 = vmatprep.subr.mxu0 0.0
    %2927 = vmatpush2.msra.mxu0 0.0
    %2928 = vmatprep.subr.mxu0 0.0
    %2929 = vmatpush2.msra.mxu0 0.0
    %2930 = vmatprep.subr.mxu0 0.0
    %2931 = vmatpush2.msra.mxu0 0.0
    %2932 = vmatprep.subr.mxu0 0.0
    %2933 = vmatpush2.msra.mxu0 0.0
    %2934 = vmatprep.subr.mxu0 0.0
    %2935 = vmatpush2.msra.mxu0 0.0
    %2936 = vmatprep.subr.mxu0 0.0
    %2937 = vmatpush2.msra.mxu0 0.0
    %2938 = vmatprep.subr.mxu0 0.0
    %2939 = vmatpush2.msra.mxu0 0.0
    %2940 = vmatprep.subr.mxu0 0.0
    %2941 = vmatpush2.msra.mxu0 0.0
    %2942 = vmatprep.mubr.f32.mxu0 0.0
    %2943 = vmatmul.mubr.f32.gmra.mxu0 %v2876
    %v2944 = vpop.f32.mrf.mxu0
    %v2945 = vadd.f32 0.0, %v2944
    %v2946 = vpop.f32.mrf.mxu0
    %2947 = vdwg.mxu0
    %2948 = vrot.lane.b32.xlu0 %v1785, 64
    %v2949 = vpop.permute.xlu0 %2948
    %v2952 = vsel %vm175, %v2489, 0
    %2954 = vmatprep.subr.mxu0 0.0
    %2955 = vmatpush1.msra.mxu0 0.0
    %2956 = vmatprep.subr.mxu0 0.0
    %2957 = vmatpush1.msra.mxu0 0.0
    %2958 = vmatprep.subr.mxu0 0.0
    %2959 = vmatpush1.msra.mxu0 0.0
    %2960 = vmatprep.subr.mxu0 0.0
    %2961 = vmatpush1.msra.mxu0 0.0
    %2962 = vmatprep.subr.mxu0 0.0
    %2963 = vmatpush1.msra.mxu0 0.0
    %2964 = vmatprep.subr.mxu0 0.0
    %2965 = vmatpush1.msra.mxu0 0.0
    %2966 = vmatprep.subr.mxu0 0.0
    %2967 = vmatpush1.msra.mxu0 0.0
    %2968 = vmatprep.subr.mxu0 0.0
    %2969 = vmatpush1.msra.mxu0 0.0
    %2970 = vmatprep.subr.mxu0 0.0
    %2971 = vmatpush1.msra.mxu0 0.0
    %2972 = vmatprep.subr.mxu0 0.0
    %2973 = vmatpush1.msra.mxu0 0.0
    %2974 = vmatprep.subr.mxu0 0.0
    %2975 = vmatpush1.msra.mxu0 0.0
    %2976 = vmatprep.subr.mxu0 0.0
    %2977 = vmatpush1.msra.mxu0 0.0
    %2978 = vmatprep.subr.mxu0 0.0
    %2979 = vmatpush1.msra.mxu0 0.0
    %2980 = vmatprep.subr.mxu0 0.0
    %2981 = vmatpush1.msra.mxu0 0.0
    %2982 = vmatprep.subr.mxu0 0.0
    %2983 = vmatpush1.msra.mxu0 0.0
    %2984 = vmatprep.subr.mxu0 0.0
    %2985 = vmatpush1.msra.mxu0 %v2949
    %2986 = vmatprep.subr.mxu0 0.0
    %2987 = vmatpush2.msra.mxu0 0.0
    %2988 = vmatprep.subr.mxu0 0.0
    %2989 = vmatpush2.msra.mxu0 0.0
    %2990 = vmatprep.subr.mxu0 0.0
    %2991 = vmatpush2.msra.mxu0 0.0
    %2992 = vmatprep.subr.mxu0 0.0
    %2993 = vmatpush2.msra.mxu0 0.0
    %2994 = vmatprep.subr.mxu0 0.0
    %2995 = vmatpush2.msra.mxu0 0.0
    %2996 = vmatprep.subr.mxu0 0.0
    %2997 = vmatpush2.msra.mxu0 0.0
    %2998 = vmatprep.subr.mxu0 0.0
    %2999 = vmatpush2.msra.mxu0 0.0
    %3000 = vmatprep.subr.mxu0 0.0
    %3001 = vmatpush2.msra.mxu0 0.0
    %3002 = vmatprep.subr.mxu0 0.0
    %3003 = vmatpush2.msra.mxu0 0.0
    %3004 = vmatprep.subr.mxu0 0.0
    %3005 = vmatpush2.msra.mxu0 0.0
    %3006 = vmatprep.subr.mxu0 0.0
    %3007 = vmatpush2.msra.mxu0 0.0
    %3008 = vmatprep.subr.mxu0 0.0
    %3009 = vmatpush2.msra.mxu0 0.0
    %3010 = vmatprep.subr.mxu0 0.0
    %3011 = vmatpush2.msra.mxu0 0.0
    %3012 = vmatprep.subr.mxu0 0.0
    %3013 = vmatpush2.msra.mxu0 0.0
    %3014 = vmatprep.subr.mxu0 0.0
    %3015 = vmatpush2.msra.mxu0 0.0
    %3016 = vmatprep.subr.mxu0 0.0
    %3017 = vmatpush2.msra.mxu0 0.0
    %3018 = vmatprep.mubr.f32.mxu0 0.0
    %3019 = vmatmul.mubr.f32.gmra.mxu0 %v2952
    %v3020 = vpop.f32.mrf.mxu0
    %v3021 = vadd.f32 0.0, %v3020
    %v3022 = vpop.f32.mrf.mxu0
    %3023 = vdwg.mxu0
    %3024 = vrot.lane.b32.xlu0 %v1787, 64
    %v3025 = vpop.permute.xlu0 %3024
    %v3028 = vsel %vm175, %v2491, 0
    %3030 = vmatprep.subr.mxu0 0.0
    %3031 = vmatpush1.msra.mxu0 0.0
    %3032 = vmatprep.subr.mxu0 0.0
    %3033 = vmatpush1.msra.mxu0 0.0
    %3034 = vmatprep.subr.mxu0 0.0
    %3035 = vmatpush1.msra.mxu0 0.0
    %3036 = vmatprep.subr.mxu0 0.0
    %3037 = vmatpush1.msra.mxu0 0.0
    %3038 = vmatprep.subr.mxu0 0.0
    %3039 = vmatpush1.msra.mxu0 0.0
    %3040 = vmatprep.subr.mxu0 0.0
    %3041 = vmatpush1.msra.mxu0 0.0
    %3042 = vmatprep.subr.mxu0 0.0
    %3043 = vmatpush1.msra.mxu0 0.0
    %3044 = vmatprep.subr.mxu0 0.0
    %3045 = vmatpush1.msra.mxu0 0.0
    %3046 = vmatprep.subr.mxu0 0.0
    %3047 = vmatpush1.msra.mxu0 0.0
    %3048 = vmatprep.subr.mxu0 0.0
    %3049 = vmatpush1.msra.mxu0 0.0
    %3050 = vmatprep.subr.mxu0 0.0
    %3051 = vmatpush1.msra.mxu0 0.0
    %3052 = vmatprep.subr.mxu0 0.0
    %3053 = vmatpush1.msra.mxu0 0.0
    %3054 = vmatprep.subr.mxu0 0.0
    %3055 = vmatpush1.msra.mxu0 0.0
    %3056 = vmatprep.subr.mxu0 0.0
    %3057 = vmatpush1.msra.mxu0 0.0
    %3058 = vmatprep.subr.mxu0 0.0
    %3059 = vmatpush1.msra.mxu0 0.0
    %3060 = vmatprep.subr.mxu0 0.0
    %3061 = vmatpush1.msra.mxu0 %v3025
    %3062 = vmatprep.subr.mxu0 0.0
    %3063 = vmatpush2.msra.mxu0 0.0
    %3064 = vmatprep.subr.mxu0 0.0
    %3065 = vmatpush2.msra.mxu0 0.0
    %3066 = vmatprep.subr.mxu0 0.0
    %3067 = vmatpush2.msra.mxu0 0.0
    %3068 = vmatprep.subr.mxu0 0.0
    %3069 = vmatpush2.msra.mxu0 0.0
    %3070 = vmatprep.subr.mxu0 0.0
    %3071 = vmatpush2.msra.mxu0 0.0
    %3072 = vmatprep.subr.mxu0 0.0
    %3073 = vmatpush2.msra.mxu0 0.0
    %3074 = vmatprep.subr.mxu0 0.0
    %3075 = vmatpush2.msra.mxu0 0.0
    %3076 = vmatprep.subr.mxu0 0.0
    %3077 = vmatpush2.msra.mxu0 0.0
    %3078 = vmatprep.subr.mxu0 0.0
    %3079 = vmatpush2.msra.mxu0 0.0
    %3080 = vmatprep.subr.mxu0 0.0
    %3081 = vmatpush2.msra.mxu0 0.0
    %3082 = vmatprep.subr.mxu0 0.0
    %3083 = vmatpush2.msra.mxu0 0.0
    %3084 = vmatprep.subr.mxu0 0.0
    %3085 = vmatpush2.msra.mxu0 0.0
    %3086 = vmatprep.subr.mxu0 0.0
    %3087 = vmatpush2.msra.mxu0 0.0
    %3088 = vmatprep.subr.mxu0 0.0
    %3089 = vmatpush2.msra.mxu0 0.0
    %3090 = vmatprep.subr.mxu0 0.0
    %3091 = vmatpush2.msra.mxu0 0.0
    %3092 = vmatprep.subr.mxu0 0.0
    %3093 = vmatpush2.msra.mxu0 0.0
    %3094 = vmatprep.mubr.f32.mxu0 0.0
    %3095 = vmatmul.mubr.f32.gmra.mxu0 %v3028
    %v3096 = vpop.f32.mrf.mxu0
    %v3097 = vadd.f32 0.0, %v3096
    %v3098 = vpop.f32.mrf.mxu0
    %3099 = vdwg.mxu0
    %v3100 = vld [vmem:[%s1672] sm:$0xff]
    %v3101 = vld [vmem:[%s1672 + $0x8] sm:$0xff]
    %v3102 = vld [vmem:[%s1672 + $0x10] sm:$0xff]
    %v3103 = vld [vmem:[%s1672 + $0x18] sm:$0xff]
    %v3104 = vld [vmem:[%s1677] sm:$0x1]
    %3107 = vrot.lane.b32.xlu0 %v2717, 8
    %v3108 = vpop.permute.xlu0 %3107
    %3109 = vrot.lane.b32.xlu0 %v2793, 8
    %v3110 = vpop.permute.xlu0 %3109
    %3115 = vrot.lane.b32.xlu0 %v2869, 16
    %v3116 = vpop.permute.xlu0 %3115
    %3117 = vrot.lane.b32.xlu0 %v2945, 16
    %v3118 = vpop.permute.xlu0 %3117
    %3123 = vrot.lane.b32.xlu0 %v3021, 24
    %v3124 = vpop.permute.xlu0 %3123
    %3125 = vrot.lane.b32.xlu0 %v3097, 24
    %v3126 = vpop.permute.xlu0 %3125
    %v3129 = vsel %vm175, %v2565, %v3108
    %v3130 = vsel %vm175, %v2641, %v3110
    %v3131 = vsel %vm1518, %v3129, %v3116
    %v3132 = vsel %vm1518, %v3130, %v3118
    %v3133 = vsel %vm1521, %v3131, %v3124
    %v3134 = vsel %vm1521, %v3132, %v3126
    %v3136 = vlaneseq
    %v3137 = vshrl.u32 %v3136, 7
    %v3138 = vsub.s32 0, %v3137
    %v3139 = vrot.slane %v3104, %v3138
    %3144 = vrot.lane.b32.xlu0 %v3100, 32
    %v3145 = vpop.permute.xlu0 %3144
    %3146 = vrot.lane.b32.xlu0 %v3101, 32
    %v3147 = vpop.permute.xlu0 %3146
    %3148 = vrot.lane.b32.xlu0 %v3102, 32
    %v3149 = vpop.permute.xlu0 %3148
    %3150 = vrot.lane.b32.xlu0 %v3103, 32
    %v3151 = vpop.permute.xlu0 %3150
    %3156 = vrot.lane.b32.xlu0 %v3139, 32
    %v3157 = vpop.permute.xlu0 %3156
    %v3160 = vsel %vm61, %v3133, 0
    %v3163 = vsel %vm61, %v3134, 0
    %3165 = vmatprep.subr.mxu0 0.0
    %3166 = vmatpush1.msra.mxu0 0.0
    %3167 = vmatprep.subr.mxu0 0.0
    %3168 = vmatpush1.msra.mxu0 0.0
    %3169 = vmatprep.subr.mxu0 0.0
    %3170 = vmatpush1.msra.mxu0 0.0
    %3171 = vmatprep.subr.mxu0 0.0
    %3172 = vmatpush1.msra.mxu0 0.0
    %3173 = vmatprep.subr.mxu0 0.0
    %3174 = vmatpush1.msra.mxu0 0.0
    %3175 = vmatprep.subr.mxu0 0.0
    %3176 = vmatpush1.msra.mxu0 0.0
    %3177 = vmatprep.subr.mxu0 0.0
    %3178 = vmatpush1.msra.mxu0 0.0
    %3179 = vmatprep.subr.mxu0 0.0
    %3180 = vmatpush1.msra.mxu0 0.0
    %3181 = vmatprep.subr.mxu0 0.0
    %3182 = vmatpush1.msra.mxu0 0.0
    %3183 = vmatprep.subr.mxu0 0.0
    %3184 = vmatpush1.msra.mxu0 0.0
    %3185 = vmatprep.subr.mxu0 0.0
    %3186 = vmatpush1.msra.mxu0 0.0
    %3187 = vmatprep.subr.mxu0 0.0
    %3188 = vmatpush1.msra.mxu0 0.0
    %3189 = vmatprep.subr.mxu0 0.0
    %3190 = vmatpush1.msra.mxu0 %v3151
    %3191 = vmatprep.subr.mxu0 0.0
    %3192 = vmatpush1.msra.mxu0 %v3149
    %3193 = vmatprep.subr.mxu0 0.0
    %3194 = vmatpush1.msra.mxu0 %v3147
    %3195 = vmatprep.subr.mxu0 0.0
    %3196 = vmatpush1.msra.mxu0 %v3145
    %3197 = vmatprep.subr.mxu0 0.0
    %3198 = vmatpush2.msra.mxu0 0.0
    %3199 = vmatprep.subr.mxu0 0.0
    %3200 = vmatpush2.msra.mxu0 0.0
    %3201 = vmatprep.subr.mxu0 0.0
    %3202 = vmatpush2.msra.mxu0 0.0
    %3203 = vmatprep.subr.mxu0 0.0
    %3204 = vmatpush2.msra.mxu0 0.0
    %3205 = vmatprep.subr.mxu0 0.0
    %3206 = vmatpush2.msra.mxu0 0.0
    %3207 = vmatprep.subr.mxu0 0.0
    %3208 = vmatpush2.msra.mxu0 0.0
    %3209 = vmatprep.subr.mxu0 0.0
    %3210 = vmatpush2.msra.mxu0 0.0
    %3211 = vmatprep.subr.mxu0 0.0
    %3212 = vmatpush2.msra.mxu0 0.0
    %3213 = vmatprep.subr.mxu0 0.0
    %3214 = vmatpush2.msra.mxu0 0.0
    %3215 = vmatprep.subr.mxu0 0.0
    %3216 = vmatpush2.msra.mxu0 0.0
    %3217 = vmatprep.subr.mxu0 0.0
    %3218 = vmatpush2.msra.mxu0 0.0
    %3219 = vmatprep.subr.mxu0 0.0
    %3220 = vmatpush2.msra.mxu0 0.0
    %3221 = vmatprep.subr.mxu0 0.0
    %3222 = vmatpush2.msra.mxu0 0.0
    %3223 = vmatprep.subr.mxu0 0.0
    %3224 = vmatpush2.msra.mxu0 0.0
    %3225 = vmatprep.subr.mxu0 0.0
    %3226 = vmatpush2.msra.mxu0 0.0
    %3227 = vmatprep.subr.mxu0 0.0
    %3228 = vmatpush2.msra.mxu0 0.0
    %3229 = vmatprep.mubr.f32.mxu0 0.0
    %3230 = vmatmul.mubr.f32.gmra.mxu0 %v3160
    %v3231 = vpop.f32.mrf.mxu0
    %v3232 = vadd.f32 %v3157, %v3231
    %v3233 = vpop.f32.mrf.mxu0
    %3234 = vmatprep.mubr.f32.mxu0 0.0
    %3235 = vmatmul.mubr.f32.gmra.mxu0 %v3163
    %v3236 = vpop.f32.mrf.mxu0
    %v3237 = vadd.f32 %v3157, %v3236
    %v3238 = vpop.f32.mrf.mxu0
    %3239 = vdwg.mxu0
    %v3240 = vadd.f32 %v1670, %v3232
    %v3241 = vadd.f32 %v1671, %v3237
    %v3242 = vsel %vm61, %v3240, 0.0
    %3243 = vadd.xlane.f32.xlu0 %v3242
    %v3244 = vpop.xlane.xlu0 %3243
    %v3245 = vsel %vm61, %v3241, 0.0
    %3246 = vadd.xlane.f32.xlu0 %v3245
    %v3247 = vpop.xlane.xlu0 %3246
    %v3248 = vmul.f32 %v3244, %v1637
    %v3249 = vmul.f32 %v3247, %v1637
    %v3250 = vsub.f32 %v3240, %v3248
    %v3251 = vsub.f32 %v3241, %v3249
    %v3252 = vmul.f32 %v3250, %v3250
    %v3253 = vmul.f32 %v3251, %v3251
    %v3254 = vsel %vm61, %v3252, 0.0
    %3255 = vadd.xlane.f32.xlu0 %v3254
    %v3256 = vpop.xlane.xlu0 %3255
    %v3257 = vsel %vm61, %v3253, 0.0
    %3258 = vadd.xlane.f32.xlu0 %v3257
    %v3259 = vpop.xlane.xlu0 %3258
    %v3260 = vmul.f32 %v3256, %v1637
    %v3261 = vmul.f32 %v3259, %v1637
    %v3262 = vadd.f32 %v3260, 1e-05
    %v3263 = vadd.f32 %v3261, 1e-05
    %v3264 = vrsqrt.pop %v3262
    %v3265 = vrsqrt.pop %v3263
    %v3266 = vmul.f32 %v3250, %v3264
    %v3267 = vmul.f32 %v3251, %v3265
    %s3268 = scalar_lea.vmem %s7, 1
    %v3269 = vld [vmem:[%s3268] sm:$0x1]
    %v3271 = vlaneseq
    %v3272 = vshrl.u32 %v3271, 7
    %v3273 = vsub.s32 0, %v3272
    %v3274 = vrot.slane %v3269, %v3273
    %v3276 = vmul.f32 %v3266, %v3274
    %v3277 = vmul.f32 %v3267, %v3274
    %3278 = vrot.lane.b32.xlu0 %v3274, 96
    %v3279 = vpop.permute.xlu0 %3278
    %v3281 = vadd.f32 %v3276, %v3279
    %v3282 = vadd.f32 %v3277, %v3279
    %s3283 = scalar_lea.vmem %s5, 64
    %v3284 = vld [vmem:[%s3283] sm:$0xff]
    %v3285 = vld [vmem:[%s3283 + $0x8] sm:$0xff]
    %v3286 = vld [vmem:[%s3283 + $0x10] sm:$0xff]
    %v3287 = vld [vmem:[%s3283 + $0x18] sm:$0xff]
    %s3288 = scalar_lea.vmem %s6, 2
    %v3289 = vld [vmem:[%s3288] sm:$0x1]
    %v3291 = vlaneseq
    %v3292 = vshrl.u32 %v3291, 7
    %v3293 = vsub.s32 0, %v3292
    %v3294 = vrot.slane %v3289, %v3293
    %v3297 = vsel %vm61, %v3281, 0
    %v3300 = vsel %vm61, %v3282, 0
    %3302 = vmatprep.subr.mxu0 0.0
    %3303 = vmatpush1.msra.mxu0 0.0
    %3304 = vmatprep.subr.mxu0 0.0
    %3305 = vmatpush1.msra.mxu0 0.0
    %3306 = vmatprep.subr.mxu0 0.0
    %3307 = vmatpush1.msra.mxu0 0.0
    %3308 = vmatprep.subr.mxu0 0.0
    %3309 = vmatpush1.msra.mxu0 0.0
    %3310 = vmatprep.subr.mxu0 0.0
    %3311 = vmatpush1.msra.mxu0 0.0
    %3312 = vmatprep.subr.mxu0 0.0
    %3313 = vmatpush1.msra.mxu0 0.0
    %3314 = vmatprep.subr.mxu0 0.0
    %3315 = vmatpush1.msra.mxu0 0.0
    %3316 = vmatprep.subr.mxu0 0.0
    %3317 = vmatpush1.msra.mxu0 0.0
    %3318 = vmatprep.subr.mxu0 0.0
    %3319 = vmatpush1.msra.mxu0 0.0
    %3320 = vmatprep.subr.mxu0 0.0
    %3321 = vmatpush1.msra.mxu0 0.0
    %3322 = vmatprep.subr.mxu0 0.0
    %3323 = vmatpush1.msra.mxu0 0.0
    %3324 = vmatprep.subr.mxu0 0.0
    %3325 = vmatpush1.msra.mxu0 0.0
    %3326 = vmatprep.subr.mxu0 0.0
    %3327 = vmatpush1.msra.mxu0 %v3287
    %3328 = vmatprep.subr.mxu0 0.0
    %3329 = vmatpush1.msra.mxu0 %v3286
    %3330 = vmatprep.subr.mxu0 0.0
    %3331 = vmatpush1.msra.mxu0 %v3285
    %3332 = vmatprep.subr.mxu0 0.0
    %3333 = vmatpush1.msra.mxu0 %v3284
    %3334 = vmatprep.subr.mxu0 0.0
    %3335 = vmatpush2.msra.mxu0 0.0
    %3336 = vmatprep.subr.mxu0 0.0
    %3337 = vmatpush2.msra.mxu0 0.0
    %3338 = vmatprep.subr.mxu0 0.0
    %3339 = vmatpush2.msra.mxu0 0.0
    %3340 = vmatprep.subr.mxu0 0.0
    %3341 = vmatpush2.msra.mxu0 0.0
    %3342 = vmatprep.subr.mxu0 0.0
    %3343 = vmatpush2.msra.mxu0 0.0
    %3344 = vmatprep.subr.mxu0 0.0
    %3345 = vmatpush2.msra.mxu0 0.0
    %3346 = vmatprep.subr.mxu0 0.0
    %3347 = vmatpush2.msra.mxu0 0.0
    %3348 = vmatprep.subr.mxu0 0.0
    %3349 = vmatpush2.msra.mxu0 0.0
    %3350 = vmatprep.subr.mxu0 0.0
    %3351 = vmatpush2.msra.mxu0 0.0
    %3352 = vmatprep.subr.mxu0 0.0
    %3353 = vmatpush2.msra.mxu0 0.0
    %3354 = vmatprep.subr.mxu0 0.0
    %3355 = vmatpush2.msra.mxu0 0.0
    %3356 = vmatprep.subr.mxu0 0.0
    %3357 = vmatpush2.msra.mxu0 0.0
    %3358 = vmatprep.subr.mxu0 0.0
    %3359 = vmatpush2.msra.mxu0 0.0
    %3360 = vmatprep.subr.mxu0 0.0
    %3361 = vmatpush2.msra.mxu0 0.0
    %3362 = vmatprep.subr.mxu0 0.0
    %3363 = vmatpush2.msra.mxu0 0.0
    %3364 = vmatprep.subr.mxu0 0.0
    %3365 = vmatpush2.msra.mxu0 0.0
    %3366 = vmatprep.mubr.f32.mxu0 0.0
    %3367 = vmatmul.mubr.f32.gmra.mxu0 %v3297
    %v3368 = vpop.f32.mrf.mxu0
    %v3369 = vadd.f32 %v3294, %v3368
    %v3370 = vpop.f32.mrf.mxu0
    %3371 = vmatprep.mubr.f32.mxu0 0.0
    %3372 = vmatmul.mubr.f32.gmra.mxu0 %v3300
    %v3373 = vpop.f32.mrf.mxu0
    %v3374 = vadd.f32 %v3294, %v3373
    %v3375 = vpop.f32.mrf.mxu0
    %3376 = vdwg.mxu0
    %v3377 = vmul.f32 %v3369, 0.35355338
    %v3378 = vmul.f32 %v3374, 0.35355338
    %v3380 = vsel %vm61, %v45, 0
    %v3383 = vsel %vm61, %v46, 0
    %3385 = vmatprep.subr.mxu0 0.0
    %3386 = vmatpush1.msra.mxu0 0.0
    %3387 = vmatprep.subr.mxu0 0.0
    %3388 = vmatpush1.msra.mxu0 0.0
    %3389 = vmatprep.subr.mxu0 0.0
    %3390 = vmatpush1.msra.mxu0 0.0
    %3391 = vmatprep.subr.mxu0 0.0
    %3392 = vmatpush1.msra.mxu0 0.0
    %3393 = vmatprep.subr.mxu0 0.0
    %3394 = vmatpush1.msra.mxu0 0.0
    %3395 = vmatprep.subr.mxu0 0.0
    %3396 = vmatpush1.msra.mxu0 0.0
    %3397 = vmatprep.subr.mxu0 0.0
    %3398 = vmatpush1.msra.mxu0 0.0
    %3399 = vmatprep.subr.mxu0 0.0
    %3400 = vmatpush1.msra.mxu0 0.0
    %3401 = vmatprep.subr.mxu0 0.0
    %3402 = vmatpush1.msra.mxu0 0.0
    %3403 = vmatprep.subr.mxu0 0.0
    %3404 = vmatpush1.msra.mxu0 0.0
    %3405 = vmatprep.subr.mxu0 0.0
    %3406 = vmatpush1.msra.mxu0 0.0
    %3407 = vmatprep.subr.mxu0 0.0
    %3408 = vmatpush1.msra.mxu0 0.0
    %3409 = vmatprep.subr.mxu0 0.0
    %3410 = vmatpush1.msra.mxu0 %v3287
    %3411 = vmatprep.subr.mxu0 0.0
    %3412 = vmatpush1.msra.mxu0 %v3286
    %3413 = vmatprep.subr.mxu0 0.0
    %3414 = vmatpush1.msra.mxu0 %v3285
    %3415 = vmatprep.subr.mxu0 0.0
    %3416 = vmatpush1.msra.mxu0 %v3284
    %3417 = vmatprep.subr.mxu0 0.0
    %3418 = vmatpush2.msra.mxu0 0.0
    %3419 = vmatprep.subr.mxu0 0.0
    %3420 = vmatpush2.msra.mxu0 0.0
    %3421 = vmatprep.subr.mxu0 0.0
    %3422 = vmatpush2.msra.mxu0 0.0
    %3423 = vmatprep.subr.mxu0 0.0
    %3424 = vmatpush2.msra.mxu0 0.0
    %3425 = vmatprep.subr.mxu0 0.0
    %3426 = vmatpush2.msra.mxu0 0.0
    %3427 = vmatprep.subr.mxu0 0.0
    %3428 = vmatpush2.msra.mxu0 0.0
    %3429 = vmatprep.subr.mxu0 0.0
    %3430 = vmatpush2.msra.mxu0 0.0
    %3431 = vmatprep.subr.mxu0 0.0
    %3432 = vmatpush2.msra.mxu0 0.0
    %3433 = vmatprep.subr.mxu0 0.0
    %3434 = vmatpush2.msra.mxu0 0.0
    %3435 = vmatprep.subr.mxu0 0.0
    %3436 = vmatpush2.msra.mxu0 0.0
    %3437 = vmatprep.subr.mxu0 0.0
    %3438 = vmatpush2.msra.mxu0 0.0
    %3439 = vmatprep.subr.mxu0 0.0
    %3440 = vmatpush2.msra.mxu0 0.0
    %3441 = vmatprep.subr.mxu0 0.0
    %3442 = vmatpush2.msra.mxu0 0.0
    %3443 = vmatprep.subr.mxu0 0.0
    %3444 = vmatpush2.msra.mxu0 0.0
    %3445 = vmatprep.subr.mxu0 0.0
    %3446 = vmatpush2.msra.mxu0 0.0
    %3447 = vmatprep.subr.mxu0 0.0
    %3448 = vmatpush2.msra.mxu0 0.0
    %3449 = vmatprep.mubr.f32.mxu0 0.0
    %3450 = vmatmul.mubr.f32.gmra.mxu0 %v3380
    %v3451 = vpop.f32.mrf.mxu0
    %v3452 = vadd.f32 %v3294, %v3451
    %v3453 = vpop.f32.mrf.mxu0
    %3454 = vmatprep.mubr.f32.mxu0 0.0
    %3455 = vmatmul.mubr.f32.gmra.mxu0 %v3383
    %v3456 = vpop.f32.mrf.mxu0
    %v3457 = vadd.f32 %v3294, %v3456
    %v3458 = vpop.f32.mrf.mxu0
    %3459 = vdwg.mxu0
    %3462 = vrot.lane.b32.xlu0 %v3377, 120
    %v3463 = vpop.permute.xlu0 %3462
    %3464 = vrot.lane.b32.xlu0 %v3378, 120
    %v3465 = vpop.permute.xlu0 %3464
    %3466 = vrot.lane.b32.xlu0 %v3377, 112
    %v3467 = vpop.permute.xlu0 %3466
    %3468 = vrot.lane.b32.xlu0 %v3378, 112
    %v3469 = vpop.permute.xlu0 %3468
    %3470 = vrot.lane.b32.xlu0 %v3377, 104
    %v3471 = vpop.permute.xlu0 %3470
    %3472 = vrot.lane.b32.xlu0 %v3378, 104
    %v3473 = vpop.permute.xlu0 %3472
    %3476 = vrot.lane.b32.xlu0 %v3452, 120
    %v3477 = vpop.permute.xlu0 %3476
    %3478 = vrot.lane.b32.xlu0 %v3457, 120
    %v3479 = vpop.permute.xlu0 %3478
    %3480 = vrot.lane.b32.xlu0 %v3452, 112
    %v3481 = vpop.permute.xlu0 %3480
    %3482 = vrot.lane.b32.xlu0 %v3457, 112
    %v3483 = vpop.permute.xlu0 %3482
    %3484 = vrot.lane.b32.xlu0 %v3452, 104
    %v3485 = vpop.permute.xlu0 %3484
    %3486 = vrot.lane.b32.xlu0 %v3457, 104
    %v3487 = vpop.permute.xlu0 %3486
    %3488 = vrot.lane.b32.xlu0 %v3452, 96
    %v3489 = vpop.permute.xlu0 %3488
    %v3490 = vsel %vm175, %v3377, 0
    %v3492 = vsel %vm175, %v3489, 0
    %3494 = vmatprep.subr.mxu0 0.0
    %3495 = vmatpush1.xpose.msra.mxu0 0.0
    %3496 = vmatprep.subr.mxu0 0.0
    %3497 = vmatpush1.xpose.msra.mxu0 0.0
    %3498 = vmatprep.subr.mxu0 0.0
    %3499 = vmatpush1.xpose.msra.mxu0 0.0
    %3500 = vmatprep.subr.mxu0 0.0
    %3501 = vmatpush1.xpose.msra.mxu0 0.0
    %3502 = vmatprep.subr.mxu0 0.0
    %3503 = vmatpush1.xpose.msra.mxu0 0.0
    %3504 = vmatprep.subr.mxu0 0.0
    %3505 = vmatpush1.xpose.msra.mxu0 0.0
    %3506 = vmatprep.subr.mxu0 0.0
    %3507 = vmatpush1.xpose.msra.mxu0 0.0
    %3508 = vmatprep.subr.mxu0 0.0
    %3509 = vmatpush1.xpose.msra.mxu0 0.0
    %3510 = vmatprep.subr.mxu0 0.0
    %3511 = vmatpush1.xpose.msra.mxu0 0.0
    %3512 = vmatprep.subr.mxu0 0.0
    %3513 = vmatpush1.xpose.msra.mxu0 0.0
    %3514 = vmatprep.subr.mxu0 0.0
    %3515 = vmatpush1.xpose.msra.mxu0 0.0
    %3516 = vmatprep.subr.mxu0 0.0
    %3517 = vmatpush1.xpose.msra.mxu0 0.0
    %3518 = vmatprep.subr.mxu0 0.0
    %3519 = vmatpush1.xpose.msra.mxu0 0.0
    %3520 = vmatprep.subr.mxu0 0.0
    %3521 = vmatpush1.xpose.msra.mxu0 0.0
    %3522 = vmatprep.subr.mxu0 0.0
    %3523 = vmatpush1.xpose.msra.mxu0 0.0
    %3524 = vmatprep.subr.mxu0 0.0
    %3525 = vmatpush1.xpose.msra.mxu0 %v3492
    %3526 = vmatprep.subr.mxu0 0.0
    %3527 = vmatpush2.xpose.msra.mxu0 0.0
    %3528 = vmatprep.subr.mxu0 0.0
    %3529 = vmatpush2.xpose.msra.mxu0 0.0
    %3530 = vmatprep.subr.mxu0 0.0
    %3531 = vmatpush2.xpose.msra.mxu0 0.0
    %3532 = vmatprep.subr.mxu0 0.0
    %3533 = vmatpush2.xpose.msra.mxu0 0.0
    %3534 = vmatprep.subr.mxu0 0.0
    %3535 = vmatpush2.xpose.msra.mxu0 0.0
    %3536 = vmatprep.subr.mxu0 0.0
    %3537 = vmatpush2.xpose.msra.mxu0 0.0
    %3538 = vmatprep.subr.mxu0 0.0
    %3539 = vmatpush2.xpose.msra.mxu0 0.0
    %3540 = vmatprep.subr.mxu0 0.0
    %3541 = vmatpush2.xpose.msra.mxu0 0.0
    %3542 = vmatprep.subr.mxu0 0.0
    %3543 = vmatpush2.xpose.msra.mxu0 0.0
    %3544 = vmatprep.subr.mxu0 0.0
    %3545 = vmatpush2.xpose.msra.mxu0 0.0
    %3546 = vmatprep.subr.mxu0 0.0
    %3547 = vmatpush2.xpose.msra.mxu0 0.0
    %3548 = vmatprep.subr.mxu0 0.0
    %3549 = vmatpush2.xpose.msra.mxu0 0.0
    %3550 = vmatprep.subr.mxu0 0.0
    %3551 = vmatpush2.xpose.msra.mxu0 0.0
    %3552 = vmatprep.subr.mxu0 0.0
    %3553 = vmatpush2.xpose.msra.mxu0 0.0
    %3554 = vmatprep.subr.mxu0 0.0
    %3555 = vmatpush2.xpose.msra.mxu0 0.0
    %3556 = vmatprep.subr.mxu0 0.0
    %3557 = vmatpush2.xpose.msra.mxu0 0.0
    %3558 = vmatprep.mubr.f32.mxu0 0.0
    %3559 = vmatmul.mubr.f32.gmra.mxu0 %v3490
    %v3560 = vpop.f32.mrf.mxu0
    %v3561 = vadd.f32 %v48, %v3560
    %v3562 = vpop.f32.mrf.mxu0
    %3563 = vdwg.mxu0
    %3564 = vrot.lane.b32.xlu0 %v3457, 96
    %v3565 = vpop.permute.xlu0 %3564
    %v3566 = vsel %vm175, %v3378, 0
    %v3568 = vsel %vm175, %v3565, 0
    %3570 = vmatprep.subr.mxu0 0.0
    %3571 = vmatpush1.xpose.msra.mxu0 0.0
    %3572 = vmatprep.subr.mxu0 0.0
    %3573 = vmatpush1.xpose.msra.mxu0 0.0
    %3574 = vmatprep.subr.mxu0 0.0
    %3575 = vmatpush1.xpose.msra.mxu0 0.0
    %3576 = vmatprep.subr.mxu0 0.0
    %3577 = vmatpush1.xpose.msra.mxu0 0.0
    %3578 = vmatprep.subr.mxu0 0.0
    %3579 = vmatpush1.xpose.msra.mxu0 0.0
    %3580 = vmatprep.subr.mxu0 0.0
    %3581 = vmatpush1.xpose.msra.mxu0 0.0
    %3582 = vmatprep.subr.mxu0 0.0
    %3583 = vmatpush1.xpose.msra.mxu0 0.0
    %3584 = vmatprep.subr.mxu0 0.0
    %3585 = vmatpush1.xpose.msra.mxu0 0.0
    %3586 = vmatprep.subr.mxu0 0.0
    %3587 = vmatpush1.xpose.msra.mxu0 0.0
    %3588 = vmatprep.subr.mxu0 0.0
    %3589 = vmatpush1.xpose.msra.mxu0 0.0
    %3590 = vmatprep.subr.mxu0 0.0
    %3591 = vmatpush1.xpose.msra.mxu0 0.0
    %3592 = vmatprep.subr.mxu0 0.0
    %3593 = vmatpush1.xpose.msra.mxu0 0.0
    %3594 = vmatprep.subr.mxu0 0.0
    %3595 = vmatpush1.xpose.msra.mxu0 0.0
    %3596 = vmatprep.subr.mxu0 0.0
    %3597 = vmatpush1.xpose.msra.mxu0 0.0
    %3598 = vmatprep.subr.mxu0 0.0
    %3599 = vmatpush1.xpose.msra.mxu0 0.0
    %3600 = vmatprep.subr.mxu0 0.0
    %3601 = vmatpush1.xpose.msra.mxu0 %v3568
    %3602 = vmatprep.subr.mxu0 0.0
    %3603 = vmatpush2.xpose.msra.mxu0 0.0
    %3604 = vmatprep.subr.mxu0 0.0
    %3605 = vmatpush2.xpose.msra.mxu0 0.0
    %3606 = vmatprep.subr.mxu0 0.0
    %3607 = vmatpush2.xpose.msra.mxu0 0.0
    %3608 = vmatprep.subr.mxu0 0.0
    %3609 = vmatpush2.xpose.msra.mxu0 0.0
    %3610 = vmatprep.subr.mxu0 0.0
    %3611 = vmatpush2.xpose.msra.mxu0 0.0
    %3612 = vmatprep.subr.mxu0 0.0
    %3613 = vmatpush2.xpose.msra.mxu0 0.0
    %3614 = vmatprep.subr.mxu0 0.0
    %3615 = vmatpush2.xpose.msra.mxu0 0.0
    %3616 = vmatprep.subr.mxu0 0.0
    %3617 = vmatpush2.xpose.msra.mxu0 0.0
    %3618 = vmatprep.subr.mxu0 0.0
    %3619 = vmatpush2.xpose.msra.mxu0 0.0
    %3620 = vmatprep.subr.mxu0 0.0
    %3621 = vmatpush2.xpose.msra.mxu0 0.0
    %3622 = vmatprep.subr.mxu0 0.0
    %3623 = vmatpush2.xpose.msra.mxu0 0.0
    %3624 = vmatprep.subr.mxu0 0.0
    %3625 = vmatpush2.xpose.msra.mxu0 0.0
    %3626 = vmatprep.subr.mxu0 0.0
    %3627 = vmatpush2.xpose.msra.mxu0 0.0
    %3628 = vmatprep.subr.mxu0 0.0
    %3629 = vmatpush2.xpose.msra.mxu0 0.0
    %3630 = vmatprep.subr.mxu0 0.0
    %3631 = vmatpush2.xpose.msra.mxu0 0.0
    %3632 = vmatprep.subr.mxu0 0.0
    %3633 = vmatpush2.xpose.msra.mxu0 0.0
    %3634 = vmatprep.mubr.f32.mxu0 0.0
    %3635 = vmatmul.mubr.f32.gmra.mxu0 %v3566
    %v3636 = vpop.f32.mrf.mxu0
    %v3637 = vadd.f32 %v48, %v3636
    %v3638 = vpop.f32.mrf.mxu0
    %3639 = vdwg.mxu0
    %3640 = vrot.lane.b32.xlu0 %v3477, 96
    %v3641 = vpop.permute.xlu0 %3640
    %v3642 = vsel %vm175, %v3463, 0
    %v3644 = vsel %vm175, %v3641, 0
    %3646 = vmatprep.subr.mxu0 0.0
    %3647 = vmatpush1.xpose.msra.mxu0 0.0
    %3648 = vmatprep.subr.mxu0 0.0
    %3649 = vmatpush1.xpose.msra.mxu0 0.0
    %3650 = vmatprep.subr.mxu0 0.0
    %3651 = vmatpush1.xpose.msra.mxu0 0.0
    %3652 = vmatprep.subr.mxu0 0.0
    %3653 = vmatpush1.xpose.msra.mxu0 0.0
    %3654 = vmatprep.subr.mxu0 0.0
    %3655 = vmatpush1.xpose.msra.mxu0 0.0
    %3656 = vmatprep.subr.mxu0 0.0
    %3657 = vmatpush1.xpose.msra.mxu0 0.0
    %3658 = vmatprep.subr.mxu0 0.0
    %3659 = vmatpush1.xpose.msra.mxu0 0.0
    %3660 = vmatprep.subr.mxu0 0.0
    %3661 = vmatpush1.xpose.msra.mxu0 0.0
    %3662 = vmatprep.subr.mxu0 0.0
    %3663 = vmatpush1.xpose.msra.mxu0 0.0
    %3664 = vmatprep.subr.mxu0 0.0
    %3665 = vmatpush1.xpose.msra.mxu0 0.0
    %3666 = vmatprep.subr.mxu0 0.0
    %3667 = vmatpush1.xpose.msra.mxu0 0.0
    %3668 = vmatprep.subr.mxu0 0.0
    %3669 = vmatpush1.xpose.msra.mxu0 0.0
    %3670 = vmatprep.subr.mxu0 0.0
    %3671 = vmatpush1.xpose.msra.mxu0 0.0
    %3672 = vmatprep.subr.mxu0 0.0
    %3673 = vmatpush1.xpose.msra.mxu0 0.0
    %3674 = vmatprep.subr.mxu0 0.0
    %3675 = vmatpush1.xpose.msra.mxu0 0.0
    %3676 = vmatprep.subr.mxu0 0.0
    %3677 = vmatpush1.xpose.msra.mxu0 %v3644
    %3678 = vmatprep.subr.mxu0 0.0
    %3679 = vmatpush2.xpose.msra.mxu0 0.0
    %3680 = vmatprep.subr.mxu0 0.0
    %3681 = vmatpush2.xpose.msra.mxu0 0.0
    %3682 = vmatprep.subr.mxu0 0.0
    %3683 = vmatpush2.xpose.msra.mxu0 0.0
    %3684 = vmatprep.subr.mxu0 0.0
    %3685 = vmatpush2.xpose.msra.mxu0 0.0
    %3686 = vmatprep.subr.mxu0 0.0
    %3687 = vmatpush2.xpose.msra.mxu0 0.0
    %3688 = vmatprep.subr.mxu0 0.0
    %3689 = vmatpush2.xpose.msra.mxu0 0.0
    %3690 = vmatprep.subr.mxu0 0.0
    %3691 = vmatpush2.xpose.msra.mxu0 0.0
    %3692 = vmatprep.subr.mxu0 0.0
    %3693 = vmatpush2.xpose.msra.mxu0 0.0
    %3694 = vmatprep.subr.mxu0 0.0
    %3695 = vmatpush2.xpose.msra.mxu0 0.0
    %3696 = vmatprep.subr.mxu0 0.0
    %3697 = vmatpush2.xpose.msra.mxu0 0.0
    %3698 = vmatprep.subr.mxu0 0.0
    %3699 = vmatpush2.xpose.msra.mxu0 0.0
    %3700 = vmatprep.subr.mxu0 0.0
    %3701 = vmatpush2.xpose.msra.mxu0 0.0
    %3702 = vmatprep.subr.mxu0 0.0
    %3703 = vmatpush2.xpose.msra.mxu0 0.0
    %3704 = vmatprep.subr.mxu0 0.0
    %3705 = vmatpush2.xpose.msra.mxu0 0.0
    %3706 = vmatprep.subr.mxu0 0.0
    %3707 = vmatpush2.xpose.msra.mxu0 0.0
    %3708 = vmatprep.subr.mxu0 0.0
    %3709 = vmatpush2.xpose.msra.mxu0 0.0
    %3710 = vmatprep.mubr.f32.mxu0 0.0
    %3711 = vmatmul.mubr.f32.gmra.mxu0 %v3642
    %v3712 = vpop.f32.mrf.mxu0
    %v3713 = vadd.f32 %v48, %v3712
    %v3714 = vpop.f32.mrf.mxu0
    %3715 = vdwg.mxu0
    %3716 = vrot.lane.b32.xlu0 %v3479, 96
    %v3717 = vpop.permute.xlu0 %3716
    %v3718 = vsel %vm175, %v3465, 0
    %v3720 = vsel %vm175, %v3717, 0
    %3722 = vmatprep.subr.mxu0 0.0
    %3723 = vmatpush1.xpose.msra.mxu0 0.0
    %3724 = vmatprep.subr.mxu0 0.0
    %3725 = vmatpush1.xpose.msra.mxu0 0.0
    %3726 = vmatprep.subr.mxu0 0.0
    %3727 = vmatpush1.xpose.msra.mxu0 0.0
    %3728 = vmatprep.subr.mxu0 0.0
    %3729 = vmatpush1.xpose.msra.mxu0 0.0
    %3730 = vmatprep.subr.mxu0 0.0
    %3731 = vmatpush1.xpose.msra.mxu0 0.0
    %3732 = vmatprep.subr.mxu0 0.0
    %3733 = vmatpush1.xpose.msra.mxu0 0.0
    %3734 = vmatprep.subr.mxu0 0.0
    %3735 = vmatpush1.xpose.msra.mxu0 0.0
    %3736 = vmatprep.subr.mxu0 0.0
    %3737 = vmatpush1.xpose.msra.mxu0 0.0
    %3738 = vmatprep.subr.mxu0 0.0
    %3739 = vmatpush1.xpose.msra.mxu0 0.0
    %3740 = vmatprep.subr.mxu0 0.0
    %3741 = vmatpush1.xpose.msra.mxu0 0.0
    %3742 = vmatprep.subr.mxu0 0.0
    %3743 = vmatpush1.xpose.msra.mxu0 0.0
    %3744 = vmatprep.subr.mxu0 0.0
    %3745 = vmatpush1.xpose.msra.mxu0 0.0
    %3746 = vmatprep.subr.mxu0 0.0
    %3747 = vmatpush1.xpose.msra.mxu0 0.0
    %3748 = vmatprep.subr.mxu0 0.0
    %3749 = vmatpush1.xpose.msra.mxu0 0.0
    %3750 = vmatprep.subr.mxu0 0.0
    %3751 = vmatpush1.xpose.msra.mxu0 0.0
    %3752 = vmatprep.subr.mxu0 0.0
    %3753 = vmatpush1.xpose.msra.mxu0 %v3720
    %3754 = vmatprep.subr.mxu0 0.0
    %3755 = vmatpush2.xpose.msra.mxu0 0.0
    %3756 = vmatprep.subr.mxu0 0.0
    %3757 = vmatpush2.xpose.msra.mxu0 0.0
    %3758 = vmatprep.subr.mxu0 0.0
    %3759 = vmatpush2.xpose.msra.mxu0 0.0
    %3760 = vmatprep.subr.mxu0 0.0
    %3761 = vmatpush2.xpose.msra.mxu0 0.0
    %3762 = vmatprep.subr.mxu0 0.0
    %3763 = vmatpush2.xpose.msra.mxu0 0.0
    %3764 = vmatprep.subr.mxu0 0.0
    %3765 = vmatpush2.xpose.msra.mxu0 0.0
    %3766 = vmatprep.subr.mxu0 0.0
    %3767 = vmatpush2.xpose.msra.mxu0 0.0
    %3768 = vmatprep.subr.mxu0 0.0
    %3769 = vmatpush2.xpose.msra.mxu0 0.0
    %3770 = vmatprep.subr.mxu0 0.0
    %3771 = vmatpush2.xpose.msra.mxu0 0.0
    %3772 = vmatprep.subr.mxu0 0.0
    %3773 = vmatpush2.xpose.msra.mxu0 0.0
    %3774 = vmatprep.subr.mxu0 0.0
    %3775 = vmatpush2.xpose.msra.mxu0 0.0
    %3776 = vmatprep.subr.mxu0 0.0
    %3777 = vmatpush2.xpose.msra.mxu0 0.0
    %3778 = vmatprep.subr.mxu0 0.0
    %3779 = vmatpush2.xpose.msra.mxu0 0.0
    %3780 = vmatprep.subr.mxu0 0.0
    %3781 = vmatpush2.xpose.msra.mxu0 0.0
    %3782 = vmatprep.subr.mxu0 0.0
    %3783 = vmatpush2.xpose.msra.mxu0 0.0
    %3784 = vmatprep.subr.mxu0 0.0
    %3785 = vmatpush2.xpose.msra.mxu0 0.0
    %3786 = vmatprep.mubr.f32.mxu0 0.0
    %3787 = vmatmul.mubr.f32.gmra.mxu0 %v3718
    %v3788 = vpop.f32.mrf.mxu0
    %v3789 = vadd.f32 %v48, %v3788
    %v3790 = vpop.f32.mrf.mxu0
    %3791 = vdwg.mxu0
    %3792 = vrot.lane.b32.xlu0 %v3481, 96
    %v3793 = vpop.permute.xlu0 %3792
    %v3794 = vsel %vm175, %v3467, 0
    %v3796 = vsel %vm175, %v3793, 0
    %3798 = vmatprep.subr.mxu0 0.0
    %3799 = vmatpush1.xpose.msra.mxu0 0.0
    %3800 = vmatprep.subr.mxu0 0.0
    %3801 = vmatpush1.xpose.msra.mxu0 0.0
    %3802 = vmatprep.subr.mxu0 0.0
    %3803 = vmatpush1.xpose.msra.mxu0 0.0
    %3804 = vmatprep.subr.mxu0 0.0
    %3805 = vmatpush1.xpose.msra.mxu0 0.0
    %3806 = vmatprep.subr.mxu0 0.0
    %3807 = vmatpush1.xpose.msra.mxu0 0.0
    %3808 = vmatprep.subr.mxu0 0.0
    %3809 = vmatpush1.xpose.msra.mxu0 0.0
    %3810 = vmatprep.subr.mxu0 0.0
    %3811 = vmatpush1.xpose.msra.mxu0 0.0
    %3812 = vmatprep.subr.mxu0 0.0
    %3813 = vmatpush1.xpose.msra.mxu0 0.0
    %3814 = vmatprep.subr.mxu0 0.0
    %3815 = vmatpush1.xpose.msra.mxu0 0.0
    %3816 = vmatprep.subr.mxu0 0.0
    %3817 = vmatpush1.xpose.msra.mxu0 0.0
    %3818 = vmatprep.subr.mxu0 0.0
    %3819 = vmatpush1.xpose.msra.mxu0 0.0
    %3820 = vmatprep.subr.mxu0 0.0
    %3821 = vmatpush1.xpose.msra.mxu0 0.0
    %3822 = vmatprep.subr.mxu0 0.0
    %3823 = vmatpush1.xpose.msra.mxu0 0.0
    %3824 = vmatprep.subr.mxu0 0.0
    %3825 = vmatpush1.xpose.msra.mxu0 0.0
    %3826 = vmatprep.subr.mxu0 0.0
    %3827 = vmatpush1.xpose.msra.mxu0 0.0
    %3828 = vmatprep.subr.mxu0 0.0
    %3829 = vmatpush1.xpose.msra.mxu0 %v3796
    %3830 = vmatprep.subr.mxu0 0.0
    %3831 = vmatpush2.xpose.msra.mxu0 0.0
    %3832 = vmatprep.subr.mxu0 0.0
    %3833 = vmatpush2.xpose.msra.mxu0 0.0
    %3834 = vmatprep.subr.mxu0 0.0
    %3835 = vmatpush2.xpose.msra.mxu0 0.0
    %3836 = vmatprep.subr.mxu0 0.0
    %3837 = vmatpush2.xpose.msra.mxu0 0.0
    %3838 = vmatprep.subr.mxu0 0.0
    %3839 = vmatpush2.xpose.msra.mxu0 0.0
    %3840 = vmatprep.subr.mxu0 0.0
    %3841 = vmatpush2.xpose.msra.mxu0 0.0
    %3842 = vmatprep.subr.mxu0 0.0
    %3843 = vmatpush2.xpose.msra.mxu0 0.0
    %3844 = vmatprep.subr.mxu0 0.0
    %3845 = vmatpush2.xpose.msra.mxu0 0.0
    %3846 = vmatprep.subr.mxu0 0.0
    %3847 = vmatpush2.xpose.msra.mxu0 0.0
    %3848 = vmatprep.subr.mxu0 0.0
    %3849 = vmatpush2.xpose.msra.mxu0 0.0
    %3850 = vmatprep.subr.mxu0 0.0
    %3851 = vmatpush2.xpose.msra.mxu0 0.0
    %3852 = vmatprep.subr.mxu0 0.0
    %3853 = vmatpush2.xpose.msra.mxu0 0.0
    %3854 = vmatprep.subr.mxu0 0.0
    %3855 = vmatpush2.xpose.msra.mxu0 0.0
    %3856 = vmatprep.subr.mxu0 0.0
    %3857 = vmatpush2.xpose.msra.mxu0 0.0
    %3858 = vmatprep.subr.mxu0 0.0
    %3859 = vmatpush2.xpose.msra.mxu0 0.0
    %3860 = vmatprep.subr.mxu0 0.0
    %3861 = vmatpush2.xpose.msra.mxu0 0.0
    %3862 = vmatprep.mubr.f32.mxu0 0.0
    %3863 = vmatmul.mubr.f32.gmra.mxu0 %v3794
    %v3864 = vpop.f32.mrf.mxu0
    %v3865 = vadd.f32 %v48, %v3864
    %v3866 = vpop.f32.mrf.mxu0
    %3867 = vdwg.mxu0
    %3868 = vrot.lane.b32.xlu0 %v3483, 96
    %v3869 = vpop.permute.xlu0 %3868
    %v3870 = vsel %vm175, %v3469, 0
    %v3872 = vsel %vm175, %v3869, 0
    %3874 = vmatprep.subr.mxu0 0.0
    %3875 = vmatpush1.xpose.msra.mxu0 0.0
    %3876 = vmatprep.subr.mxu0 0.0
    %3877 = vmatpush1.xpose.msra.mxu0 0.0
    %3878 = vmatprep.subr.mxu0 0.0
    %3879 = vmatpush1.xpose.msra.mxu0 0.0
    %3880 = vmatprep.subr.mxu0 0.0
    %3881 = vmatpush1.xpose.msra.mxu0 0.0
    %3882 = vmatprep.subr.mxu0 0.0
    %3883 = vmatpush1.xpose.msra.mxu0 0.0
    %3884 = vmatprep.subr.mxu0 0.0
    %3885 = vmatpush1.xpose.msra.mxu0 0.0
    %3886 = vmatprep.subr.mxu0 0.0
    %3887 = vmatpush1.xpose.msra.mxu0 0.0
    %3888 = vmatprep.subr.mxu0 0.0
    %3889 = vmatpush1.xpose.msra.mxu0 0.0
    %3890 = vmatprep.subr.mxu0 0.0
    %3891 = vmatpush1.xpose.msra.mxu0 0.0
    %3892 = vmatprep.subr.mxu0 0.0
    %3893 = vmatpush1.xpose.msra.mxu0 0.0
    %3894 = vmatprep.subr.mxu0 0.0
    %3895 = vmatpush1.xpose.msra.mxu0 0.0
    %3896 = vmatprep.subr.mxu0 0.0
    %3897 = vmatpush1.xpose.msra.mxu0 0.0
    %3898 = vmatprep.subr.mxu0 0.0
    %3899 = vmatpush1.xpose.msra.mxu0 0.0
    %3900 = vmatprep.subr.mxu0 0.0
    %3901 = vmatpush1.xpose.msra.mxu0 0.0
    %3902 = vmatprep.subr.mxu0 0.0
    %3903 = vmatpush1.xpose.msra.mxu0 0.0
    %3904 = vmatprep.subr.mxu0 0.0
    %3905 = vmatpush1.xpose.msra.mxu0 %v3872
    %3906 = vmatprep.subr.mxu0 0.0
    %3907 = vmatpush2.xpose.msra.mxu0 0.0
    %3908 = vmatprep.subr.mxu0 0.0
    %3909 = vmatpush2.xpose.msra.mxu0 0.0
    %3910 = vmatprep.subr.mxu0 0.0
    %3911 = vmatpush2.xpose.msra.mxu0 0.0
    %3912 = vmatprep.subr.mxu0 0.0
    %3913 = vmatpush2.xpose.msra.mxu0 0.0
    %3914 = vmatprep.subr.mxu0 0.0
    %3915 = vmatpush2.xpose.msra.mxu0 0.0
    %3916 = vmatprep.subr.mxu0 0.0
    %3917 = vmatpush2.xpose.msra.mxu0 0.0
    %3918 = vmatprep.subr.mxu0 0.0
    %3919 = vmatpush2.xpose.msra.mxu0 0.0
    %3920 = vmatprep.subr.mxu0 0.0
    %3921 = vmatpush2.xpose.msra.mxu0 0.0
    %3922 = vmatprep.subr.mxu0 0.0
    %3923 = vmatpush2.xpose.msra.mxu0 0.0
    %3924 = vmatprep.subr.mxu0 0.0
    %3925 = vmatpush2.xpose.msra.mxu0 0.0
    %3926 = vmatprep.subr.mxu0 0.0
    %3927 = vmatpush2.xpose.msra.mxu0 0.0
    %3928 = vmatprep.subr.mxu0 0.0
    %3929 = vmatpush2.xpose.msra.mxu0 0.0
    %3930 = vmatprep.subr.mxu0 0.0
    %3931 = vmatpush2.xpose.msra.mxu0 0.0
    %3932 = vmatprep.subr.mxu0 0.0
    %3933 = vmatpush2.xpose.msra.mxu0 0.0
    %3934 = vmatprep.subr.mxu0 0.0
    %3935 = vmatpush2.xpose.msra.mxu0 0.0
    %3936 = vmatprep.subr.mxu0 0.0
    %3937 = vmatpush2.xpose.msra.mxu0 0.0
    %3938 = vmatprep.mubr.f32.mxu0 0.0
    %3939 = vmatmul.mubr.f32.gmra.mxu0 %v3870
    %v3940 = vpop.f32.mrf.mxu0
    %v3941 = vadd.f32 %v48, %v3940
    %v3942 = vpop.f32.mrf.mxu0
    %3943 = vdwg.mxu0
    %3944 = vrot.lane.b32.xlu0 %v3485, 96
    %v3945 = vpop.permute.xlu0 %3944
    %v3946 = vsel %vm175, %v3471, 0
    %v3948 = vsel %vm175, %v3945, 0
    %3950 = vmatprep.subr.mxu0 0.0
    %3951 = vmatpush1.xpose.msra.mxu0 0.0
    %3952 = vmatprep.subr.mxu0 0.0
    %3953 = vmatpush1.xpose.msra.mxu0 0.0
    %3954 = vmatprep.subr.mxu0 0.0
    %3955 = vmatpush1.xpose.msra.mxu0 0.0
    %3956 = vmatprep.subr.mxu0 0.0
    %3957 = vmatpush1.xpose.msra.mxu0 0.0
    %3958 = vmatprep.subr.mxu0 0.0
    %3959 = vmatpush1.xpose.msra.mxu0 0.0
    %3960 = vmatprep.subr.mxu0 0.0
    %3961 = vmatpush1.xpose.msra.mxu0 0.0
    %3962 = vmatprep.subr.mxu0 0.0
    %3963 = vmatpush1.xpose.msra.mxu0 0.0
    %3964 = vmatprep.subr.mxu0 0.0
    %3965 = vmatpush1.xpose.msra.mxu0 0.0
    %3966 = vmatprep.subr.mxu0 0.0
    %3967 = vmatpush1.xpose.msra.mxu0 0.0
    %3968 = vmatprep.subr.mxu0 0.0
    %3969 = vmatpush1.xpose.msra.mxu0 0.0
    %3970 = vmatprep.subr.mxu0 0.0
    %3971 = vmatpush1.xpose.msra.mxu0 0.0
    %3972 = vmatprep.subr.mxu0 0.0
    %3973 = vmatpush1.xpose.msra.mxu0 0.0
    %3974 = vmatprep.subr.mxu0 0.0
    %3975 = vmatpush1.xpose.msra.mxu0 0.0
    %3976 = vmatprep.subr.mxu0 0.0
    %3977 = vmatpush1.xpose.msra.mxu0 0.0
    %3978 = vmatprep.subr.mxu0 0.0
    %3979 = vmatpush1.xpose.msra.mxu0 0.0
    %3980 = vmatprep.subr.mxu0 0.0
    %3981 = vmatpush1.xpose.msra.mxu0 %v3948
    %3982 = vmatprep.subr.mxu0 0.0
    %3983 = vmatpush2.xpose.msra.mxu0 0.0
    %3984 = vmatprep.subr.mxu0 0.0
    %3985 = vmatpush2.xpose.msra.mxu0 0.0
    %3986 = vmatprep.subr.mxu0 0.0
    %3987 = vmatpush2.xpose.msra.mxu0 0.0
    %3988 = vmatprep.subr.mxu0 0.0
    %3989 = vmatpush2.xpose.msra.mxu0 0.0
    %3990 = vmatprep.subr.mxu0 0.0
    %3991 = vmatpush2.xpose.msra.mxu0 0.0
    %3992 = vmatprep.subr.mxu0 0.0
    %3993 = vmatpush2.xpose.msra.mxu0 0.0
    %3994 = vmatprep.subr.mxu0 0.0
    %3995 = vmatpush2.xpose.msra.mxu0 0.0
    %3996 = vmatprep.subr.mxu0 0.0
    %3997 = vmatpush2.xpose.msra.mxu0 0.0
    %3998 = vmatprep.subr.mxu0 0.0
    %3999 = vmatpush2.xpose.msra.mxu0 0.0
    %4000 = vmatprep.subr.mxu0 0.0
    %4001 = vmatpush2.xpose.msra.mxu0 0.0
    %4002 = vmatprep.subr.mxu0 0.0
    %4003 = vmatpush2.xpose.msra.mxu0 0.0
    %4004 = vmatprep.subr.mxu0 0.0
    %4005 = vmatpush2.xpose.msra.mxu0 0.0
    %4006 = vmatprep.subr.mxu0 0.0
    %4007 = vmatpush2.xpose.msra.mxu0 0.0
    %4008 = vmatprep.subr.mxu0 0.0
    %4009 = vmatpush2.xpose.msra.mxu0 0.0
    %4010 = vmatprep.subr.mxu0 0.0
    %4011 = vmatpush2.xpose.msra.mxu0 0.0
    %4012 = vmatprep.subr.mxu0 0.0
    %4013 = vmatpush2.xpose.msra.mxu0 0.0
    %4014 = vmatprep.mubr.f32.mxu0 0.0
    %4015 = vmatmul.mubr.f32.gmra.mxu0 %v3946
    %v4016 = vpop.f32.mrf.mxu0
    %v4017 = vadd.f32 %v48, %v4016
    %v4018 = vpop.f32.mrf.mxu0
    %4019 = vdwg.mxu0
    %4020 = vrot.lane.b32.xlu0 %v3487, 96
    %v4021 = vpop.permute.xlu0 %4020
    %v4022 = vsel %vm175, %v3473, 0
    %v4024 = vsel %vm175, %v4021, 0
    %4026 = vmatprep.subr.mxu0 0.0
    %4027 = vmatpush1.xpose.msra.mxu0 0.0
    %4028 = vmatprep.subr.mxu0 0.0
    %4029 = vmatpush1.xpose.msra.mxu0 0.0
    %4030 = vmatprep.subr.mxu0 0.0
    %4031 = vmatpush1.xpose.msra.mxu0 0.0
    %4032 = vmatprep.subr.mxu0 0.0
    %4033 = vmatpush1.xpose.msra.mxu0 0.0
    %4034 = vmatprep.subr.mxu0 0.0
    %4035 = vmatpush1.xpose.msra.mxu0 0.0
    %4036 = vmatprep.subr.mxu0 0.0
    %4037 = vmatpush1.xpose.msra.mxu0 0.0
    %4038 = vmatprep.subr.mxu0 0.0
    %4039 = vmatpush1.xpose.msra.mxu0 0.0
    %4040 = vmatprep.subr.mxu0 0.0
    %4041 = vmatpush1.xpose.msra.mxu0 0.0
    %4042 = vmatprep.subr.mxu0 0.0
    %4043 = vmatpush1.xpose.msra.mxu0 0.0
    %4044 = vmatprep.subr.mxu0 0.0
    %4045 = vmatpush1.xpose.msra.mxu0 0.0
    %4046 = vmatprep.subr.mxu0 0.0
    %4047 = vmatpush1.xpose.msra.mxu0 0.0
    %4048 = vmatprep.subr.mxu0 0.0
    %4049 = vmatpush1.xpose.msra.mxu0 0.0
    %4050 = vmatprep.subr.mxu0 0.0
    %4051 = vmatpush1.xpose.msra.mxu0 0.0
    %4052 = vmatprep.subr.mxu0 0.0
    %4053 = vmatpush1.xpose.msra.mxu0 0.0
    %4054 = vmatprep.subr.mxu0 0.0
    %4055 = vmatpush1.xpose.msra.mxu0 0.0
    %4056 = vmatprep.subr.mxu0 0.0
    %4057 = vmatpush1.xpose.msra.mxu0 %v4024
    %4058 = vmatprep.subr.mxu0 0.0
    %4059 = vmatpush2.xpose.msra.mxu0 0.0
    %4060 = vmatprep.subr.mxu0 0.0
    %4061 = vmatpush2.xpose.msra.mxu0 0.0
    %4062 = vmatprep.subr.mxu0 0.0
    %4063 = vmatpush2.xpose.msra.mxu0 0.0
    %4064 = vmatprep.subr.mxu0 0.0
    %4065 = vmatpush2.xpose.msra.mxu0 0.0
    %4066 = vmatprep.subr.mxu0 0.0
    %4067 = vmatpush2.xpose.msra.mxu0 0.0
    %4068 = vmatprep.subr.mxu0 0.0
    %4069 = vmatpush2.xpose.msra.mxu0 0.0
    %4070 = vmatprep.subr.mxu0 0.0
    %4071 = vmatpush2.xpose.msra.mxu0 0.0
    %4072 = vmatprep.subr.mxu0 0.0
    %4073 = vmatpush2.xpose.msra.mxu0 0.0
    %4074 = vmatprep.subr.mxu0 0.0
    %4075 = vmatpush2.xpose.msra.mxu0 0.0
    %4076 = vmatprep.subr.mxu0 0.0
    %4077 = vmatpush2.xpose.msra.mxu0 0.0
    %4078 = vmatprep.subr.mxu0 0.0
    %4079 = vmatpush2.xpose.msra.mxu0 0.0
    %4080 = vmatprep.subr.mxu0 0.0
    %4081 = vmatpush2.xpose.msra.mxu0 0.0
    %4082 = vmatprep.subr.mxu0 0.0
    %4083 = vmatpush2.xpose.msra.mxu0 0.0
    %4084 = vmatprep.subr.mxu0 0.0
    %4085 = vmatpush2.xpose.msra.mxu0 0.0
    %4086 = vmatprep.subr.mxu0 0.0
    %4087 = vmatpush2.xpose.msra.mxu0 0.0
    %4088 = vmatprep.subr.mxu0 0.0
    %4089 = vmatpush2.xpose.msra.mxu0 0.0
    %4090 = vmatprep.mubr.f32.mxu0 0.0
    %4091 = vmatmul.mubr.f32.gmra.mxu0 %v4022
    %v4092 = vpop.f32.mrf.mxu0
    %v4093 = vadd.f32 %v48, %v4092
    %v4094 = vpop.f32.mrf.mxu0
    %4095 = vdwg.mxu0
    %v4096 = vsel %vm175, %v3561, -inf
    %4097 = vmax.xlane.f32.xlu0 %v4096
    %v4098 = vpop.xlane.xlu0 %4097
    %v4099 = vsel %vm175, %v3637, -inf
    %4100 = vmax.xlane.f32.xlu0 %v4099
    %v4101 = vpop.xlane.xlu0 %4100
    %v4102 = vsel %vm175, %v3713, -inf
    %4103 = vmax.xlane.f32.xlu0 %v4102
    %v4104 = vpop.xlane.xlu0 %4103
    %v4105 = vsel %vm175, %v3789, -inf
    %4106 = vmax.xlane.f32.xlu0 %v4105
    %v4107 = vpop.xlane.xlu0 %4106
    %v4108 = vsel %vm175, %v3865, -inf
    %4109 = vmax.xlane.f32.xlu0 %v4108
    %v4110 = vpop.xlane.xlu0 %4109
    %v4111 = vsel %vm175, %v3941, -inf
    %4112 = vmax.xlane.f32.xlu0 %v4111
    %v4113 = vpop.xlane.xlu0 %4112
    %v4114 = vsel %vm175, %v4017, -inf
    %4115 = vmax.xlane.f32.xlu0 %v4114
    %v4116 = vpop.xlane.xlu0 %4115
    %v4117 = vsel %vm175, %v4093, -inf
    %4118 = vmax.xlane.f32.xlu0 %v4117
    %v4119 = vpop.xlane.xlu0 %4118
    %v4120 = vsub.f32 %v3561, %v4098
    %v4121 = vsub.f32 %v3637, %v4101
    %v4122 = vsub.f32 %v3713, %v4104
    %v4123 = vsub.f32 %v3789, %v4107
    %v4124 = vsub.f32 %v3865, %v4110
    %v4125 = vsub.f32 %v3941, %v4113
    %v4126 = vsub.f32 %v4017, %v4116
    %v4127 = vsub.f32 %v4093, %v4119
    %v4128 = vmul.f32 %v4120, 1.442695
    %v4129 = vpow.pop %v4128
    %v4130 = vmul.f32 %v4121, 1.442695
    %v4131 = vpow.pop %v4130
    %v4132 = vmul.f32 %v4122, 1.442695
    %v4133 = vpow.pop %v4132
    %v4134 = vmul.f32 %v4123, 1.442695
    %v4135 = vpow.pop %v4134
    %v4136 = vmul.f32 %v4124, 1.442695
    %v4137 = vpow.pop %v4136
    %v4138 = vmul.f32 %v4125, 1.442695
    %v4139 = vpow.pop %v4138
    %v4140 = vmul.f32 %v4126, 1.442695
    %v4141 = vpow.pop %v4140
    %v4142 = vmul.f32 %v4127, 1.442695
    %v4143 = vpow.pop %v4142
    %v4144 = vsel %vm175, %v4129, 0.0
    %4145 = vadd.xlane.f32.xlu0 %v4144
    %v4146 = vpop.xlane.xlu0 %4145
    %v4147 = vsel %vm175, %v4131, 0.0
    %4148 = vadd.xlane.f32.xlu0 %v4147
    %v4149 = vpop.xlane.xlu0 %4148
    %v4150 = vsel %vm175, %v4133, 0.0
    %4151 = vadd.xlane.f32.xlu0 %v4150
    %v4152 = vpop.xlane.xlu0 %4151
    %v4153 = vsel %vm175, %v4135, 0.0
    %4154 = vadd.xlane.f32.xlu0 %v4153
    %v4155 = vpop.xlane.xlu0 %4154
    %v4156 = vsel %vm175, %v4137, 0.0
    %4157 = vadd.xlane.f32.xlu0 %v4156
    %v4158 = vpop.xlane.xlu0 %4157
    %v4159 = vsel %vm175, %v4139, 0.0
    %4160 = vadd.xlane.f32.xlu0 %v4159
    %v4161 = vpop.xlane.xlu0 %4160
    %v4162 = vsel %vm175, %v4141, 0.0
    %4163 = vadd.xlane.f32.xlu0 %v4162
    %v4164 = vpop.xlane.xlu0 %4163
    %v4165 = vsel %vm175, %v4143, 0.0
    %4166 = vadd.xlane.f32.xlu0 %v4165
    %v4167 = vpop.xlane.xlu0 %4166
    %v4168 = vrcp.pop %v4146
    %v4169 = vmul.f32 %v4129, %v4168
    %v4170 = vrcp.pop %v4149
    %v4171 = vmul.f32 %v4131, %v4170
    %v4172 = vrcp.pop %v4152
    %v4173 = vmul.f32 %v4133, %v4172
    %v4174 = vrcp.pop %v4155
    %v4175 = vmul.f32 %v4135, %v4174
    %v4176 = vrcp.pop %v4158
    %v4177 = vmul.f32 %v4137, %v4176
    %v4178 = vrcp.pop %v4161
    %v4179 = vmul.f32 %v4139, %v4178
    %v4180 = vrcp.pop %v4164
    %v4181 = vmul.f32 %v4141, %v4180
    %v4182 = vrcp.pop %v4167
    %v4183 = vmul.f32 %v4143, %v4182
    %4184 = vrot.lane.b32.xlu0 %v3452, 64
    %v4185 = vpop.permute.xlu0 %4184
    %v4188 = vsel %vm175, %v4169, 0
    %4190 = vmatprep.subr.mxu0 0.0
    %4191 = vmatpush1.msra.mxu0 0.0
    %4192 = vmatprep.subr.mxu0 0.0
    %4193 = vmatpush1.msra.mxu0 0.0
    %4194 = vmatprep.subr.mxu0 0.0
    %4195 = vmatpush1.msra.mxu0 0.0
    %4196 = vmatprep.subr.mxu0 0.0
    %4197 = vmatpush1.msra.mxu0 0.0
    %4198 = vmatprep.subr.mxu0 0.0
    %4199 = vmatpush1.msra.mxu0 0.0
    %4200 = vmatprep.subr.mxu0 0.0
    %4201 = vmatpush1.msra.mxu0 0.0
    %4202 = vmatprep.subr.mxu0 0.0
    %4203 = vmatpush1.msra.mxu0 0.0
    %4204 = vmatprep.subr.mxu0 0.0
    %4205 = vmatpush1.msra.mxu0 0.0
    %4206 = vmatprep.subr.mxu0 0.0
    %4207 = vmatpush1.msra.mxu0 0.0
    %4208 = vmatprep.subr.mxu0 0.0
    %4209 = vmatpush1.msra.mxu0 0.0
    %4210 = vmatprep.subr.mxu0 0.0
    %4211 = vmatpush1.msra.mxu0 0.0
    %4212 = vmatprep.subr.mxu0 0.0
    %4213 = vmatpush1.msra.mxu0 0.0
    %4214 = vmatprep.subr.mxu0 0.0
    %4215 = vmatpush1.msra.mxu0 0.0
    %4216 = vmatprep.subr.mxu0 0.0
    %4217 = vmatpush1.msra.mxu0 0.0
    %4218 = vmatprep.subr.mxu0 0.0
    %4219 = vmatpush1.msra.mxu0 0.0
    %4220 = vmatprep.subr.mxu0 0.0
    %4221 = vmatpush1.msra.mxu0 %v4185
    %4222 = vmatprep.subr.mxu0 0.0
    %4223 = vmatpush2.msra.mxu0 0.0
    %4224 = vmatprep.subr.mxu0 0.0
    %4225 = vmatpush2.msra.mxu0 0.0
    %4226 = vmatprep.subr.mxu0 0.0
    %4227 = vmatpush2.msra.mxu0 0.0
    %4228 = vmatprep.subr.mxu0 0.0
    %4229 = vmatpush2.msra.mxu0 0.0
    %4230 = vmatprep.subr.mxu0 0.0
    %4231 = vmatpush2.msra.mxu0 0.0
    %4232 = vmatprep.subr.mxu0 0.0
    %4233 = vmatpush2.msra.mxu0 0.0
    %4234 = vmatprep.subr.mxu0 0.0
    %4235 = vmatpush2.msra.mxu0 0.0
    %4236 = vmatprep.subr.mxu0 0.0
    %4237 = vmatpush2.msra.mxu0 0.0
    %4238 = vmatprep.subr.mxu0 0.0
    %4239 = vmatpush2.msra.mxu0 0.0
    %4240 = vmatprep.subr.mxu0 0.0
    %4241 = vmatpush2.msra.mxu0 0.0
    %4242 = vmatprep.subr.mxu0 0.0
    %4243 = vmatpush2.msra.mxu0 0.0
    %4244 = vmatprep.subr.mxu0 0.0
    %4245 = vmatpush2.msra.mxu0 0.0
    %4246 = vmatprep.subr.mxu0 0.0
    %4247 = vmatpush2.msra.mxu0 0.0
    %4248 = vmatprep.subr.mxu0 0.0
    %4249 = vmatpush2.msra.mxu0 0.0
    %4250 = vmatprep.subr.mxu0 0.0
    %4251 = vmatpush2.msra.mxu0 0.0
    %4252 = vmatprep.subr.mxu0 0.0
    %4253 = vmatpush2.msra.mxu0 0.0
    %4254 = vmatprep.mubr.f32.mxu0 0.0
    %4255 = vmatmul.mubr.f32.gmra.mxu0 %v4188
    %v4256 = vpop.f32.mrf.mxu0
    %v4257 = vadd.f32 0.0, %v4256
    %v4258 = vpop.f32.mrf.mxu0
    %4259 = vdwg.mxu0
    %4260 = vrot.lane.b32.xlu0 %v3457, 64
    %v4261 = vpop.permute.xlu0 %4260
    %v4264 = vsel %vm175, %v4171, 0
    %4266 = vmatprep.subr.mxu0 0.0
    %4267 = vmatpush1.msra.mxu0 0.0
    %4268 = vmatprep.subr.mxu0 0.0
    %4269 = vmatpush1.msra.mxu0 0.0
    %4270 = vmatprep.subr.mxu0 0.0
    %4271 = vmatpush1.msra.mxu0 0.0
    %4272 = vmatprep.subr.mxu0 0.0
    %4273 = vmatpush1.msra.mxu0 0.0
    %4274 = vmatprep.subr.mxu0 0.0
    %4275 = vmatpush1.msra.mxu0 0.0
    %4276 = vmatprep.subr.mxu0 0.0
    %4277 = vmatpush1.msra.mxu0 0.0
    %4278 = vmatprep.subr.mxu0 0.0
    %4279 = vmatpush1.msra.mxu0 0.0
    %4280 = vmatprep.subr.mxu0 0.0
    %4281 = vmatpush1.msra.mxu0 0.0
    %4282 = vmatprep.subr.mxu0 0.0
    %4283 = vmatpush1.msra.mxu0 0.0
    %4284 = vmatprep.subr.mxu0 0.0
    %4285 = vmatpush1.msra.mxu0 0.0
    %4286 = vmatprep.subr.mxu0 0.0
    %4287 = vmatpush1.msra.mxu0 0.0
    %4288 = vmatprep.subr.mxu0 0.0
    %4289 = vmatpush1.msra.mxu0 0.0
    %4290 = vmatprep.subr.mxu0 0.0
    %4291 = vmatpush1.msra.mxu0 0.0
    %4292 = vmatprep.subr.mxu0 0.0
    %4293 = vmatpush1.msra.mxu0 0.0
    %4294 = vmatprep.subr.mxu0 0.0
    %4295 = vmatpush1.msra.mxu0 0.0
    %4296 = vmatprep.subr.mxu0 0.0
    %4297 = vmatpush1.msra.mxu0 %v4261
    %4298 = vmatprep.subr.mxu0 0.0
    %4299 = vmatpush2.msra.mxu0 0.0
    %4300 = vmatprep.subr.mxu0 0.0
    %4301 = vmatpush2.msra.mxu0 0.0
    %4302 = vmatprep.subr.mxu0 0.0
    %4303 = vmatpush2.msra.mxu0 0.0
    %4304 = vmatprep.subr.mxu0 0.0
    %4305 = vmatpush2.msra.mxu0 0.0
    %4306 = vmatprep.subr.mxu0 0.0
    %4307 = vmatpush2.msra.mxu0 0.0
    %4308 = vmatprep.subr.mxu0 0.0
    %4309 = vmatpush2.msra.mxu0 0.0
    %4310 = vmatprep.subr.mxu0 0.0
    %4311 = vmatpush2.msra.mxu0 0.0
    %4312 = vmatprep.subr.mxu0 0.0
    %4313 = vmatpush2.msra.mxu0 0.0
    %4314 = vmatprep.subr.mxu0 0.0
    %4315 = vmatpush2.msra.mxu0 0.0
    %4316 = vmatprep.subr.mxu0 0.0
    %4317 = vmatpush2.msra.mxu0 0.0
    %4318 = vmatprep.subr.mxu0 0.0
    %4319 = vmatpush2.msra.mxu0 0.0
    %4320 = vmatprep.subr.mxu0 0.0
    %4321 = vmatpush2.msra.mxu0 0.0
    %4322 = vmatprep.subr.mxu0 0.0
    %4323 = vmatpush2.msra.mxu0 0.0
    %4324 = vmatprep.subr.mxu0 0.0
    %4325 = vmatpush2.msra.mxu0 0.0
    %4326 = vmatprep.subr.mxu0 0.0
    %4327 = vmatpush2.msra.mxu0 0.0
    %4328 = vmatprep.subr.mxu0 0.0
    %4329 = vmatpush2.msra.mxu0 0.0
    %4330 = vmatprep.mubr.f32.mxu0 0.0
    %4331 = vmatmul.mubr.f32.gmra.mxu0 %v4264
    %v4332 = vpop.f32.mrf.mxu0
    %v4333 = vadd.f32 0.0, %v4332
    %v4334 = vpop.f32.mrf.mxu0
    %4335 = vdwg.mxu0
    %4336 = vrot.lane.b32.xlu0 %v3477, 64
    %v4337 = vpop.permute.xlu0 %4336
    %v4340 = vsel %vm175, %v4173, 0
    %4342 = vmatprep.subr.mxu0 0.0
    %4343 = vmatpush1.msra.mxu0 0.0
    %4344 = vmatprep.subr.mxu0 0.0
    %4345 = vmatpush1.msra.mxu0 0.0
    %4346 = vmatprep.subr.mxu0 0.0
    %4347 = vmatpush1.msra.mxu0 0.0
    %4348 = vmatprep.subr.mxu0 0.0
    %4349 = vmatpush1.msra.mxu0 0.0
    %4350 = vmatprep.subr.mxu0 0.0
    %4351 = vmatpush1.msra.mxu0 0.0
    %4352 = vmatprep.subr.mxu0 0.0
    %4353 = vmatpush1.msra.mxu0 0.0
    %4354 = vmatprep.subr.mxu0 0.0
    %4355 = vmatpush1.msra.mxu0 0.0
    %4356 = vmatprep.subr.mxu0 0.0
    %4357 = vmatpush1.msra.mxu0 0.0
    %4358 = vmatprep.subr.mxu0 0.0
    %4359 = vmatpush1.msra.mxu0 0.0
    %4360 = vmatprep.subr.mxu0 0.0
    %4361 = vmatpush1.msra.mxu0 0.0
    %4362 = vmatprep.subr.mxu0 0.0
    %4363 = vmatpush1.msra.mxu0 0.0
    %4364 = vmatprep.subr.mxu0 0.0
    %4365 = vmatpush1.msra.mxu0 0.0
    %4366 = vmatprep.subr.mxu0 0.0
    %4367 = vmatpush1.msra.mxu0 0.0
    %4368 = vmatprep.subr.mxu0 0.0
    %4369 = vmatpush1.msra.mxu0 0.0
    %4370 = vmatprep.subr.mxu0 0.0
    %4371 = vmatpush1.msra.mxu0 0.0
    %4372 = vmatprep.subr.mxu0 0.0
    %4373 = vmatpush1.msra.mxu0 %v4337
    %4374 = vmatprep.subr.mxu0 0.0
    %4375 = vmatpush2.msra.mxu0 0.0
    %4376 = vmatprep.subr.mxu0 0.0
    %4377 = vmatpush2.msra.mxu0 0.0
    %4378 = vmatprep.subr.mxu0 0.0
    %4379 = vmatpush2.msra.mxu0 0.0
    %4380 = vmatprep.subr.mxu0 0.0
    %4381 = vmatpush2.msra.mxu0 0.0
    %4382 = vmatprep.subr.mxu0 0.0
    %4383 = vmatpush2.msra.mxu0 0.0
    %4384 = vmatprep.subr.mxu0 0.0
    %4385 = vmatpush2.msra.mxu0 0.0
    %4386 = vmatprep.subr.mxu0 0.0
    %4387 = vmatpush2.msra.mxu0 0.0
    %4388 = vmatprep.subr.mxu0 0.0
    %4389 = vmatpush2.msra.mxu0 0.0
    %4390 = vmatprep.subr.mxu0 0.0
    %4391 = vmatpush2.msra.mxu0 0.0
    %4392 = vmatprep.subr.mxu0 0.0
    %4393 = vmatpush2.msra.mxu0 0.0
    %4394 = vmatprep.subr.mxu0 0.0
    %4395 = vmatpush2.msra.mxu0 0.0
    %4396 = vmatprep.subr.mxu0 0.0
    %4397 = vmatpush2.msra.mxu0 0.0
    %4398 = vmatprep.subr.mxu0 0.0
    %4399 = vmatpush2.msra.mxu0 0.0
    %4400 = vmatprep.subr.mxu0 0.0
    %4401 = vmatpush2.msra.mxu0 0.0
    %4402 = vmatprep.subr.mxu0 0.0
    %4403 = vmatpush2.msra.mxu0 0.0
    %4404 = vmatprep.subr.mxu0 0.0
    %4405 = vmatpush2.msra.mxu0 0.0
    %4406 = vmatprep.mubr.f32.mxu0 0.0
    %4407 = vmatmul.mubr.f32.gmra.mxu0 %v4340
    %v4408 = vpop.f32.mrf.mxu0
    %v4409 = vadd.f32 0.0, %v4408
    %v4410 = vpop.f32.mrf.mxu0
    %4411 = vdwg.mxu0
    %4412 = vrot.lane.b32.xlu0 %v3479, 64
    %v4413 = vpop.permute.xlu0 %4412
    %v4416 = vsel %vm175, %v4175, 0
    %4418 = vmatprep.subr.mxu0 0.0
    %4419 = vmatpush1.msra.mxu0 0.0
    %4420 = vmatprep.subr.mxu0 0.0
    %4421 = vmatpush1.msra.mxu0 0.0
    %4422 = vmatprep.subr.mxu0 0.0
    %4423 = vmatpush1.msra.mxu0 0.0
    %4424 = vmatprep.subr.mxu0 0.0
    %4425 = vmatpush1.msra.mxu0 0.0
    %4426 = vmatprep.subr.mxu0 0.0
    %4427 = vmatpush1.msra.mxu0 0.0
    %4428 = vmatprep.subr.mxu0 0.0
    %4429 = vmatpush1.msra.mxu0 0.0
    %4430 = vmatprep.subr.mxu0 0.0
    %4431 = vmatpush1.msra.mxu0 0.0
    %4432 = vmatprep.subr.mxu0 0.0
    %4433 = vmatpush1.msra.mxu0 0.0
    %4434 = vmatprep.subr.mxu0 0.0
    %4435 = vmatpush1.msra.mxu0 0.0
    %4436 = vmatprep.subr.mxu0 0.0
    %4437 = vmatpush1.msra.mxu0 0.0
    %4438 = vmatprep.subr.mxu0 0.0
    %4439 = vmatpush1.msra.mxu0 0.0
    %4440 = vmatprep.subr.mxu0 0.0
    %4441 = vmatpush1.msra.mxu0 0.0
    %4442 = vmatprep.subr.mxu0 0.0
    %4443 = vmatpush1.msra.mxu0 0.0
    %4444 = vmatprep.subr.mxu0 0.0
    %4445 = vmatpush1.msra.mxu0 0.0
    %4446 = vmatprep.subr.mxu0 0.0
    %4447 = vmatpush1.msra.mxu0 0.0
    %4448 = vmatprep.subr.mxu0 0.0
    %4449 = vmatpush1.msra.mxu0 %v4413
    %4450 = vmatprep.subr.mxu0 0.0
    %4451 = vmatpush2.msra.mxu0 0.0
    %4452 = vmatprep.subr.mxu0 0.0
    %4453 = vmatpush2.msra.mxu0 0.0
    %4454 = vmatprep.subr.mxu0 0.0
    %4455 = vmatpush2.msra.mxu0 0.0
    %4456 = vmatprep.subr.mxu0 0.0
    %4457 = vmatpush2.msra.mxu0 0.0
    %4458 = vmatprep.subr.mxu0 0.0
    %4459 = vmatpush2.msra.mxu0 0.0
    %4460 = vmatprep.subr.mxu0 0.0
    %4461 = vmatpush2.msra.mxu0 0.0
    %4462 = vmatprep.subr.mxu0 0.0
    %4463 = vmatpush2.msra.mxu0 0.0
    %4464 = vmatprep.subr.mxu0 0.0
    %4465 = vmatpush2.msra.mxu0 0.0
    %4466 = vmatprep.subr.mxu0 0.0
    %4467 = vmatpush2.msra.mxu0 0.0
    %4468 = vmatprep.subr.mxu0 0.0
    %4469 = vmatpush2.msra.mxu0 0.0
    %4470 = vmatprep.subr.mxu0 0.0
    %4471 = vmatpush2.msra.mxu0 0.0
    %4472 = vmatprep.subr.mxu0 0.0
    %4473 = vmatpush2.msra.mxu0 0.0
    %4474 = vmatprep.subr.mxu0 0.0
    %4475 = vmatpush2.msra.mxu0 0.0
    %4476 = vmatprep.subr.mxu0 0.0
    %4477 = vmatpush2.msra.mxu0 0.0
    %4478 = vmatprep.subr.mxu0 0.0
    %4479 = vmatpush2.msra.mxu0 0.0
    %4480 = vmatprep.subr.mxu0 0.0
    %4481 = vmatpush2.msra.mxu0 0.0
    %4482 = vmatprep.mubr.f32.mxu0 0.0
    %4483 = vmatmul.mubr.f32.gmra.mxu0 %v4416
    %v4484 = vpop.f32.mrf.mxu0
    %v4485 = vadd.f32 0.0, %v4484
    %v4486 = vpop.f32.mrf.mxu0
    %4487 = vdwg.mxu0
    %4488 = vrot.lane.b32.xlu0 %v3481, 64
    %v4489 = vpop.permute.xlu0 %4488
    %v4492 = vsel %vm175, %v4177, 0
    %4494 = vmatprep.subr.mxu0 0.0
    %4495 = vmatpush1.msra.mxu0 0.0
    %4496 = vmatprep.subr.mxu0 0.0
    %4497 = vmatpush1.msra.mxu0 0.0
    %4498 = vmatprep.subr.mxu0 0.0
    %4499 = vmatpush1.msra.mxu0 0.0
    %4500 = vmatprep.subr.mxu0 0.0
    %4501 = vmatpush1.msra.mxu0 0.0
    %4502 = vmatprep.subr.mxu0 0.0
    %4503 = vmatpush1.msra.mxu0 0.0
    %4504 = vmatprep.subr.mxu0 0.0
    %4505 = vmatpush1.msra.mxu0 0.0
    %4506 = vmatprep.subr.mxu0 0.0
    %4507 = vmatpush1.msra.mxu0 0.0
    %4508 = vmatprep.subr.mxu0 0.0
    %4509 = vmatpush1.msra.mxu0 0.0
    %4510 = vmatprep.subr.mxu0 0.0
    %4511 = vmatpush1.msra.mxu0 0.0
    %4512 = vmatprep.subr.mxu0 0.0
    %4513 = vmatpush1.msra.mxu0 0.0
    %4514 = vmatprep.subr.mxu0 0.0
    %4515 = vmatpush1.msra.mxu0 0.0
    %4516 = vmatprep.subr.mxu0 0.0
    %4517 = vmatpush1.msra.mxu0 0.0
    %4518 = vmatprep.subr.mxu0 0.0
    %4519 = vmatpush1.msra.mxu0 0.0
    %4520 = vmatprep.subr.mxu0 0.0
    %4521 = vmatpush1.msra.mxu0 0.0
    %4522 = vmatprep.subr.mxu0 0.0
    %4523 = vmatpush1.msra.mxu0 0.0
    %4524 = vmatprep.subr.mxu0 0.0
    %4525 = vmatpush1.msra.mxu0 %v4489
    %4526 = vmatprep.subr.mxu0 0.0
    %4527 = vmatpush2.msra.mxu0 0.0
    %4528 = vmatprep.subr.mxu0 0.0
    %4529 = vmatpush2.msra.mxu0 0.0
    %4530 = vmatprep.subr.mxu0 0.0
    %4531 = vmatpush2.msra.mxu0 0.0
    %4532 = vmatprep.subr.mxu0 0.0
    %4533 = vmatpush2.msra.mxu0 0.0
    %4534 = vmatprep.subr.mxu0 0.0
    %4535 = vmatpush2.msra.mxu0 0.0
    %4536 = vmatprep.subr.mxu0 0.0
    %4537 = vmatpush2.msra.mxu0 0.0
    %4538 = vmatprep.subr.mxu0 0.0
    %4539 = vmatpush2.msra.mxu0 0.0
    %4540 = vmatprep.subr.mxu0 0.0
    %4541 = vmatpush2.msra.mxu0 0.0
    %4542 = vmatprep.subr.mxu0 0.0
    %4543 = vmatpush2.msra.mxu0 0.0
    %4544 = vmatprep.subr.mxu0 0.0
    %4545 = vmatpush2.msra.mxu0 0.0
    %4546 = vmatprep.subr.mxu0 0.0
    %4547 = vmatpush2.msra.mxu0 0.0
    %4548 = vmatprep.subr.mxu0 0.0
    %4549 = vmatpush2.msra.mxu0 0.0
    %4550 = vmatprep.subr.mxu0 0.0
    %4551 = vmatpush2.msra.mxu0 0.0
    %4552 = vmatprep.subr.mxu0 0.0
    %4553 = vmatpush2.msra.mxu0 0.0
    %4554 = vmatprep.subr.mxu0 0.0
    %4555 = vmatpush2.msra.mxu0 0.0
    %4556 = vmatprep.subr.mxu0 0.0
    %4557 = vmatpush2.msra.mxu0 0.0
    %4558 = vmatprep.mubr.f32.mxu0 0.0
    %4559 = vmatmul.mubr.f32.gmra.mxu0 %v4492
    %v4560 = vpop.f32.mrf.mxu0
    %v4561 = vadd.f32 0.0, %v4560
    %v4562 = vpop.f32.mrf.mxu0
    %4563 = vdwg.mxu0
    %4564 = vrot.lane.b32.xlu0 %v3483, 64
    %v4565 = vpop.permute.xlu0 %4564
    %v4568 = vsel %vm175, %v4179, 0
    %4570 = vmatprep.subr.mxu0 0.0
    %4571 = vmatpush1.msra.mxu0 0.0
    %4572 = vmatprep.subr.mxu0 0.0
    %4573 = vmatpush1.msra.mxu0 0.0
    %4574 = vmatprep.subr.mxu0 0.0
    %4575 = vmatpush1.msra.mxu0 0.0
    %4576 = vmatprep.subr.mxu0 0.0
    %4577 = vmatpush1.msra.mxu0 0.0
    %4578 = vmatprep.subr.mxu0 0.0
    %4579 = vmatpush1.msra.mxu0 0.0
    %4580 = vmatprep.subr.mxu0 0.0
    %4581 = vmatpush1.msra.mxu0 0.0
    %4582 = vmatprep.subr.mxu0 0.0
    %4583 = vmatpush1.msra.mxu0 0.0
    %4584 = vmatprep.subr.mxu0 0.0
    %4585 = vmatpush1.msra.mxu0 0.0
    %4586 = vmatprep.subr.mxu0 0.0
    %4587 = vmatpush1.msra.mxu0 0.0
    %4588 = vmatprep.subr.mxu0 0.0
    %4589 = vmatpush1.msra.mxu0 0.0
    %4590 = vmatprep.subr.mxu0 0.0
    %4591 = vmatpush1.msra.mxu0 0.0
    %4592 = vmatprep.subr.mxu0 0.0
    %4593 = vmatpush1.msra.mxu0 0.0
    %4594 = vmatprep.subr.mxu0 0.0
    %4595 = vmatpush1.msra.mxu0 0.0
    %4596 = vmatprep.subr.mxu0 0.0
    %4597 = vmatpush1.msra.mxu0 0.0
    %4598 = vmatprep.subr.mxu0 0.0
    %4599 = vmatpush1.msra.mxu0 0.0
    %4600 = vmatprep.subr.mxu0 0.0
    %4601 = vmatpush1.msra.mxu0 %v4565
    %4602 = vmatprep.subr.mxu0 0.0
    %4603 = vmatpush2.msra.mxu0 0.0
    %4604 = vmatprep.subr.mxu0 0.0
    %4605 = vmatpush2.msra.mxu0 0.0
    %4606 = vmatprep.subr.mxu0 0.0
    %4607 = vmatpush2.msra.mxu0 0.0
    %4608 = vmatprep.subr.mxu0 0.0
    %4609 = vmatpush2.msra.mxu0 0.0
    %4610 = vmatprep.subr.mxu0 0.0
    %4611 = vmatpush2.msra.mxu0 0.0
    %4612 = vmatprep.subr.mxu0 0.0
    %4613 = vmatpush2.msra.mxu0 0.0
    %4614 = vmatprep.subr.mxu0 0.0
    %4615 = vmatpush2.msra.mxu0 0.0
    %4616 = vmatprep.subr.mxu0 0.0
    %4617 = vmatpush2.msra.mxu0 0.0
    %4618 = vmatprep.subr.mxu0 0.0
    %4619 = vmatpush2.msra.mxu0 0.0
    %4620 = vmatprep.subr.mxu0 0.0
    %4621 = vmatpush2.msra.mxu0 0.0
    %4622 = vmatprep.subr.mxu0 0.0
    %4623 = vmatpush2.msra.mxu0 0.0
    %4624 = vmatprep.subr.mxu0 0.0
    %4625 = vmatpush2.msra.mxu0 0.0
    %4626 = vmatprep.subr.mxu0 0.0
    %4627 = vmatpush2.msra.mxu0 0.0
    %4628 = vmatprep.subr.mxu0 0.0
    %4629 = vmatpush2.msra.mxu0 0.0
    %4630 = vmatprep.subr.mxu0 0.0
    %4631 = vmatpush2.msra.mxu0 0.0
    %4632 = vmatprep.subr.mxu0 0.0
    %4633 = vmatpush2.msra.mxu0 0.0
    %4634 = vmatprep.mubr.f32.mxu0 0.0
    %4635 = vmatmul.mubr.f32.gmra.mxu0 %v4568
    %v4636 = vpop.f32.mrf.mxu0
    %v4637 = vadd.f32 0.0, %v4636
    %v4638 = vpop.f32.mrf.mxu0
    %4639 = vdwg.mxu0
    %4640 = vrot.lane.b32.xlu0 %v3485, 64
    %v4641 = vpop.permute.xlu0 %4640
    %v4644 = vsel %vm175, %v4181, 0
    %4646 = vmatprep.subr.mxu0 0.0
    %4647 = vmatpush1.msra.mxu0 0.0
    %4648 = vmatprep.subr.mxu0 0.0
    %4649 = vmatpush1.msra.mxu0 0.0
    %4650 = vmatprep.subr.mxu0 0.0
    %4651 = vmatpush1.msra.mxu0 0.0
    %4652 = vmatprep.subr.mxu0 0.0
    %4653 = vmatpush1.msra.mxu0 0.0
    %4654 = vmatprep.subr.mxu0 0.0
    %4655 = vmatpush1.msra.mxu0 0.0
    %4656 = vmatprep.subr.mxu0 0.0
    %4657 = vmatpush1.msra.mxu0 0.0
    %4658 = vmatprep.subr.mxu0 0.0
    %4659 = vmatpush1.msra.mxu0 0.0
    %4660 = vmatprep.subr.mxu0 0.0
    %4661 = vmatpush1.msra.mxu0 0.0
    %4662 = vmatprep.subr.mxu0 0.0
    %4663 = vmatpush1.msra.mxu0 0.0
    %4664 = vmatprep.subr.mxu0 0.0
    %4665 = vmatpush1.msra.mxu0 0.0
    %4666 = vmatprep.subr.mxu0 0.0
    %4667 = vmatpush1.msra.mxu0 0.0
    %4668 = vmatprep.subr.mxu0 0.0
    %4669 = vmatpush1.msra.mxu0 0.0
    %4670 = vmatprep.subr.mxu0 0.0
    %4671 = vmatpush1.msra.mxu0 0.0
    %4672 = vmatprep.subr.mxu0 0.0
    %4673 = vmatpush1.msra.mxu0 0.0
    %4674 = vmatprep.subr.mxu0 0.0
    %4675 = vmatpush1.msra.mxu0 0.0
    %4676 = vmatprep.subr.mxu0 0.0
    %4677 = vmatpush1.msra.mxu0 %v4641
    %4678 = vmatprep.subr.mxu0 0.0
    %4679 = vmatpush2.msra.mxu0 0.0
    %4680 = vmatprep.subr.mxu0 0.0
    %4681 = vmatpush2.msra.mxu0 0.0
    %4682 = vmatprep.subr.mxu0 0.0
    %4683 = vmatpush2.msra.mxu0 0.0
    %4684 = vmatprep.subr.mxu0 0.0
    %4685 = vmatpush2.msra.mxu0 0.0
    %4686 = vmatprep.subr.mxu0 0.0
    %4687 = vmatpush2.msra.mxu0 0.0
    %4688 = vmatprep.subr.mxu0 0.0
    %4689 = vmatpush2.msra.mxu0 0.0
    %4690 = vmatprep.subr.mxu0 0.0
    %4691 = vmatpush2.msra.mxu0 0.0
    %4692 = vmatprep.subr.mxu0 0.0
    %4693 = vmatpush2.msra.mxu0 0.0
    %4694 = vmatprep.subr.mxu0 0.0
    %4695 = vmatpush2.msra.mxu0 0.0
    %4696 = vmatprep.subr.mxu0 0.0
    %4697 = vmatpush2.msra.mxu0 0.0
    %4698 = vmatprep.subr.mxu0 0.0
    %4699 = vmatpush2.msra.mxu0 0.0
    %4700 = vmatprep.subr.mxu0 0.0
    %4701 = vmatpush2.msra.mxu0 0.0
    %4702 = vmatprep.subr.mxu0 0.0
    %4703 = vmatpush2.msra.mxu0 0.0
    %4704 = vmatprep.subr.mxu0 0.0
    %4705 = vmatpush2.msra.mxu0 0.0
    %4706 = vmatprep.subr.mxu0 0.0
    %4707 = vmatpush2.msra.mxu0 0.0
    %4708 = vmatprep.subr.mxu0 0.0
    %4709 = vmatpush2.msra.mxu0 0.0
    %4710 = vmatprep.mubr.f32.mxu0 0.0
    %4711 = vmatmul.mubr.f32.gmra.mxu0 %v4644
    %v4712 = vpop.f32.mrf.mxu0
    %v4713 = vadd.f32 0.0, %v4712
    %v4714 = vpop.f32.mrf.mxu0
    %4715 = vdwg.mxu0
    %4716 = vrot.lane.b32.xlu0 %v3487, 64
    %v4717 = vpop.permute.xlu0 %4716
    %v4720 = vsel %vm175, %v4183, 0
    %4722 = vmatprep.subr.mxu0 0.0
    %4723 = vmatpush1.msra.mxu0 0.0
    %4724 = vmatprep.subr.mxu0 0.0
    %4725 = vmatpush1.msra.mxu0 0.0
    %4726 = vmatprep.subr.mxu0 0.0
    %4727 = vmatpush1.msra.mxu0 0.0
    %4728 = vmatprep.subr.mxu0 0.0
    %4729 = vmatpush1.msra.mxu0 0.0
    %4730 = vmatprep.subr.mxu0 0.0
    %4731 = vmatpush1.msra.mxu0 0.0
    %4732 = vmatprep.subr.mxu0 0.0
    %4733 = vmatpush1.msra.mxu0 0.0
    %4734 = vmatprep.subr.mxu0 0.0
    %4735 = vmatpush1.msra.mxu0 0.0
    %4736 = vmatprep.subr.mxu0 0.0
    %4737 = vmatpush1.msra.mxu0 0.0
    %4738 = vmatprep.subr.mxu0 0.0
    %4739 = vmatpush1.msra.mxu0 0.0
    %4740 = vmatprep.subr.mxu0 0.0
    %4741 = vmatpush1.msra.mxu0 0.0
    %4742 = vmatprep.subr.mxu0 0.0
    %4743 = vmatpush1.msra.mxu0 0.0
    %4744 = vmatprep.subr.mxu0 0.0
    %4745 = vmatpush1.msra.mxu0 0.0
    %4746 = vmatprep.subr.mxu0 0.0
    %4747 = vmatpush1.msra.mxu0 0.0
    %4748 = vmatprep.subr.mxu0 0.0
    %4749 = vmatpush1.msra.mxu0 0.0
    %4750 = vmatprep.subr.mxu0 0.0
    %4751 = vmatpush1.msra.mxu0 0.0
    %4752 = vmatprep.subr.mxu0 0.0
    %4753 = vmatpush1.msra.mxu0 %v4717
    %4754 = vmatprep.subr.mxu0 0.0
    %4755 = vmatpush2.msra.mxu0 0.0
    %4756 = vmatprep.subr.mxu0 0.0
    %4757 = vmatpush2.msra.mxu0 0.0
    %4758 = vmatprep.subr.mxu0 0.0
    %4759 = vmatpush2.msra.mxu0 0.0
    %4760 = vmatprep.subr.mxu0 0.0
    %4761 = vmatpush2.msra.mxu0 0.0
    %4762 = vmatprep.subr.mxu0 0.0
    %4763 = vmatpush2.msra.mxu0 0.0
    %4764 = vmatprep.subr.mxu0 0.0
    %4765 = vmatpush2.msra.mxu0 0.0
    %4766 = vmatprep.subr.mxu0 0.0
    %4767 = vmatpush2.msra.mxu0 0.0
    %4768 = vmatprep.subr.mxu0 0.0
    %4769 = vmatpush2.msra.mxu0 0.0
    %4770 = vmatprep.subr.mxu0 0.0
    %4771 = vmatpush2.msra.mxu0 0.0
    %4772 = vmatprep.subr.mxu0 0.0
    %4773 = vmatpush2.msra.mxu0 0.0
    %4774 = vmatprep.subr.mxu0 0.0
    %4775 = vmatpush2.msra.mxu0 0.0
    %4776 = vmatprep.subr.mxu0 0.0
    %4777 = vmatpush2.msra.mxu0 0.0
    %4778 = vmatprep.subr.mxu0 0.0
    %4779 = vmatpush2.msra.mxu0 0.0
    %4780 = vmatprep.subr.mxu0 0.0
    %4781 = vmatpush2.msra.mxu0 0.0
    %4782 = vmatprep.subr.mxu0 0.0
    %4783 = vmatpush2.msra.mxu0 0.0
    %4784 = vmatprep.subr.mxu0 0.0
    %4785 = vmatpush2.msra.mxu0 0.0
    %4786 = vmatprep.mubr.f32.mxu0 0.0
    %4787 = vmatmul.mubr.f32.gmra.mxu0 %v4720
    %v4788 = vpop.f32.mrf.mxu0
    %v4789 = vadd.f32 0.0, %v4788
    %v4790 = vpop.f32.mrf.mxu0
    %4791 = vdwg.mxu0
    %4792 = vst.msk [vmem:[#allocation6] sm:$0xff] %vm175, %v3561
    %4793 = vst.msk [vmem:[#allocation6 + $0x8] sm:$0xff] %vm175, %v3713
    %4794 = vst.msk [vmem:[#allocation6 + $0x10] sm:$0xff] %vm175, %v3865
    %4795 = vst.msk [vmem:[#allocation6 + $0x18] sm:$0xff] %vm175, %v4017
    %s4796 = scalar_lea.vmem [#allocation6], 32
    %4797 = vst.msk [vmem:[%s4796] sm:$0xff] %vm175, %v3637
    %4798 = vst.msk [vmem:[%s4796 + $0x8] sm:$0xff] %vm175, %v3789
    %4799 = vst.msk [vmem:[%s4796 + $0x10] sm:$0xff] %vm175, %v3941
    %4800 = vst.msk [vmem:[%s4796 + $0x18] sm:$0xff] %vm175, %v4093
    %v4801 = vld [vmem:[%s3283] sm:$0xff]
    %v4802 = vld [vmem:[%s3283 + $0x8] sm:$0xff]
    %v4803 = vld [vmem:[%s3283 + $0x10] sm:$0xff]
    %v4804 = vld [vmem:[%s3283 + $0x18] sm:$0xff]
    %v4805 = vld [vmem:[%s3288] sm:$0x1]
    %4808 = vrot.lane.b32.xlu0 %v4409, 8
    %v4809 = vpop.permute.xlu0 %4808
    %4810 = vrot.lane.b32.xlu0 %v4485, 8
    %v4811 = vpop.permute.xlu0 %4810
    %4816 = vrot.lane.b32.xlu0 %v4561, 16
    %v4817 = vpop.permute.xlu0 %4816
    %4818 = vrot.lane.b32.xlu0 %v4637, 16
    %v4819 = vpop.permute.xlu0 %4818
    %4824 = vrot.lane.b32.xlu0 %v4713, 24
    %v4825 = vpop.permute.xlu0 %4824
    %4826 = vrot.lane.b32.xlu0 %v4789, 24
    %v4827 = vpop.permute.xlu0 %4826
    %v4830 = vsel %vm175, %v4257, %v4809
    %v4831 = vsel %vm175, %v4333, %v4811
    %v4832 = vsel %vm1518, %v4830, %v4817
    %v4833 = vsel %vm1518, %v4831, %v4819
    %v4834 = vsel %vm1521, %v4832, %v4825
    %v4835 = vsel %vm1521, %v4833, %v4827
    %v4837 = vlaneseq
    %v4838 = vshrl.u32 %v4837, 7
    %v4839 = vsub.s32 0, %v4838
    %v4840 = vrot.slane %v4805, %v4839
    %4845 = vrot.lane.b32.xlu0 %v4801, 32
    %v4846 = vpop.permute.xlu0 %4845
    %4847 = vrot.lane.b32.xlu0 %v4802, 32
    %v4848 = vpop.permute.xlu0 %4847
    %4849 = vrot.lane.b32.xlu0 %v4803, 32
    %v4850 = vpop.permute.xlu0 %4849
    %4851 = vrot.lane.b32.xlu0 %v4804, 32
    %v4852 = vpop.permute.xlu0 %4851
    %4857 = vrot.lane.b32.xlu0 %v4840, 32
    %v4858 = vpop.permute.xlu0 %4857
    %v4861 = vsel %vm61, %v4834, 0
    %v4864 = vsel %vm61, %v4835, 0
    %4866 = vmatprep.subr.mxu0 0.0
    %4867 = vmatpush1.msra.mxu0 0.0
    %4868 = vmatprep.subr.mxu0 0.0
    %4869 = vmatpush1.msra.mxu0 0.0
    %4870 = vmatprep.subr.mxu0 0.0
    %4871 = vmatpush1.msra.mxu0 0.0
    %4872 = vmatprep.subr.mxu0 0.0
    %4873 = vmatpush1.msra.mxu0 0.0
    %4874 = vmatprep.subr.mxu0 0.0
    %4875 = vmatpush1.msra.mxu0 0.0
    %4876 = vmatprep.subr.mxu0 0.0
    %4877 = vmatpush1.msra.mxu0 0.0
    %4878 = vmatprep.subr.mxu0 0.0
    %4879 = vmatpush1.msra.mxu0 0.0
    %4880 = vmatprep.subr.mxu0 0.0
    %4881 = vmatpush1.msra.mxu0 0.0
    %4882 = vmatprep.subr.mxu0 0.0
    %4883 = vmatpush1.msra.mxu0 0.0
    %4884 = vmatprep.subr.mxu0 0.0
    %4885 = vmatpush1.msra.mxu0 0.0
    %4886 = vmatprep.subr.mxu0 0.0
    %4887 = vmatpush1.msra.mxu0 0.0
    %4888 = vmatprep.subr.mxu0 0.0
    %4889 = vmatpush1.msra.mxu0 0.0
    %4890 = vmatprep.subr.mxu0 0.0
    %4891 = vmatpush1.msra.mxu0 %v4852
    %4892 = vmatprep.subr.mxu0 0.0
    %4893 = vmatpush1.msra.mxu0 %v4850
    %4894 = vmatprep.subr.mxu0 0.0
    %4895 = vmatpush1.msra.mxu0 %v4848
    %4896 = vmatprep.subr.mxu0 0.0
    %4897 = vmatpush1.msra.mxu0 %v4846
    %4898 = vmatprep.subr.mxu0 0.0
    %4899 = vmatpush2.msra.mxu0 0.0
    %4900 = vmatprep.subr.mxu0 0.0
    %4901 = vmatpush2.msra.mxu0 0.0
    %4902 = vmatprep.subr.mxu0 0.0
    %4903 = vmatpush2.msra.mxu0 0.0
    %4904 = vmatprep.subr.mxu0 0.0
    %4905 = vmatpush2.msra.mxu0 0.0
    %4906 = vmatprep.subr.mxu0 0.0
    %4907 = vmatpush2.msra.mxu0 0.0
    %4908 = vmatprep.subr.mxu0 0.0
    %4909 = vmatpush2.msra.mxu0 0.0
    %4910 = vmatprep.subr.mxu0 0.0
    %4911 = vmatpush2.msra.mxu0 0.0
    %4912 = vmatprep.subr.mxu0 0.0
    %4913 = vmatpush2.msra.mxu0 0.0
    %4914 = vmatprep.subr.mxu0 0.0
    %4915 = vmatpush2.msra.mxu0 0.0
    %4916 = vmatprep.subr.mxu0 0.0
    %4917 = vmatpush2.msra.mxu0 0.0
    %4918 = vmatprep.subr.mxu0 0.0
    %4919 = vmatpush2.msra.mxu0 0.0
    %4920 = vmatprep.subr.mxu0 0.0
    %4921 = vmatpush2.msra.mxu0 0.0
    %4922 = vmatprep.subr.mxu0 0.0
    %4923 = vmatpush2.msra.mxu0 0.0
    %4924 = vmatprep.subr.mxu0 0.0
    %4925 = vmatpush2.msra.mxu0 0.0
    %4926 = vmatprep.subr.mxu0 0.0
    %4927 = vmatpush2.msra.mxu0 0.0
    %4928 = vmatprep.subr.mxu0 0.0
    %4929 = vmatpush2.msra.mxu0 0.0
    %4930 = vmatprep.mubr.f32.mxu0 0.0
    %4931 = vmatmul.mubr.f32.gmra.mxu0 %v4861
    %v4932 = vpop.f32.mrf.mxu0
    %v4933 = vadd.f32 %v4858, %v4932
    %v4934 = vpop.f32.mrf.mxu0
    %4935 = vmatprep.mubr.f32.mxu0 0.0
    %4936 = vmatmul.mubr.f32.gmra.mxu0 %v4864
    %v4937 = vpop.f32.mrf.mxu0
    %v4938 = vadd.f32 %v4858, %v4937
    %v4939 = vpop.f32.mrf.mxu0
    %4940 = vdwg.mxu0
    %v4941 = vadd.f32 %v3281, %v4933
    %v4942 = vadd.f32 %v3282, %v4938
    %v4943 = vsel %vm61, %v4941, 0.0
    %4944 = vadd.xlane.f32.xlu0 %v4943
    %v4945 = vpop.xlane.xlu0 %4944
    %v4946 = vsel %vm61, %v4942, 0.0
    %4947 = vadd.xlane.f32.xlu0 %v4946
    %v4948 = vpop.xlane.xlu0 %4947
    %v4949 = vmul.f32 %v4945, %v1637
    %v4950 = vmul.f32 %v4948, %v1637
    %v4951 = vsub.f32 %v4941, %v4949
    %v4952 = vsub.f32 %v4942, %v4950
    %v4953 = vmul.f32 %v4951, %v4951
    %v4954 = vmul.f32 %v4952, %v4952
    %v4955 = vsel %vm61, %v4953, 0.0
    %4956 = vadd.xlane.f32.xlu0 %v4955
    %v4957 = vpop.xlane.xlu0 %4956
    %v4958 = vsel %vm61, %v4954, 0.0
    %4959 = vadd.xlane.f32.xlu0 %v4958
    %v4960 = vpop.xlane.xlu0 %4959
    %v4961 = vmul.f32 %v4957, %v1637
    %v4962 = vmul.f32 %v4960, %v1637
    %v4963 = vadd.f32 %v4961, 1e-05
    %v4964 = vadd.f32 %v4962, 1e-05
    %v4965 = vrsqrt.pop %v4963
    %v4966 = vrsqrt.pop %v4964
    %v4967 = vmul.f32 %v4951, %v4965
    %v4968 = vmul.f32 %v4952, %v4966
    %s4969 = scalar_lea.vmem %s7, 2
    %v4970 = vld [vmem:[%s4969] sm:$0x1]
    %v4972 = vlaneseq
    %v4973 = vshrl.u32 %v4972, 7
    %v4974 = vsub.s32 0, %v4973
    %v4975 = vrot.slane %v4970, %v4974
    %v4977 = vmul.f32 %v4967, %v4975
    %v4978 = vmul.f32 %v4968, %v4975
    %4979 = vrot.lane.b32.xlu0 %v4975, 96
    %v4980 = vpop.permute.xlu0 %4979
    %v4982 = vadd.f32 %v4977, %v4980
    %v4983 = vadd.f32 %v4978, %v4980
    %v4984 = vld [vmem:[%s8] sm:$0xff]
    %v4985 = vld [vmem:[%s8 + $0x8] sm:$0xff]
    %v4986 = vld [vmem:[%s8 + $0x10] sm:$0xff]
    %v4987 = vld [vmem:[%s8 + $0x18] sm:$0xff]
    %v4989 = vlaneseq
    %v4990 = vshrl.u32 %v4989, 7
    %v4991 = vsub.s32 0, %v4990
    %v4992 = vrot.slane %v49, %v4991
    %v4995 = vsel %vm61, %v4982, 0
    %v4998 = vsel %vm61, %v4983, 0
    %5000 = vmatprep.subr.mxu0 0.0
    %5001 = vmatpush1.msra.mxu0 0.0
    %5002 = vmatprep.subr.mxu0 0.0
    %5003 = vmatpush1.msra.mxu0 0.0
    %5004 = vmatprep.subr.mxu0 0.0
    %5005 = vmatpush1.msra.mxu0 0.0
    %5006 = vmatprep.subr.mxu0 0.0
    %5007 = vmatpush1.msra.mxu0 0.0
    %5008 = vmatprep.subr.mxu0 0.0
    %5009 = vmatpush1.msra.mxu0 0.0
    %5010 = vmatprep.subr.mxu0 0.0
    %5011 = vmatpush1.msra.mxu0 0.0
    %5012 = vmatprep.subr.mxu0 0.0
    %5013 = vmatpush1.msra.mxu0 0.0
    %5014 = vmatprep.subr.mxu0 0.0
    %5015 = vmatpush1.msra.mxu0 0.0
    %5016 = vmatprep.subr.mxu0 0.0
    %5017 = vmatpush1.msra.mxu0 0.0
    %5018 = vmatprep.subr.mxu0 0.0
    %5019 = vmatpush1.msra.mxu0 0.0
    %5020 = vmatprep.subr.mxu0 0.0
    %5021 = vmatpush1.msra.mxu0 0.0
    %5022 = vmatprep.subr.mxu0 0.0
    %5023 = vmatpush1.msra.mxu0 0.0
    %5024 = vmatprep.subr.mxu0 0.0
    %5025 = vmatpush1.msra.mxu0 %v4987
    %5026 = vmatprep.subr.mxu0 0.0
    %5027 = vmatpush1.msra.mxu0 %v4986
    %5028 = vmatprep.subr.mxu0 0.0
    %5029 = vmatpush1.msra.mxu0 %v4985
    %5030 = vmatprep.subr.mxu0 0.0
    %5031 = vmatpush1.msra.mxu0 %v4984
    %5032 = vmatprep.subr.mxu0 0.0
    %5033 = vmatpush2.msra.mxu0 0.0
    %5034 = vmatprep.subr.mxu0 0.0
    %5035 = vmatpush2.msra.mxu0 0.0
    %5036 = vmatprep.subr.mxu0 0.0
    %5037 = vmatpush2.msra.mxu0 0.0
    %5038 = vmatprep.subr.mxu0 0.0
    %5039 = vmatpush2.msra.mxu0 0.0
    %5040 = vmatprep.subr.mxu0 0.0
    %5041 = vmatpush2.msra.mxu0 0.0
    %5042 = vmatprep.subr.mxu0 0.0
    %5043 = vmatpush2.msra.mxu0 0.0
    %5044 = vmatprep.subr.mxu0 0.0
    %5045 = vmatpush2.msra.mxu0 0.0
    %5046 = vmatprep.subr.mxu0 0.0
    %5047 = vmatpush2.msra.mxu0 0.0
    %5048 = vmatprep.subr.mxu0 0.0
    %5049 = vmatpush2.msra.mxu0 0.0
    %5050 = vmatprep.subr.mxu0 0.0
    %5051 = vmatpush2.msra.mxu0 0.0
    %5052 = vmatprep.subr.mxu0 0.0
    %5053 = vmatpush2.msra.mxu0 0.0
    %5054 = vmatprep.subr.mxu0 0.0
    %5055 = vmatpush2.msra.mxu0 0.0
    %5056 = vmatprep.subr.mxu0 0.0
    %5057 = vmatpush2.msra.mxu0 0.0
    %5058 = vmatprep.subr.mxu0 0.0
    %5059 = vmatpush2.msra.mxu0 0.0
    %5060 = vmatprep.subr.mxu0 0.0
    %5061 = vmatpush2.msra.mxu0 0.0
    %5062 = vmatprep.subr.mxu0 0.0
    %5063 = vmatpush2.msra.mxu0 0.0
    %5064 = vmatprep.mubr.f32.mxu0 0.0
    %5065 = vmatmul.mubr.f32.gmra.mxu0 %v4995
    %v5066 = vpop.f32.mrf.mxu0
    %v5067 = vadd.f32 %v4992, %v5066
    %v5068 = vpop.f32.mrf.mxu0
    %5069 = vmatprep.mubr.f32.mxu0 0.0
    %5070 = vmatmul.mubr.f32.gmra.mxu0 %v4998
    %v5071 = vpop.f32.mrf.mxu0
    %v5072 = vadd.f32 %v4992, %v5071
    %v5073 = vpop.f32.mrf.mxu0
    %5074 = vdwg.mxu0
    %v5075 = vmax.f32 %v5067, 0.0
    %v5076 = vmax.f32 %v5072, 0.0
    %v5077 = vld [vmem:[%s9] sm:$0xff]
    %v5078 = vld [vmem:[%s9 + $0x8] sm:$0xff]
    %v5079 = vld [vmem:[%s9 + $0x10] sm:$0xff]
    %v5080 = vld [vmem:[%s9 + $0x18] sm:$0xff]
    %v5081 = vld [vmem:[%s9 + $0x20] sm:$0xff]
    %v5082 = vld [vmem:[%s9 + $0x28] sm:$0xff]
    %v5083 = vld [vmem:[%s9 + $0x30] sm:$0xff]
    %v5084 = vld [vmem:[%s9 + $0x38] sm:$0xff]
    %5085 = vrot.lane.b32.xlu0 %v4992, 64
    %v5086 = vpop.permute.xlu0 %5085
    %vm5088 = vcmask 523264
    %v5090 = vsel %vm5088, %v5075, 0
    %v5093 = vsel %vm5088, %v5076, 0
    %5095 = vmatprep.subr.mxu0 0.0
    %5096 = vmatpush1.msra.mxu0 0.0
    %5097 = vmatprep.subr.mxu0 0.0
    %5098 = vmatpush1.msra.mxu0 0.0
    %5099 = vmatprep.subr.mxu0 0.0
    %5100 = vmatpush1.msra.mxu0 0.0
    %5101 = vmatprep.subr.mxu0 0.0
    %5102 = vmatpush1.msra.mxu0 0.0
    %5103 = vmatprep.subr.mxu0 0.0
    %5104 = vmatpush1.msra.mxu0 0.0
    %5105 = vmatprep.subr.mxu0 0.0
    %5106 = vmatpush1.msra.mxu0 0.0
    %5107 = vmatprep.subr.mxu0 0.0
    %5108 = vmatpush1.msra.mxu0 0.0
    %5109 = vmatprep.subr.mxu0 0.0
    %5110 = vmatpush1.msra.mxu0 0.0
    %5111 = vmatprep.subr.mxu0 0.0
    %5112 = vmatpush1.msra.mxu0 %v5084
    %5113 = vmatprep.subr.mxu0 0.0
    %5114 = vmatpush1.msra.mxu0 %v5083
    %5115 = vmatprep.subr.mxu0 0.0
    %5116 = vmatpush1.msra.mxu0 %v5082
    %5117 = vmatprep.subr.mxu0 0.0
    %5118 = vmatpush1.msra.mxu0 %v5081
    %5119 = vmatprep.subr.mxu0 0.0
    %5120 = vmatpush1.msra.mxu0 %v5080
    %5121 = vmatprep.subr.mxu0 0.0
    %5122 = vmatpush1.msra.mxu0 %v5079
    %5123 = vmatprep.subr.mxu0 0.0
    %5124 = vmatpush1.msra.mxu0 %v5078
    %5125 = vmatprep.subr.mxu0 0.0
    %5126 = vmatpush1.msra.mxu0 %v5077
    %5127 = vmatprep.subr.mxu0 0.0
    %5128 = vmatpush2.msra.mxu0 0.0
    %5129 = vmatprep.subr.mxu0 0.0
    %5130 = vmatpush2.msra.mxu0 0.0
    %5131 = vmatprep.subr.mxu0 0.0
    %5132 = vmatpush2.msra.mxu0 0.0
    %5133 = vmatprep.subr.mxu0 0.0
    %5134 = vmatpush2.msra.mxu0 0.0
    %5135 = vmatprep.subr.mxu0 0.0
    %5136 = vmatpush2.msra.mxu0 0.0
    %5137 = vmatprep.subr.mxu0 0.0
    %5138 = vmatpush2.msra.mxu0 0.0
    %5139 = vmatprep.subr.mxu0 0.0
    %5140 = vmatpush2.msra.mxu0 0.0
    %5141 = vmatprep.subr.mxu0 0.0
    %5142 = vmatpush2.msra.mxu0 0.0
    %5143 = vmatprep.subr.mxu0 0.0
    %5144 = vmatpush2.msra.mxu0 0.0
    %5145 = vmatprep.subr.mxu0 0.0
    %5146 = vmatpush2.msra.mxu0 0.0
    %5147 = vmatprep.subr.mxu0 0.0
    %5148 = vmatpush2.msra.mxu0 0.0
    %5149 = vmatprep.subr.mxu0 0.0
    %5150 = vmatpush2.msra.mxu0 0.0
    %5151 = vmatprep.subr.mxu0 0.0
    %5152 = vmatpush2.msra.mxu0 0.0
    %5153 = vmatprep.subr.mxu0 0.0
    %5154 = vmatpush2.msra.mxu0 0.0
    %5155 = vmatprep.subr.mxu0 0.0
    %5156 = vmatpush2.msra.mxu0 0.0
    %5157 = vmatprep.subr.mxu0 0.0
    %5158 = vmatpush2.msra.mxu0 0.0
    %5159 = vmatprep.mubr.f32.mxu0 0.0
    %5160 = vmatmul.mubr.f32.gmra.mxu0 %v5090
    %v5161 = vpop.f32.mrf.mxu0
    %v5162 = vadd.f32 %v5086, %v5161
    %v5163 = vpop.f32.mrf.mxu0
    %5164 = vmatprep.mubr.f32.mxu0 0.0
    %5165 = vmatmul.mubr.f32.gmra.mxu0 %v5093
    %v5166 = vpop.f32.mrf.mxu0
    %v5167 = vadd.f32 %v5086, %v5166
    %v5168 = vpop.f32.mrf.mxu0
    %5169 = vdwg.mxu0
    %v5170 = vadd.f32 %v4982, %v5162
    %v5171 = vadd.f32 %v4983, %v5167
    %v5172 = vsel %vm61, %v5170, 0.0
    %5173 = vadd.xlane.f32.xlu0 %v5172
    %v5174 = vpop.xlane.xlu0 %5173
    %v5175 = vsel %vm61, %v5171, 0.0
    %5176 = vadd.xlane.f32.xlu0 %v5175
    %v5177 = vpop.xlane.xlu0 %5176
    %v5178 = vmul.f32 %v5174, %v1637
    %v5179 = vmul.f32 %v5177, %v1637
    %v5180 = vsub.f32 %v5170, %v5178
    %v5181 = vsub.f32 %v5171, %v5179
    %v5182 = vmul.f32 %v5180, %v5180
    %v5183 = vmul.f32 %v5181, %v5181
    %v5184 = vsel %vm61, %v5182, 0.0
    %5185 = vadd.xlane.f32.xlu0 %v5184
    %v5186 = vpop.xlane.xlu0 %5185
    %v5187 = vsel %vm61, %v5183, 0.0
    %5188 = vadd.xlane.f32.xlu0 %v5187
    %v5189 = vpop.xlane.xlu0 %5188
    %v5190 = vmul.f32 %v5186, %v1637
    %v5191 = vmul.f32 %v5189, %v1637
    %v5192 = vadd.f32 %v5190, 1e-05
    %v5193 = vadd.f32 %v5191, 1e-05
    %v5194 = vrsqrt.pop %v5192
    %v5195 = vrsqrt.pop %v5193
    %v5196 = vmul.f32 %v5180, %v5194
    %v5197 = vmul.f32 %v5181, %v5195
    %s5198 = scalar_lea.vmem %s7, 3
    %v5199 = vld [vmem:[%s5198] sm:$0x1]
    %v5201 = vlaneseq
    %v5202 = vshrl.u32 %v5201, 7
    %v5203 = vsub.s32 0, %v5202
    %v5204 = vrot.slane %v5199, %v5203
    %v5206 = vmul.f32 %v5196, %v5204
    %v5207 = vmul.f32 %v5197, %v5204
    %5208 = vrot.lane.b32.xlu0 %v5204, 96
    %v5209 = vpop.permute.xlu0 %5208
    %v5211 = vadd.f32 %v5206, %v5209
    %v5212 = vadd.f32 %v5207, %v5209
    %5213 = vst.msk [vmem:[#allocation2] sm:$0xff] %vm61, %v5211
    %5214 = vst.msk [vmem:[#allocation2 + $0x8] sm:$0xff] %vm61, %v5212
    // Predicated region
    $region46: #{decoder_layer.1} parent=1 // pred_check
      _
    $region47: #{decoder_layer.1} parent=1 // pred_check_branch
      %5216 = sbr.rel (0) target = $region49
    $region48: #{decoder_layer.1} parent=1 // pred_region
      %s5218 = ssub.s32 256, 256
      %5219 = vsyncadd [#allocation3], %s5218
      %s5220 = sshll.u32 [#allocation2], 4
      %s5221 = int_to_ptr.vmem [resolvable:$true] %s5220
      %5226 = dma.vmem_to_hbm [thread:$0]  %s5221, 256, %s11, [#allocation3], 128, 128, 8
    $region49: #{decoder_layer.1} parent=1 // pred_fallthru
      _
    // Predicated region
    $region50: #{decoder_layer.1} parent=1 // pred_check
      _
    $region51: #{decoder_layer.1} parent=1 // pred_check_branch
      %5228 = sbr.rel (0) target = $region53
    $region52: #{decoder_layer.1} parent=1 // pred_region
      %s5230 = ssub.s32 1024, 1024
      %5231 = vsyncadd [#allocation5], %s5230
      %s5232 = sshll.u32 [#allocation4], 4
      %s5233 = int_to_ptr.vmem [resolvable:$true] %s5232
      %5238 = dma.vmem_to_hbm [thread:$0]  %s5233, 1024, %s12, [#allocation5], 128, 128, 8
    $region53: #{decoder_layer.1} parent=1 // pred_fallthru
      _
    // Predicated region
    $region54: #{decoder_layer.1} parent=1 // pred_check
      _
    $region55: #{decoder_layer.1} parent=1 // pred_check_branch
      %5240 = sbr.rel (0) target = $region57
    $region56: #{decoder_layer.1} parent=1 // pred_region
      %s5242 = ssub.s32 1024, 1024
      %5243 = vsyncadd [#allocation5], %s5242
      %s5244 = sshll.u32 [#allocation6], 4
      %s5245 = int_to_ptr.vmem [resolvable:$true] %s5244
      %5250 = dma.vmem_to_hbm [thread:$0]  %s5245, 1024, %s13, [#allocation5], 128, 128, 8
    $region57: #{decoder_layer.1} parent=1 // pred_fallthru
      _
    // Predicated region
    $region58: #{decoder_layer.1} parent=1 // pred_check
      _
    $region59: #{decoder_layer.1} parent=1 // pred_check_branch
      %5252 = sbr.rel (0) target = $region61
    $region60: #{decoder_layer.1} parent=1 // pred_region
      %5253 = dma.done [#allocation3], 256
    $region61: #{decoder_layer.1} parent=1 // pred_fallthru
      _
    // Predicated region
    $region62: #{decoder_layer.1} parent=1 // pred_check
      _
    $region63: #{decoder_layer.1} parent=1 // pred_check_branch
      %5255 = sbr.rel (0) target = $region65
    $region64: #{decoder_layer.1} parent=1 // pred_region
      %5256 = dma.done [#allocation5], 1024
    $region65: #{decoder_layer.1} parent=1 // pred_fallthru
      _
    // Predicated region
    $region66: #{decoder_layer.1} parent=1 // pred_check
      _
    $region67: #{decoder_layer.1} parent=1 // pred_check_branch
      %5258 = sbr.rel (0) target = $region69
    $region68: #{decoder_layer.1} parent=1 // pred_region
      %5259 = dma.done [#allocation5], 1024
    $region69: #{decoder_layer.1} parent=1 // pred_fallthru
      _
    %5260 = vsyncpa [#allocation3], 1
    %5261 = vsyncpa [#allocation5], 1

</llo_original>
